<compile_context>
chip_gen: v7x
topology: tpu7x:2x2x1
jax: 0.10.0
libtpu: 0.0.40
codegen_flags: <defaults>
</compile_context>

<pallas_src>
import functools
import math

import jax
import jax.numpy as jnp
from jax.experimental import pallas as pl
from jax.experimental.pallas import tpu as pltpu

_EPS = 1e-5                       # nn.BatchNorm2d default
_MXU_DTYPE = jnp.bfloat16         # MXU operand dtype (jnp.float32 for bit-closer results)
_A2_DTYPE = _MXU_DTYPE            # dtype of the conv1-output HBM intermediate
_MiB = 1024 * 1024


def _round_up(x, m):
    return (x + m - 1) // m * m


def _channel_align():
    # bf16 min sublane tile is 16 rows, f32 is 8.
    return 16 if _MXU_DTYPE == jnp.bfloat16 else 8


# ---------------------------------------------------------------------------
# in-kernel helpers
# ---------------------------------------------------------------------------
def _conv3x3_taps(h, masks_ref, w_ref, W):
    """3x3 'same' conv of h (C, P) f32 as 9 accumulating MXU taps.

    Per tap: shift the flattened image with pltpu.roll (XLU slot), zero the
    out-of-bounds lanes with a precomputed (1, P) 0/1 mask (VPU), cast to the
    MXU dtype and accumulate dot(w_tap, tap) in f32.  No (9*C, P) patch matrix
    is ever materialized."""
    P = h.shape[1]
    acc = None
    t = 0
    for di in (-1, 0, 1):
        for dj in (-1, 0, 1):
            s = di * W + dj
            if s == 0:
                tap = h
            else:
                # roll/mask in f32 (safe on v5e which lacks a bf16 VPU); cast
                # per-tap just before the MXU.
                tap = pltpu.roll(h, shift=(-s) % P, axis=1) * masks_ref[t]
            d = jnp.dot(w_ref[t], tap.astype(_MXU_DTYPE),
                        preferred_element_type=jnp.float32)
            acc = d if acc is None else acc + d
            t += 1
    return acc


# ---------------------------------------------------------------------------
# kernels (grid over image blocks; channels on sublanes, H*W on lanes)
# ---------------------------------------------------------------------------
def _x_stats_kernel(x_ref, st_ref):
    """Per-image per-channel sum / sum-of-squares of x (for global BN1 stats)."""
    for b in range(x_ref.shape[0]):
        x = x_ref[b]
        st_ref[b] = jnp.concatenate(
            [jnp.sum(x, axis=1, keepdims=True),
             jnp.sum(x * x, axis=1, keepdims=True)], axis=1)


def _bn1_relu_conv1_kernel(x_ref, masks_ref, sc1_ref, sh1_ref, w1_ref, b1_ref,
                           a_ref, st_ref, *, W):
    """BN1-apply (global stats) -> ReLU -> conv1 as 9 accumulating taps.
    Also emits per-image sum / sumsq of the f32 conv1 output (for BN2)."""
    for b in range(x_ref.shape[0]):
        h = jnp.maximum(x_ref[b] * sc1_ref[...] + sh1_ref[...], 0.0)
        a = _conv3x3_taps(h, masks_ref, w1_ref, W) + b1_ref[...]      # f32
        a_ref[b] = a.astype(a_ref.dtype)                              # bf16 HBM intermediate
        st_ref[b] = jnp.concatenate(
            [jnp.sum(a, axis=1, keepdims=True),
             jnp.sum(a * a, axis=1, keepdims=True)], axis=1)


def _bn2_relu_conv2_sc_kernel(a_ref, x_ref, masks_ref, sc2_ref, sh2_ref,
                              w2_ref, b2_ref, wsc_ref, bsc_ref, o_ref, *, W):
    """BN2-apply -> ReLU -> conv2 taps, with the learnable 1x1 shortcut fused
    in as the accumulator initializer (out = shortcut(x) + conv2(relu(bn2(a))))."""
    for b in range(a_ref.shape[0]):
        h = jnp.maximum(a_ref[b].astype(jnp.float32) * sc2_ref[...] + sh2_ref[...], 0.0)
        acc = jnp.dot(wsc_ref[...], x_ref[b].astype(_MXU_DTYPE),
                      preferred_element_type=jnp.float32) + bsc_ref[...]
        acc = acc + _conv3x3_taps(h, masks_ref, w2_ref, W) + b2_ref[...]
        o_ref[b] = acc.astype(o_ref.dtype)


# ---------------------------------------------------------------------------
# wrapper-side sizing helpers
# ---------------------------------------------------------------------------
def _choose_images_per_block(N, Cin_p, Chid_p, Cout_p, P, budget=16 * _MiB):
    """Pack several images into one grid step when channels/images are small
    (amortizes ~0.35us per-step overhead), but keep >=2 'parallel' grid steps
    so v7x megacore stays load-balanced, and stay under `budget`."""
    per_img_bytes = 2 * P * (Cin_p * 4 + Chid_p * 2 + Cout_p * 4)   # dbl-buffered streams
    best = 1
    for d in range(1, N + 1):
        if N % d:
            continue
        if N >= 2 and N // d < 2:
            continue
        if d * per_img_bytes <= budget:
            best = d
    return best


def _vmem_limit_bytes(n_img, Cin_p, Chid_p, Cout_p, P):
    """VMEM budget derived from the actual per-step block sizes (pass 3 is the
    fattest), capped chip-aware (~48 MiB on v7x's 64 MiB, ~96 MiB on v5e/v6e)."""
    streamed = 2 * n_img * P * (Chid_p * 2 + Cin_p * 4 + Cout_p * 4)      # a2/x/out, dbl-buffered
    resident = 2 * (9 * P * 4 + 9 * Cout_p * Chid_p * 2
                    + 9 * Chid_p * Cin_p * 2 + Cout_p * Cin_p * 2)        # masks + weights
    working = P * (Chid_p * 4 + Chid_p * 2 + Chid_p * 4 + 2 * Cout_p * 4)  # h / tap / acc temps
    est = streamed + resident + working
    cap = 48 * _MiB
    try:
        cap = int(pltpu.get_tpu_info().vmem_capacity_bytes * 3 // 4)
    except Exception:  # best-effort hardware query; keep the conservative cap
        pass
    return int(min(cap, max(32 * _MiB, 2 * est)))


# ---------------------------------------------------------------------------
# forward
# ---------------------------------------------------------------------------
def gen_block_forward(x_nchw, params, images_per_block=None):
    """genBlock forward (train-mode BN).  x: (N, Cin, H, W) f32 -> (N, Cout, H, W) f32."""
    N, Cin, H, W = x_nchw.shape
    P = H * W
    w1, w2, wsc = params["w1"], params["w2"], params["wsc"]
    Chid, Cout = w1.shape[-1], w2.shape[-1]
    align = _channel_align()
    Cin_p, Chid_p, Cout_p = (_round_up(c, align) for c in (Cin, Chid, Cout))
    f32 = jnp.float32

    # ---- layout plumbing: (N, C_pad, H*W), channels on sublanes -------------
    x = x_nchw.reshape(N, Cin, P).astype(f32)
    if Cin_p != Cin:                              # skip the extra HBM copy when aligned
        x = jnp.pad(x, ((0, 0), (0, Cin_p - Cin), (0, 0)))

    # hoisted im2col edge masks: 9 x (1, P) 0/1 planes, pure function of (H, W)
    lane = jnp.arange(P, dtype=jnp.int32)
    row, col = lane // W, lane % W
    masks = jnp.stack(
        [((row + di >= 0) & (row + di < H) & (col + dj >= 0) & (col + dj < W))
         for di in (-1, 0, 1) for dj in (-1, 0, 1)]).astype(f32).reshape(9, 1, P)

    def col_vec(v, cp):                           # (C,) -> zero-padded (cp, 1) f32
        v = v.astype(f32)
        if cp != v.shape[0]:
            v = jnp.pad(v, (0, cp - v.shape[0]))
        return v.reshape(cp, 1)

    def pack_taps(w, cin_p, cout_p):              # HWIO -> (9, cout_p, cin_p) MXU dtype
        kh, kw, ci, co = w.shape
        wt = jnp.transpose(w.reshape(kh * kw, ci, co), (0, 2, 1)).astype(f32)
        return (jnp.zeros((kh * kw, cout_p, cin_p), f32)
                .at[:, :co, :ci].set(wt).astype(_MXU_DTYPE))

    w1t = pack_taps(w1, Cin_p, Chid_p)            # (9, Chid_p, Cin_p)
    w2t = pack_taps(w2, Chid_p, Cout_p)           # (9, Cout_p, Chid_p)
    wscm = (jnp.zeros((Cout_p, Cin_p), f32)
            .at[:Cout, :Cin].set(wsc.astype(f32).T).astype(_MXU_DTYPE))
    g1, be1 = col_vec(params["g1"], Cin_p), col_vec(params["be1"], Cin_p)
    g2, be2 = col_vec(params["g2"], Chid_p), col_vec(params["be2"], Chid_p)
    b1 = col_vec(params["b1"], Chid_p)
    b2, bsc = col_vec(params["b2"], Cout_p), col_vec(params["bsc"], Cout_p)

    n_img = images_per_block or _choose_images_per_block(N, Cin_p, Chid_p, Cout_p, P)
    assert N % n_img == 0, (N, n_img)
    n_steps = N // n_img

    cparams = pltpu.CompilerParams(
        dimension_semantics=("parallel",),
        vmem_limit_bytes=_vmem_limit_bytes(n_img, Cin_p, Chid_p, Cout_p, P))

    per_img = lambda c, p: pl.BlockSpec((n_img, c, p), lambda i: (i, 0, 0))
    full2 = lambda r, c: pl.BlockSpec((r, c), lambda i: (0, 0))
    full3 = lambda a, b, c: pl.BlockSpec((a, b, c), lambda i: (0, 0, 0))

    # ---- pass 1: global BN1 batch statistics of x ---------------------------
    st1 = pl.pallas_call(
        _x_stats_kernel,
        grid=(n_steps,),
        in_specs=[per_img(Cin_p, P)],
        out_specs=per_img(Cin_p, 2),
        out_shape=jax.ShapeDtypeStruct((N, Cin_p, 2), f32),
        compiler_params=cparams,
    )(x)

    def bn_affine(st, gamma, beta):
        # one-pass E[x^2]-E[x]^2 (biased) — fine for normalized GAN activations.
        tot = jnp.sum(st, axis=0)                               # (C, 2)
        mean = tot[:, 0:1] / (N * P)
        var = jnp.maximum(tot[:, 1:2] / (N * P) - mean * mean, 0.0)
        scale = gamma * jax.lax.rsqrt(var + _EPS)
        return scale, beta - mean * scale

    sc1, sh1 = bn_affine(st1, g1, be1)

    # ---- pass 2: BN1-apply -> ReLU -> conv1 (+ partial BN2 statistics) ------
    a2, st2 = pl.pallas_call(
        functools.partial(_bn1_relu_conv1_kernel, W=W),
        grid=(n_steps,),
        in_specs=[per_img(Cin_p, P), full3(9, 1, P),
                  full2(Cin_p, 1), full2(Cin_p, 1),
                  full3(9, Chid_p, Cin_p), full2(Chid_p, 1)],
        out_specs=(per_img(Chid_p, P), per_img(Chid_p, 2)),
        out_shape=(jax.ShapeDtypeStruct((N, Chid_p, P), _A2_DTYPE),
                   jax.ShapeDtypeStruct((N, Chid_p, 2), f32)),
        compiler_params=cparams,
    )(x, masks, sc1, sh1, w1t, b1)

    sc2, sh2 = bn_affine(st2, g2, be2)

    # ---- pass 3: BN2-apply -> ReLU -> conv2 + fused learnable 1x1 shortcut --
    out = pl.pallas_call(
        functools.partial(_bn2_relu_conv2_sc_kernel, W=W),
        grid=(n_steps,),
        in_specs=[per_img(Chid_p, P), per_img(Cin_p, P), full3(9, 1, P),
                  full2(Chid_p, 1), full2(Chid_p, 1),
                  full3(9, Cout_p, Chid_p), full2(Cout_p, 1),
                  full2(Cout_p, Cin_p), full2(Cout_p, 1)],
        out_specs=per_img(Cout_p, P),
        out_shape=jax.ShapeDtypeStruct((N, Cout_p, P), f32),
        compiler_params=cparams,
    )(a2, x, masks, sc2, sh2, w2t, b2, wscm, bsc)

    if Cout_p != Cout:
        out = out[:, :Cout, :]
    return out.reshape(N, Cout, H, W)


# ---------------------------------------------------------------------------
# parameter init (matches genBlock.__init__) and pure-XLA reference
# ---------------------------------------------------------------------------
def init_params(key, in_channels, out_channels, hidden_channels=None, ksize=3):
    """xavier_uniform conv weights (gain sqrt(2) for c1/c2, 1 for c_sc), PyTorch
    default conv biases, BatchNorm gamma=1/beta=0.  Conv weights kept in HWIO."""
    hidden = out_channels if hidden_channels is None else hidden_channels
    ks = jax.random.split(key, 6)

    def xavier(k, kh, kw, cin, cout, gain):
        fan_in, fan_out = cin * kh * kw, cout * kh * kw
        bound = gain * math.sqrt(6.0 / (fan_in + fan_out))
        return jax.random.uniform(k, (kh, kw, cin, cout), jnp.float32, -bound, bound)

    def conv_bias(k, cin, kh, kw, cout):
        b = 1.0 / math.sqrt(cin * kh * kw)
        return jax.random.uniform(k, (cout,), jnp.float32, -b, b)

    return dict(
        w1=xavier(ks[0], ksize, ksize, in_channels, hidden, math.sqrt(2.0)),
        b1=conv_bias(ks[1], in_channels, ksize, ksize, hidden),
        w2=xavier(ks[2], ksize, ksize, hidden, out_channels, math.sqrt(2.0)),
        b2=conv_bias(ks[3], hidden, ksize, ksize, out_channels),
        g1=jnp.ones((in_channels,), jnp.float32),
        be1=jnp.zeros((in_channels,), jnp.float32),
        g2=jnp.ones((hidden,), jnp.float32),
        be2=jnp.zeros((hidden,), jnp.float32),
        wsc=xavier(ks[4], 1, 1, in_channels, out_channels, 1.0)[0, 0],   # (Cin, Cout)
        bsc=conv_bias(ks[5], in_channels, 1, 1, out_channels),
    )


def reference_forward(x, params):
    """Pure-XLA f32 reference of genBlock.forward (train-mode BN)."""
    def bn(h, g, b):
        mean = jnp.mean(h, axis=(0, 2, 3), keepdims=True)
        var = jnp.mean((h - mean) ** 2, axis=(0, 2, 3), keepdims=True)
        return ((h - mean) * jax.lax.rsqrt(var + _EPS) * g.reshape(1, -1, 1, 1)
                + b.reshape(1, -1, 1, 1))

    def conv(h, w, b, pad):
        y = jax.lax.conv_general_dilated(
            h, w, (1, 1), ((pad, pad), (pad, pad)),
            dimension_numbers=("NCHW", "HWIO", "NCHW"))
        return y + b.reshape(1, -1, 1, 1)

    h = jnp.maximum(bn(x, params["g1"], params["be1"]), 0.0)
    h = conv(h, params["w1"], params["b1"], 1)
    h = jnp.maximum(bn(h, params["g2"], params["be2"]), 0.0)
    h = conv(h, params["w2"], params["b2"], 1)
    return h + conv(x, params["wsc"][None, None, :, :], params["bsc"], 0)


if __name__ == "__main__":
    key = jax.random.PRNGKey(0)
    kx, kp = jax.random.split(key)

    N, Cin, H, W = 2, 4, 16, 16
    Cout = 8
    x = jax.random.normal(kx, (N, Cin, H, W), jnp.float32)
    params = init_params(kp, Cin, Cout)

    y = jax.jit(gen_block_forward)(x, params)
    jax.block_until_ready(y)
    assert y.shape == (N, Cout, H, W), y.shape

    # self-check vs pure-XLA f32 reference; tolerance gated on MXU operand dtype
    y_ref = reference_forward(x, params)
    err = float(jnp.max(jnp.abs(y - y_ref)))
    tol = 0.1 if _MXU_DTYPE == jnp.bfloat16 else 2e-3
    assert err < tol, f"max abs error {err} (tol {tol})"
    print("KERNEL_OK")
</pallas_src>

<mosaic_0001>
module attributes {stable_mosaic.version = 11 : i64} {
  func.func @_bn1_relu_conv1_kernel(%arg0: i32, %arg1: memref<1x16x256xf32, #tpu.memory_space<vmem>>, %arg2: memref<9x1x256xf32, #tpu.memory_space<vmem>>, %arg3: memref<16x1xf32, #tpu.memory_space<vmem>>, %arg4: memref<16x1xf32, #tpu.memory_space<vmem>>, %arg5: memref<9x16x16xbf16, #tpu.memory_space<vmem>>, %arg6: memref<16x1xf32, #tpu.memory_space<vmem>>, %arg7: memref<1x16x256xbf16, #tpu.memory_space<vmem>>, %arg8: memref<1x16x2xf32, #tpu.memory_space<vmem>>) attributes {dimension_semantics = [#tpu.dimension_semantics<parallel>], iteration_bounds = array<i64: 2>, scalar_prefetch = 0 : i64, scratch_operands = 0 : i64, tpu.core_type = #tpu.core_type<tc>, window_params = [{transform_indices = @transform_0, window_bounds = array<i64: 1, 16, 256>}, {pipeline_mode = #tpu.pipeline_mode<synchronous>, transform_indices = @transform_1, window_bounds = array<i64: 9, 1, 256>}, {pipeline_mode = #tpu.pipeline_mode<synchronous>, transform_indices = @transform_2, window_bounds = array<i64: 16, 1>}, {pipeline_mode = #tpu.pipeline_mode<synchronous>, transform_indices = @transform_3, window_bounds = array<i64: 16, 1>}, {pipeline_mode = #tpu.pipeline_mode<synchronous>, transform_indices = @transform_4, window_bounds = array<i64: 9, 16, 16>}, {pipeline_mode = #tpu.pipeline_mode<synchronous>, transform_indices = @transform_5, window_bounds = array<i64: 16, 1>}, {transform_indices = @transform_6, window_bounds = array<i64: 1, 16, 256>}, {transform_indices = @transform_7, window_bounds = array<i64: 1, 16, 2>}]} {
    %c0 = arith.constant 0 : index
    %c0_0 = arith.constant 0 : index
    %c0_1 = arith.constant 0 : index
    %0 = vector.load %arg1[%c0, %c0_0, %c0_1] : memref<1x16x256xf32, #tpu.memory_space<vmem>>, vector<1x16x256xf32>
    %1 = vector.shape_cast %0 : vector<1x16x256xf32> to vector<16x256xf32>
    %c0_2 = arith.constant 0 : index
    %c0_3 = arith.constant 0 : index
    %2 = vector.load %arg3[%c0_2, %c0_3] : memref<16x1xf32, #tpu.memory_space<vmem>>, vector<16x1xf32>
    %3 = vector.broadcast %2 : vector<16x1xf32> to vector<16x256xf32>
    %4 = arith.mulf %1, %3 : vector<16x256xf32>
    %c0_4 = arith.constant 0 : index
    %c0_5 = arith.constant 0 : index
    %5 = vector.load %arg4[%c0_4, %c0_5] : memref<16x1xf32, #tpu.memory_space<vmem>>, vector<16x1xf32>
    %6 = vector.broadcast %5 : vector<16x1xf32> to vector<16x256xf32>
    %7 = arith.addf %4, %6 : vector<16x256xf32>
    %cst = arith.constant 0.000000e+00 : f32
    %8 = vector.broadcast %cst : f32 to vector<16x256xf32>
    %9 = arith.maximumf %7, %8 : vector<16x256xf32>
    %c17_i32 = arith.constant 17 : i32
    %10 = tpu.dynamic_rotate %9 by %c17_i32 dim 1 : vector<16x256xf32>, i32 -> vector<16x256xf32>
    %c0_6 = arith.constant 0 : index
    %c0_7 = arith.constant 0 : index
    %c0_8 = arith.constant 0 : index
    %11 = vector.load %arg2[%c0_6, %c0_7, %c0_8] : memref<9x1x256xf32, #tpu.memory_space<vmem>>, vector<1x1x256xf32>
    %12 = vector.shape_cast %11 : vector<1x1x256xf32> to vector<1x256xf32>
    %13 = vector.broadcast %12 : vector<1x256xf32> to vector<16x256xf32>
    %14 = arith.mulf %10, %13 : vector<16x256xf32>
    %c0_9 = arith.constant 0 : index
    %c0_10 = arith.constant 0 : index
    %c0_11 = arith.constant 0 : index
    %15 = vector.load %arg5[%c0_9, %c0_10, %c0_11] : memref<9x16x16xbf16, #tpu.memory_space<vmem>>, vector<1x16x16xbf16>
    %16 = vector.shape_cast %15 : vector<1x16x16xbf16> to vector<16x16xbf16>
    %17 = arith.truncf %14 : vector<16x256xf32> to vector<16x256xbf16>
    %cst_12 = arith.constant dense<0.000000e+00> : vector<16x256xf32>
    %18 = tpu.matmul %16, %17, %cst_12 {dimension_numbers = #tpu.dot_dimension_numbers<[1], [0], [0], [1], [0, 0, 1, 1], [], []>} : vector<16x16xbf16>, vector<16x256xbf16>, vector<16x256xf32> -> vector<16x256xf32>
    %c16_i32 = arith.constant 16 : i32
    %19 = tpu.dynamic_rotate %9 by %c16_i32 dim 1 : vector<16x256xf32>, i32 -> vector<16x256xf32>
    %c1 = arith.constant 1 : index
    %c0_13 = arith.constant 0 : index
    %c0_14 = arith.constant 0 : index
    %20 = vector.load %arg2[%c1, %c0_13, %c0_14] : memref<9x1x256xf32, #tpu.memory_space<vmem>>, vector<1x1x256xf32>
    %21 = vector.shape_cast %20 : vector<1x1x256xf32> to vector<1x256xf32>
    %22 = vector.broadcast %21 : vector<1x256xf32> to vector<16x256xf32>
    %23 = arith.mulf %19, %22 : vector<16x256xf32>
    %c1_15 = arith.constant 1 : index
    %c0_16 = arith.constant 0 : index
    %c0_17 = arith.constant 0 : index
    %24 = vector.load %arg5[%c1_15, %c0_16, %c0_17] : memref<9x16x16xbf16, #tpu.memory_space<vmem>>, vector<1x16x16xbf16>
    %25 = vector.shape_cast %24 : vector<1x16x16xbf16> to vector<16x16xbf16>
    %26 = arith.truncf %23 : vector<16x256xf32> to vector<16x256xbf16>
    %cst_18 = arith.constant dense<0.000000e+00> : vector<16x256xf32>
    %27 = tpu.matmul %25, %26, %cst_18 {dimension_numbers = #tpu.dot_dimension_numbers<[1], [0], [0], [1], [0, 0, 1, 1], [], []>} : vector<16x16xbf16>, vector<16x256xbf16>, vector<16x256xf32> -> vector<16x256xf32>
    %28 = arith.addf %18, %27 : vector<16x256xf32>
    %c15_i32 = arith.constant 15 : i32
    %29 = tpu.dynamic_rotate %9 by %c15_i32 dim 1 : vector<16x256xf32>, i32 -> vector<16x256xf32>
    %c2 = arith.constant 2 : index
    %c0_19 = arith.constant 0 : index
    %c0_20 = arith.constant 0 : index
    %30 = vector.load %arg2[%c2, %c0_19, %c0_20] : memref<9x1x256xf32, #tpu.memory_space<vmem>>, vector<1x1x256xf32>
    %31 = vector.shape_cast %30 : vector<1x1x256xf32> to vector<1x256xf32>
    %32 = vector.broadcast %31 : vector<1x256xf32> to vector<16x256xf32>
    %33 = arith.mulf %29, %32 : vector<16x256xf32>
    %c2_21 = arith.constant 2 : index
    %c0_22 = arith.constant 0 : index
    %c0_23 = arith.constant 0 : index
    %34 = vector.load %arg5[%c2_21, %c0_22, %c0_23] : memref<9x16x16xbf16, #tpu.memory_space<vmem>>, vector<1x16x16xbf16>
    %35 = vector.shape_cast %34 : vector<1x16x16xbf16> to vector<16x16xbf16>
    %36 = arith.truncf %33 : vector<16x256xf32> to vector<16x256xbf16>
    %cst_24 = arith.constant dense<0.000000e+00> : vector<16x256xf32>
    %37 = tpu.matmul %35, %36, %cst_24 {dimension_numbers = #tpu.dot_dimension_numbers<[1], [0], [0], [1], [0, 0, 1, 1], [], []>} : vector<16x16xbf16>, vector<16x256xbf16>, vector<16x256xf32> -> vector<16x256xf32>
    %38 = arith.addf %28, %37 : vector<16x256xf32>
    %c1_i32 = arith.constant 1 : i32
    %39 = tpu.dynamic_rotate %9 by %c1_i32 dim 1 : vector<16x256xf32>, i32 -> vector<16x256xf32>
    %c3 = arith.constant 3 : index
    %c0_25 = arith.constant 0 : index
    %c0_26 = arith.constant 0 : index
    %40 = vector.load %arg2[%c3, %c0_25, %c0_26] : memref<9x1x256xf32, #tpu.memory_space<vmem>>, vector<1x1x256xf32>
    %41 = vector.shape_cast %40 : vector<1x1x256xf32> to vector<1x256xf32>
    %42 = vector.broadcast %41 : vector<1x256xf32> to vector<16x256xf32>
    %43 = arith.mulf %39, %42 : vector<16x256xf32>
    %c3_27 = arith.constant 3 : index
    %c0_28 = arith.constant 0 : index
    %c0_29 = arith.constant 0 : index
    %44 = vector.load %arg5[%c3_27, %c0_28, %c0_29] : memref<9x16x16xbf16, #tpu.memory_space<vmem>>, vector<1x16x16xbf16>
    %45 = vector.shape_cast %44 : vector<1x16x16xbf16> to vector<16x16xbf16>
    %46 = arith.truncf %43 : vector<16x256xf32> to vector<16x256xbf16>
    %cst_30 = arith.constant dense<0.000000e+00> : vector<16x256xf32>
    %47 = tpu.matmul %45, %46, %cst_30 {dimension_numbers = #tpu.dot_dimension_numbers<[1], [0], [0], [1], [0, 0, 1, 1], [], []>} : vector<16x16xbf16>, vector<16x256xbf16>, vector<16x256xf32> -> vector<16x256xf32>
    %48 = arith.addf %38, %47 : vector<16x256xf32>
    %c4 = arith.constant 4 : index
    %c0_31 = arith.constant 0 : index
    %c0_32 = arith.constant 0 : index
    %49 = vector.load %arg5[%c4, %c0_31, %c0_32] : memref<9x16x16xbf16, #tpu.memory_space<vmem>>, vector<1x16x16xbf16>
    %50 = vector.shape_cast %49 : vector<1x16x16xbf16> to vector<16x16xbf16>
    %51 = arith.truncf %9 : vector<16x256xf32> to vector<16x256xbf16>
    %cst_33 = arith.constant dense<0.000000e+00> : vector<16x256xf32>
    %52 = tpu.matmul %50, %51, %cst_33 {dimension_numbers = #tpu.dot_dimension_numbers<[1], [0], [0], [1], [0, 0, 1, 1], [], []>} : vector<16x16xbf16>, vector<16x256xbf16>, vector<16x256xf32> -> vector<16x256xf32>
    %53 = arith.addf %48, %52 : vector<16x256xf32>
    %c255_i32 = arith.constant 255 : i32
    %54 = tpu.dynamic_rotate %9 by %c255_i32 dim 1 : vector<16x256xf32>, i32 -> vector<16x256xf32>
    %c5 = arith.constant 5 : index
    %c0_34 = arith.constant 0 : index
    %c0_35 = arith.constant 0 : index
    %55 = vector.load %arg2[%c5, %c0_34, %c0_35] : memref<9x1x256xf32, #tpu.memory_space<vmem>>, vector<1x1x256xf32>
    %56 = vector.shape_cast %55 : vector<1x1x256xf32> to vector<1x256xf32>
    %57 = vector.broadcast %56 : vector<1x256xf32> to vector<16x256xf32>
    %58 = arith.mulf %54, %57 : vector<16x256xf32>
    %c5_36 = arith.constant 5 : index
    %c0_37 = arith.constant 0 : index
    %c0_38 = arith.constant 0 : index
    %59 = vector.load %arg5[%c5_36, %c0_37, %c0_38] : memref<9x16x16xbf16, #tpu.memory_space<vmem>>, vector<1x16x16xbf16>
    %60 = vector.shape_cast %59 : vector<1x16x16xbf16> to vector<16x16xbf16>
    %61 = arith.truncf %58 : vector<16x256xf32> to vector<16x256xbf16>
    %cst_39 = arith.constant dense<0.000000e+00> : vector<16x256xf32>
    %62 = tpu.matmul %60, %61, %cst_39 {dimension_numbers = #tpu.dot_dimension_numbers<[1], [0], [0], [1], [0, 0, 1, 1], [], []>} : vector<16x16xbf16>, vector<16x256xbf16>, vector<16x256xf32> -> vector<16x256xf32>
    %63 = arith.addf %53, %62 : vector<16x256xf32>
    %c241_i32 = arith.constant 241 : i32
    %64 = tpu.dynamic_rotate %9 by %c241_i32 dim 1 : vector<16x256xf32>, i32 -> vector<16x256xf32>
    %c6 = arith.constant 6 : index
    %c0_40 = arith.constant 0 : index
    %c0_41 = arith.constant 0 : index
    %65 = vector.load %arg2[%c6, %c0_40, %c0_41] : memref<9x1x256xf32, #tpu.memory_space<vmem>>, vector<1x1x256xf32>
    %66 = vector.shape_cast %65 : vector<1x1x256xf32> to vector<1x256xf32>
    %67 = vector.broadcast %66 : vector<1x256xf32> to vector<16x256xf32>
    %68 = arith.mulf %64, %67 : vector<16x256xf32>
    %c6_42 = arith.constant 6 : index
    %c0_43 = arith.constant 0 : index
    %c0_44 = arith.constant 0 : index
    %69 = vector.load %arg5[%c6_42, %c0_43, %c0_44] : memref<9x16x16xbf16, #tpu.memory_space<vmem>>, vector<1x16x16xbf16>
    %70 = vector.shape_cast %69 : vector<1x16x16xbf16> to vector<16x16xbf16>
    %71 = arith.truncf %68 : vector<16x256xf32> to vector<16x256xbf16>
    %cst_45 = arith.constant dense<0.000000e+00> : vector<16x256xf32>
    %72 = tpu.matmul %70, %71, %cst_45 {dimension_numbers = #tpu.dot_dimension_numbers<[1], [0], [0], [1], [0, 0, 1, 1], [], []>} : vector<16x16xbf16>, vector<16x256xbf16>, vector<16x256xf32> -> vector<16x256xf32>
    %73 = arith.addf %63, %72 : vector<16x256xf32>
    %c240_i32 = arith.constant 240 : i32
    %74 = tpu.dynamic_rotate %9 by %c240_i32 dim 1 : vector<16x256xf32>, i32 -> vector<16x256xf32>
    %c7 = arith.constant 7 : index
    %c0_46 = arith.constant 0 : index
    %c0_47 = arith.constant 0 : index
    %75 = vector.load %arg2[%c7, %c0_46, %c0_47] : memref<9x1x256xf32, #tpu.memory_space<vmem>>, vector<1x1x256xf32>
    %76 = vector.shape_cast %75 : vector<1x1x256xf32> to vector<1x256xf32>
    %77 = vector.broadcast %76 : vector<1x256xf32> to vector<16x256xf32>
    %78 = arith.mulf %74, %77 : vector<16x256xf32>
    %c7_48 = arith.constant 7 : index
    %c0_49 = arith.constant 0 : index
    %c0_50 = arith.constant 0 : index
    %79 = vector.load %arg5[%c7_48, %c0_49, %c0_50] : memref<9x16x16xbf16, #tpu.memory_space<vmem>>, vector<1x16x16xbf16>
    %80 = vector.shape_cast %79 : vector<1x16x16xbf16> to vector<16x16xbf16>
    %81 = arith.truncf %78 : vector<16x256xf32> to vector<16x256xbf16>
    %cst_51 = arith.constant dense<0.000000e+00> : vector<16x256xf32>
    %82 = tpu.matmul %80, %81, %cst_51 {dimension_numbers = #tpu.dot_dimension_numbers<[1], [0], [0], [1], [0, 0, 1, 1], [], []>} : vector<16x16xbf16>, vector<16x256xbf16>, vector<16x256xf32> -> vector<16x256xf32>
    %83 = arith.addf %73, %82 : vector<16x256xf32>
    %c239_i32 = arith.constant 239 : i32
    %84 = tpu.dynamic_rotate %9 by %c239_i32 dim 1 : vector<16x256xf32>, i32 -> vector<16x256xf32>
    %c8 = arith.constant 8 : index
    %c0_52 = arith.constant 0 : index
    %c0_53 = arith.constant 0 : index
    %85 = vector.load %arg2[%c8, %c0_52, %c0_53] : memref<9x1x256xf32, #tpu.memory_space<vmem>>, vector<1x1x256xf32>
    %86 = vector.shape_cast %85 : vector<1x1x256xf32> to vector<1x256xf32>
    %87 = vector.broadcast %86 : vector<1x256xf32> to vector<16x256xf32>
    %88 = arith.mulf %84, %87 : vector<16x256xf32>
    %c8_54 = arith.constant 8 : index
    %c0_55 = arith.constant 0 : index
    %c0_56 = arith.constant 0 : index
    %89 = vector.load %arg5[%c8_54, %c0_55, %c0_56] : memref<9x16x16xbf16, #tpu.memory_space<vmem>>, vector<1x16x16xbf16>
    %90 = vector.shape_cast %89 : vector<1x16x16xbf16> to vector<16x16xbf16>
    %91 = arith.truncf %88 : vector<16x256xf32> to vector<16x256xbf16>
    %cst_57 = arith.constant dense<0.000000e+00> : vector<16x256xf32>
    %92 = tpu.matmul %90, %91, %cst_57 {dimension_numbers = #tpu.dot_dimension_numbers<[1], [0], [0], [1], [0, 0, 1, 1], [], []>} : vector<16x16xbf16>, vector<16x256xbf16>, vector<16x256xf32> -> vector<16x256xf32>
    %93 = arith.addf %83, %92 : vector<16x256xf32>
    %c0_58 = arith.constant 0 : index
    %c0_59 = arith.constant 0 : index
    %94 = vector.load %arg6[%c0_58, %c0_59] : memref<16x1xf32, #tpu.memory_space<vmem>>, vector<16x1xf32>
    %95 = vector.broadcast %94 : vector<16x1xf32> to vector<16x256xf32>
    %96 = arith.addf %93, %95 : vector<16x256xf32>
    %97 = arith.truncf %96 : vector<16x256xf32> to vector<16x256xbf16>
    %c0_60 = arith.constant 0 : index
    %c0_61 = arith.constant 0 : index
    %c0_62 = arith.constant 0 : index
    %98 = vector.load %arg7[%c0_60, %c0_61, %c0_62] : memref<1x16x256xbf16, #tpu.memory_space<vmem>>, vector<1x16x256xbf16>
    %99 = vector.shape_cast %98 : vector<1x16x256xbf16> to vector<16x256xbf16>
    %100 = vector.shape_cast %97 : vector<16x256xbf16> to vector<1x16x256xbf16>
    tpu.vector_store %arg7[%c0_60, %c0_61, %c0_62], %100 {strides = array<i32>} : memref<1x16x256xbf16, #tpu.memory_space<vmem>>, vector<1x16x256xbf16>,
    %cst_63 = arith.constant dense<0.000000e+00> : vector<16xf32>
    %101 = vector.multi_reduction <add>, %96, %cst_63 [1] : vector<16x256xf32> to vector<16xf32>
    %102 = vector.shape_cast %101 : vector<16xf32> to vector<16x1xf32>
    %103 = arith.mulf %96, %96 : vector<16x256xf32>
    %cst_64 = arith.constant dense<0.000000e+00> : vector<16xf32>
    %104 = vector.multi_reduction <add>, %103, %cst_64 [1] : vector<16x256xf32> to vector<16xf32>
    %105 = vector.shape_cast %104 : vector<16xf32> to vector<16x1xf32>
    %106 = tpu.concatenate %102, %105 in 1 : vector<16x1xf32>, vector<16x1xf32> -> vector<16x2xf32>
    %c0_65 = arith.constant 0 : index
    %c0_66 = arith.constant 0 : index
    %c0_67 = arith.constant 0 : index
    %107 = vector.load %arg8[%c0_65, %c0_66, %c0_67] : memref<1x16x2xf32, #tpu.memory_space<vmem>>, vector<1x16x2xf32>
    %108 = vector.shape_cast %107 : vector<1x16x2xf32> to vector<16x2xf32>
    %109 = vector.shape_cast %106 : vector<16x2xf32> to vector<1x16x2xf32>
    tpu.vector_store %arg8[%c0_65, %c0_66, %c0_67], %109 {strides = array<i32>} : memref<1x16x2xf32, #tpu.memory_space<vmem>>, vector<1x16x2xf32>,
    return
  }
  func.func @transform_0(%arg0: i32) -> (i32, i32, i32) {
    %c0_i32 = arith.constant 0 : i32
    %c0_i32_0 = arith.constant 0 : i32
    %c0_i32_1 = arith.constant 0 : i32
    return %arg0, %c0_i32, %c0_i32_0 : i32, i32, i32
  }
  func.func @transform_1(%arg0: i32) -> (i32, i32, i32) {
    %c0_i32 = arith.constant 0 : i32
    %c0_i32_0 = arith.constant 0 : i32
    %c0_i32_1 = arith.constant 0 : i32
    %c0_i32_2 = arith.constant 0 : i32
    return %c0_i32, %c0_i32_0, %c0_i32_1 : i32, i32, i32
  }
  func.func @transform_2(%arg0: i32) -> (i32, i32) {
    %c0_i32 = arith.constant 0 : i32
    %c0_i32_0 = arith.constant 0 : i32
    %c0_i32_1 = arith.constant 0 : i32
    return %c0_i32, %c0_i32_0 : i32, i32
  }
  func.func @transform_3(%arg0: i32) -> (i32, i32) {
    %c0_i32 = arith.constant 0 : i32
    %c0_i32_0 = arith.constant 0 : i32
    %c0_i32_1 = arith.constant 0 : i32
    return %c0_i32, %c0_i32_0 : i32, i32
  }
  func.func @transform_4(%arg0: i32) -> (i32, i32, i32) {
    %c0_i32 = arith.constant 0 : i32
    %c0_i32_0 = arith.constant 0 : i32
    %c0_i32_1 = arith.constant 0 : i32
    %c0_i32_2 = arith.constant 0 : i32
    return %c0_i32, %c0_i32_0, %c0_i32_1 : i32, i32, i32
  }
  func.func @transform_5(%arg0: i32) -> (i32, i32) {
    %c0_i32 = arith.constant 0 : i32
    %c0_i32_0 = arith.constant 0 : i32
    %c0_i32_1 = arith.constant 0 : i32
    return %c0_i32, %c0_i32_0 : i32, i32
  }
  func.func @transform_6(%arg0: i32) -> (i32, i32, i32) {
    %c0_i32 = arith.constant 0 : i32
    %c0_i32_0 = arith.constant 0 : i32
    %c0_i32_1 = arith.constant 0 : i32
    return %arg0, %c0_i32, %c0_i32_0 : i32, i32, i32
  }
  func.func @transform_7(%arg0: i32) -> (i32, i32, i32) {
    %c0_i32 = arith.constant 0 : i32
    %c0_i32_0 = arith.constant 0 : i32
    %c0_i32_1 = arith.constant 0 : i32
    return %arg0, %c0_i32, %c0_i32_0 : i32, i32, i32
  }
}

module attributes {stable_mosaic.version = 11 : i64} {
  func.func @_x_stats_kernel(%arg0: i32, %arg1: memref<1x16x256xf32, #tpu.memory_space<vmem>>, %arg2: memref<1x16x2xf32, #tpu.memory_space<vmem>>) attributes {dimension_semantics = [#tpu.dimension_semantics<parallel>], iteration_bounds = array<i64: 2>, scalar_prefetch = 0 : i64, scratch_operands = 0 : i64, tpu.core_type = #tpu.core_type<tc>, window_params = [{transform_indices = @transform_0, window_bounds = array<i64: 1, 16, 256>}, {transform_indices = @transform_1, window_bounds = array<i64: 1, 16, 2>}]} {
    %c0 = arith.constant 0 : index
    %c0_0 = arith.constant 0 : index
    %c0_1 = arith.constant 0 : index
    %0 = vector.load %arg1[%c0, %c0_0, %c0_1] : memref<1x16x256xf32, #tpu.memory_space<vmem>>, vector<1x16x256xf32>
    %1 = vector.shape_cast %0 : vector<1x16x256xf32> to vector<16x256xf32>
    %cst = arith.constant dense<0.000000e+00> : vector<16xf32>
    %2 = vector.multi_reduction <add>, %1, %cst [1] : vector<16x256xf32> to vector<16xf32>
    %3 = vector.shape_cast %2 : vector<16xf32> to vector<16x1xf32>
    %4 = arith.mulf %1, %1 : vector<16x256xf32>
    %cst_2 = arith.constant dense<0.000000e+00> : vector<16xf32>
    %5 = vector.multi_reduction <add>, %4, %cst_2 [1] : vector<16x256xf32> to vector<16xf32>
    %6 = vector.shape_cast %5 : vector<16xf32> to vector<16x1xf32>
    %7 = tpu.concatenate %3, %6 in 1 : vector<16x1xf32>, vector<16x1xf32> -> vector<16x2xf32>
    %c0_3 = arith.constant 0 : index
    %c0_4 = arith.constant 0 : index
    %c0_5 = arith.constant 0 : index
    %8 = vector.load %arg2[%c0_3, %c0_4, %c0_5] : memref<1x16x2xf32, #tpu.memory_space<vmem>>, vector<1x16x2xf32>
    %9 = vector.shape_cast %8 : vector<1x16x2xf32> to vector<16x2xf32>
    %10 = vector.shape_cast %7 : vector<16x2xf32> to vector<1x16x2xf32>
    tpu.vector_store %arg2[%c0_3, %c0_4, %c0_5], %10 {strides = array<i32>} : memref<1x16x2xf32, #tpu.memory_space<vmem>>, vector<1x16x2xf32>,
    return
  }
  func.func @transform_0(%arg0: i32) -> (i32, i32, i32) {
    %c0_i32 = arith.constant 0 : i32
    %c0_i32_0 = arith.constant 0 : i32
    %c0_i32_1 = arith.constant 0 : i32
    return %arg0, %c0_i32, %c0_i32_0 : i32, i32, i32
  }
  func.func @transform_1(%arg0: i32) -> (i32, i32, i32) {
    %c0_i32 = arith.constant 0 : i32
    %c0_i32_0 = arith.constant 0 : i32
    %c0_i32_1 = arith.constant 0 : i32
    return %arg0, %c0_i32, %c0_i32_0 : i32, i32, i32
  }
}

module attributes {stable_mosaic.version = 11 : i64} {
  func.func @_bn2_relu_conv2_sc_kernel(%arg0: i32, %arg1: memref<1x16x256xbf16, #tpu.memory_space<vmem>>, %arg2: memref<1x16x256xf32, #tpu.memory_space<vmem>>, %arg3: memref<9x1x256xf32, #tpu.memory_space<vmem>>, %arg4: memref<16x1xf32, #tpu.memory_space<vmem>>, %arg5: memref<16x1xf32, #tpu.memory_space<vmem>>, %arg6: memref<9x16x16xbf16, #tpu.memory_space<vmem>>, %arg7: memref<16x1xf32, #tpu.memory_space<vmem>>, %arg8: memref<16x16xbf16, #tpu.memory_space<vmem>>, %arg9: memref<16x1xf32, #tpu.memory_space<vmem>>, %arg10: memref<1x16x256xf32, #tpu.memory_space<vmem>>) attributes {dimension_semantics = [#tpu.dimension_semantics<parallel>], iteration_bounds = array<i64: 2>, scalar_prefetch = 0 : i64, scratch_operands = 0 : i64, tpu.core_type = #tpu.core_type<tc>, window_params = [{transform_indices = @transform_0, window_bounds = array<i64: 1, 16, 256>}, {transform_indices = @transform_1, window_bounds = array<i64: 1, 16, 256>}, {pipeline_mode = #tpu.pipeline_mode<synchronous>, transform_indices = @transform_2, window_bounds = array<i64: 9, 1, 256>}, {pipeline_mode = #tpu.pipeline_mode<synchronous>, transform_indices = @transform_3, window_bounds = array<i64: 16, 1>}, {pipeline_mode = #tpu.pipeline_mode<synchronous>, transform_indices = @transform_4, window_bounds = array<i64: 16, 1>}, {pipeline_mode = #tpu.pipeline_mode<synchronous>, transform_indices = @transform_5, window_bounds = array<i64: 9, 16, 16>}, {pipeline_mode = #tpu.pipeline_mode<synchronous>, transform_indices = @transform_6, window_bounds = array<i64: 16, 1>}, {pipeline_mode = #tpu.pipeline_mode<synchronous>, transform_indices = @transform_7, window_bounds = array<i64: 16, 16>}, {pipeline_mode = #tpu.pipeline_mode<synchronous>, transform_indices = @transform_8, window_bounds = array<i64: 16, 1>}, {transform_indices = @transform_9, window_bounds = array<i64: 1, 16, 256>}]} {
    %c0 = arith.constant 0 : index
    %c0_0 = arith.constant 0 : index
    %c0_1 = arith.constant 0 : index
    %0 = vector.load %arg1[%c0, %c0_0, %c0_1] : memref<1x16x256xbf16, #tpu.memory_space<vmem>>, vector<1x16x256xbf16>
    %1 = vector.shape_cast %0 : vector<1x16x256xbf16> to vector<16x256xbf16>
    %2 = arith.extf %1 : vector<16x256xbf16> to vector<16x256xf32>
    %c0_2 = arith.constant 0 : index
    %c0_3 = arith.constant 0 : index
    %3 = vector.load %arg4[%c0_2, %c0_3] : memref<16x1xf32, #tpu.memory_space<vmem>>, vector<16x1xf32>
    %4 = vector.broadcast %3 : vector<16x1xf32> to vector<16x256xf32>
    %5 = arith.mulf %2, %4 : vector<16x256xf32>
    %c0_4 = arith.constant 0 : index
    %c0_5 = arith.constant 0 : index
    %6 = vector.load %arg5[%c0_4, %c0_5] : memref<16x1xf32, #tpu.memory_space<vmem>>, vector<16x1xf32>
    %7 = vector.broadcast %6 : vector<16x1xf32> to vector<16x256xf32>
    %8 = arith.addf %5, %7 : vector<16x256xf32>
    %cst = arith.constant 0.000000e+00 : f32
    %9 = vector.broadcast %cst : f32 to vector<16x256xf32>
    %10 = arith.maximumf %8, %9 : vector<16x256xf32>
    %c0_6 = arith.constant 0 : index
    %c0_7 = arith.constant 0 : index
    %11 = vector.load %arg8[%c0_6, %c0_7] : memref<16x16xbf16, #tpu.memory_space<vmem>>, vector<16x16xbf16>
    %c0_8 = arith.constant 0 : index
    %c0_9 = arith.constant 0 : index
    %c0_10 = arith.constant 0 : index
    %12 = vector.load %arg2[%c0_8, %c0_9, %c0_10] : memref<1x16x256xf32, #tpu.memory_space<vmem>>, vector<1x16x256xf32>
    %13 = vector.shape_cast %12 : vector<1x16x256xf32> to vector<16x256xf32>
    %14 = arith.truncf %13 : vector<16x256xf32> to vector<16x256xbf16>
    %cst_11 = arith.constant dense<0.000000e+00> : vector<16x256xf32>
    %15 = tpu.matmul %11, %14, %cst_11 {dimension_numbers = #tpu.dot_dimension_numbers<[1], [0], [0], [1], [0, 0, 1, 1], [], []>} : vector<16x16xbf16>, vector<16x256xbf16>, vector<16x256xf32> -> vector<16x256xf32>
    %c0_12 = arith.constant 0 : index
    %c0_13 = arith.constant 0 : index
    %16 = vector.load %arg9[%c0_12, %c0_13] : memref<16x1xf32, #tpu.memory_space<vmem>>, vector<16x1xf32>
    %17 = vector.broadcast %16 : vector<16x1xf32> to vector<16x256xf32>
    %18 = arith.addf %15, %17 : vector<16x256xf32>
    %c17_i32 = arith.constant 17 : i32
    %19 = tpu.dynamic_rotate %10 by %c17_i32 dim 1 : vector<16x256xf32>, i32 -> vector<16x256xf32>
    %c0_14 = arith.constant 0 : index
    %c0_15 = arith.constant 0 : index
    %c0_16 = arith.constant 0 : index
    %20 = vector.load %arg3[%c0_14, %c0_15, %c0_16] : memref<9x1x256xf32, #tpu.memory_space<vmem>>, vector<1x1x256xf32>
    %21 = vector.shape_cast %20 : vector<1x1x256xf32> to vector<1x256xf32>
    %22 = vector.broadcast %21 : vector<1x256xf32> to vector<16x256xf32>
    %23 = arith.mulf %19, %22 : vector<16x256xf32>
    %c0_17 = arith.constant 0 : index
    %c0_18 = arith.constant 0 : index
    %c0_19 = arith.constant 0 : index
    %24 = vector.load %arg6[%c0_17, %c0_18, %c0_19] : memref<9x16x16xbf16, #tpu.memory_space<vmem>>, vector<1x16x16xbf16>
    %25 = vector.shape_cast %24 : vector<1x16x16xbf16> to vector<16x16xbf16>
    %26 = arith.truncf %23 : vector<16x256xf32> to vector<16x256xbf16>
    %cst_20 = arith.constant dense<0.000000e+00> : vector<16x256xf32>
    %27 = tpu.matmul %25, %26, %cst_20 {dimension_numbers = #tpu.dot_dimension_numbers<[1], [0], [0], [1], [0, 0, 1, 1], [], []>} : vector<16x16xbf16>, vector<16x256xbf16>, vector<16x256xf32> -> vector<16x256xf32>
    %c16_i32 = arith.constant 16 : i32
    %28 = tpu.dynamic_rotate %10 by %c16_i32 dim 1 : vector<16x256xf32>, i32 -> vector<16x256xf32>
    %c1 = arith.constant 1 : index
    %c0_21 = arith.constant 0 : index
    %c0_22 = arith.constant 0 : index
    %29 = vector.load %arg3[%c1, %c0_21, %c0_22] : memref<9x1x256xf32, #tpu.memory_space<vmem>>, vector<1x1x256xf32>
    %30 = vector.shape_cast %29 : vector<1x1x256xf32> to vector<1x256xf32>
    %31 = vector.broadcast %30 : vector<1x256xf32> to vector<16x256xf32>
    %32 = arith.mulf %28, %31 : vector<16x256xf32>
    %c1_23 = arith.constant 1 : index
    %c0_24 = arith.constant 0 : index
    %c0_25 = arith.constant 0 : index
    %33 = vector.load %arg6[%c1_23, %c0_24, %c0_25] : memref<9x16x16xbf16, #tpu.memory_space<vmem>>, vector<1x16x16xbf16>
    %34 = vector.shape_cast %33 : vector<1x16x16xbf16> to vector<16x16xbf16>
    %35 = arith.truncf %32 : vector<16x256xf32> to vector<16x256xbf16>
    %cst_26 = arith.constant dense<0.000000e+00> : vector<16x256xf32>
    %36 = tpu.matmul %34, %35, %cst_26 {dimension_numbers = #tpu.dot_dimension_numbers<[1], [0], [0], [1], [0, 0, 1, 1], [], []>} : vector<16x16xbf16>, vector<16x256xbf16>, vector<16x256xf32> -> vector<16x256xf32>
    %37 = arith.addf %27, %36 : vector<16x256xf32>
    %c15_i32 = arith.constant 15 : i32
    %38 = tpu.dynamic_rotate %10 by %c15_i32 dim 1 : vector<16x256xf32>, i32 -> vector<16x256xf32>
    %c2 = arith.constant 2 : index
    %c0_27 = arith.constant 0 : index
    %c0_28 = arith.constant 0 : index
    %39 = vector.load %arg3[%c2, %c0_27, %c0_28] : memref<9x1x256xf32, #tpu.memory_space<vmem>>, vector<1x1x256xf32>
    %40 = vector.shape_cast %39 : vector<1x1x256xf32> to vector<1x256xf32>
    %41 = vector.broadcast %40 : vector<1x256xf32> to vector<16x256xf32>
    %42 = arith.mulf %38, %41 : vector<16x256xf32>
    %c2_29 = arith.constant 2 : index
    %c0_30 = arith.constant 0 : index
    %c0_31 = arith.constant 0 : index
    %43 = vector.load %arg6[%c2_29, %c0_30, %c0_31] : memref<9x16x16xbf16, #tpu.memory_space<vmem>>, vector<1x16x16xbf16>
    %44 = vector.shape_cast %43 : vector<1x16x16xbf16> to vector<16x16xbf16>
    %45 = arith.truncf %42 : vector<16x256xf32> to vector<16x256xbf16>
    %cst_32 = arith.constant dense<0.000000e+00> : vector<16x256xf32>
    %46 = tpu.matmul %44, %45, %cst_32 {dimension_numbers = #tpu.dot_dimension_numbers<[1], [0], [0], [1], [0, 0, 1, 1], [], []>} : vector<16x16xbf16>, vector<16x256xbf16>, vector<16x256xf32> -> vector<16x256xf32>
    %47 = arith.addf %37, %46 : vector<16x256xf32>
    %c1_i32 = arith.constant 1 : i32
    %48 = tpu.dynamic_rotate %10 by %c1_i32 dim 1 : vector<16x256xf32>, i32 -> vector<16x256xf32>
    %c3 = arith.constant 3 : index
    %c0_33 = arith.constant 0 : index
    %c0_34 = arith.constant 0 : index
    %49 = vector.load %arg3[%c3, %c0_33, %c0_34] : memref<9x1x256xf32, #tpu.memory_space<vmem>>, vector<1x1x256xf32>
    %50 = vector.shape_cast %49 : vector<1x1x256xf32> to vector<1x256xf32>
    %51 = vector.broadcast %50 : vector<1x256xf32> to vector<16x256xf32>
    %52 = arith.mulf %48, %51 : vector<16x256xf32>
    %c3_35 = arith.constant 3 : index
    %c0_36 = arith.constant 0 : index
    %c0_37 = arith.constant 0 : index
    %53 = vector.load %arg6[%c3_35, %c0_36, %c0_37] : memref<9x16x16xbf16, #tpu.memory_space<vmem>>, vector<1x16x16xbf16>
    %54 = vector.shape_cast %53 : vector<1x16x16xbf16> to vector<16x16xbf16>
    %55 = arith.truncf %52 : vector<16x256xf32> to vector<16x256xbf16>
    %cst_38 = arith.constant dense<0.000000e+00> : vector<16x256xf32>
    %56 = tpu.matmul %54, %55, %cst_38 {dimension_numbers = #tpu.dot_dimension_numbers<[1], [0], [0], [1], [0, 0, 1, 1], [], []>} : vector<16x16xbf16>, vector<16x256xbf16>, vector<16x256xf32> -> vector<16x256xf32>
    %57 = arith.addf %47, %56 : vector<16x256xf32>
    %c4 = arith.constant 4 : index
    %c0_39 = arith.constant 0 : index
    %c0_40 = arith.constant 0 : index
    %58 = vector.load %arg6[%c4, %c0_39, %c0_40] : memref<9x16x16xbf16, #tpu.memory_space<vmem>>, vector<1x16x16xbf16>
    %59 = vector.shape_cast %58 : vector<1x16x16xbf16> to vector<16x16xbf16>
    %60 = arith.truncf %10 : vector<16x256xf32> to vector<16x256xbf16>
    %cst_41 = arith.constant dense<0.000000e+00> : vector<16x256xf32>
    %61 = tpu.matmul %59, %60, %cst_41 {dimension_numbers = #tpu.dot_dimension_numbers<[1], [0], [0], [1], [0, 0, 1, 1], [], []>} : vector<16x16xbf16>, vector<16x256xbf16>, vector<16x256xf32> -> vector<16x256xf32>
    %62 = arith.addf %57, %61 : vector<16x256xf32>
    %c255_i32 = arith.constant 255 : i32
    %63 = tpu.dynamic_rotate %10 by %c255_i32 dim 1 : vector<16x256xf32>, i32 -> vector<16x256xf32>
    %c5 = arith.constant 5 : index
    %c0_42 = arith.constant 0 : index
    %c0_43 = arith.constant 0 : index
    %64 = vector.load %arg3[%c5, %c0_42, %c0_43] : memref<9x1x256xf32, #tpu.memory_space<vmem>>, vector<1x1x256xf32>
    %65 = vector.shape_cast %64 : vector<1x1x256xf32> to vector<1x256xf32>
    %66 = vector.broadcast %65 : vector<1x256xf32> to vector<16x256xf32>
    %67 = arith.mulf %63, %66 : vector<16x256xf32>
    %c5_44 = arith.constant 5 : index
    %c0_45 = arith.constant 0 : index
    %c0_46 = arith.constant 0 : index
    %68 = vector.load %arg6[%c5_44, %c0_45, %c0_46] : memref<9x16x16xbf16, #tpu.memory_space<vmem>>, vector<1x16x16xbf16>
    %69 = vector.shape_cast %68 : vector<1x16x16xbf16> to vector<16x16xbf16>
    %70 = arith.truncf %67 : vector<16x256xf32> to vector<16x256xbf16>
    %cst_47 = arith.constant dense<0.000000e+00> : vector<16x256xf32>
    %71 = tpu.matmul %69, %70, %cst_47 {dimension_numbers = #tpu.dot_dimension_numbers<[1], [0], [0], [1], [0, 0, 1, 1], [], []>} : vector<16x16xbf16>, vector<16x256xbf16>, vector<16x256xf32> -> vector<16x256xf32>
    %72 = arith.addf %62, %71 : vector<16x256xf32>
    %c241_i32 = arith.constant 241 : i32
    %73 = tpu.dynamic_rotate %10 by %c241_i32 dim 1 : vector<16x256xf32>, i32 -> vector<16x256xf32>
    %c6 = arith.constant 6 : index
    %c0_48 = arith.constant 0 : index
    %c0_49 = arith.constant 0 : index
    %74 = vector.load %arg3[%c6, %c0_48, %c0_49] : memref<9x1x256xf32, #tpu.memory_space<vmem>>, vector<1x1x256xf32>
    %75 = vector.shape_cast %74 : vector<1x1x256xf32> to vector<1x256xf32>
    %76 = vector.broadcast %75 : vector<1x256xf32> to vector<16x256xf32>
    %77 = arith.mulf %73, %76 : vector<16x256xf32>
    %c6_50 = arith.constant 6 : index
    %c0_51 = arith.constant 0 : index
    %c0_52 = arith.constant 0 : index
    %78 = vector.load %arg6[%c6_50, %c0_51, %c0_52] : memref<9x16x16xbf16, #tpu.memory_space<vmem>>, vector<1x16x16xbf16>
    %79 = vector.shape_cast %78 : vector<1x16x16xbf16> to vector<16x16xbf16>
    %80 = arith.truncf %77 : vector<16x256xf32> to vector<16x256xbf16>
    %cst_53 = arith.constant dense<0.000000e+00> : vector<16x256xf32>
    %81 = tpu.matmul %79, %80, %cst_53 {dimension_numbers = #tpu.dot_dimension_numbers<[1], [0], [0], [1], [0, 0, 1, 1], [], []>} : vector<16x16xbf16>, vector<16x256xbf16>, vector<16x256xf32> -> vector<16x256xf32>
    %82 = arith.addf %72, %81 : vector<16x256xf32>
    %c240_i32 = arith.constant 240 : i32
    %83 = tpu.dynamic_rotate %10 by %c240_i32 dim 1 : vector<16x256xf32>, i32 -> vector<16x256xf32>
    %c7 = arith.constant 7 : index
    %c0_54 = arith.constant 0 : index
    %c0_55 = arith.constant 0 : index
    %84 = vector.load %arg3[%c7, %c0_54, %c0_55] : memref<9x1x256xf32, #tpu.memory_space<vmem>>, vector<1x1x256xf32>
    %85 = vector.shape_cast %84 : vector<1x1x256xf32> to vector<1x256xf32>
    %86 = vector.broadcast %85 : vector<1x256xf32> to vector<16x256xf32>
    %87 = arith.mulf %83, %86 : vector<16x256xf32>
    %c7_56 = arith.constant 7 : index
    %c0_57 = arith.constant 0 : index
    %c0_58 = arith.constant 0 : index
    %88 = vector.load %arg6[%c7_56, %c0_57, %c0_58] : memref<9x16x16xbf16, #tpu.memory_space<vmem>>, vector<1x16x16xbf16>
    %89 = vector.shape_cast %88 : vector<1x16x16xbf16> to vector<16x16xbf16>
    %90 = arith.truncf %87 : vector<16x256xf32> to vector<16x256xbf16>
    %cst_59 = arith.constant dense<0.000000e+00> : vector<16x256xf32>
    %91 = tpu.matmul %89, %90, %cst_59 {dimension_numbers = #tpu.dot_dimension_numbers<[1], [0], [0], [1], [0, 0, 1, 1], [], []>} : vector<16x16xbf16>, vector<16x256xbf16>, vector<16x256xf32> -> vector<16x256xf32>
    %92 = arith.addf %82, %91 : vector<16x256xf32>
    %c239_i32 = arith.constant 239 : i32
    %93 = tpu.dynamic_rotate %10 by %c239_i32 dim 1 : vector<16x256xf32>, i32 -> vector<16x256xf32>
    %c8 = arith.constant 8 : index
    %c0_60 = arith.constant 0 : index
    %c0_61 = arith.constant 0 : index
    %94 = vector.load %arg3[%c8, %c0_60, %c0_61] : memref<9x1x256xf32, #tpu.memory_space<vmem>>, vector<1x1x256xf32>
    %95 = vector.shape_cast %94 : vector<1x1x256xf32> to vector<1x256xf32>
    %96 = vector.broadcast %95 : vector<1x256xf32> to vector<16x256xf32>
    %97 = arith.mulf %93, %96 : vector<16x256xf32>
    %c8_62 = arith.constant 8 : index
    %c0_63 = arith.constant 0 : index
    %c0_64 = arith.constant 0 : index
    %98 = vector.load %arg6[%c8_62, %c0_63, %c0_64] : memref<9x16x16xbf16, #tpu.memory_space<vmem>>, vector<1x16x16xbf16>
    %99 = vector.shape_cast %98 : vector<1x16x16xbf16> to vector<16x16xbf16>
    %100 = arith.truncf %97 : vector<16x256xf32> to vector<16x256xbf16>
    %cst_65 = arith.constant dense<0.000000e+00> : vector<16x256xf32>
    %101 = tpu.matmul %99, %100, %cst_65 {dimension_numbers = #tpu.dot_dimension_numbers<[1], [0], [0], [1], [0, 0, 1, 1], [], []>} : vector<16x16xbf16>, vector<16x256xbf16>, vector<16x256xf32> -> vector<16x256xf32>
    %102 = arith.addf %92, %101 : vector<16x256xf32>
    %103 = arith.addf %18, %102 : vector<16x256xf32>
    %c0_66 = arith.constant 0 : index
    %c0_67 = arith.constant 0 : index
    %104 = vector.load %arg7[%c0_66, %c0_67] : memref<16x1xf32, #tpu.memory_space<vmem>>, vector<16x1xf32>
    %105 = vector.broadcast %104 : vector<16x1xf32> to vector<16x256xf32>
    %106 = arith.addf %103, %105 : vector<16x256xf32>
    %c0_68 = arith.constant 0 : index
    %c0_69 = arith.constant 0 : index
    %c0_70 = arith.constant 0 : index
    %107 = vector.load %arg10[%c0_68, %c0_69, %c0_70] : memref<1x16x256xf32, #tpu.memory_space<vmem>>, vector<1x16x256xf32>
    %108 = vector.shape_cast %107 : vector<1x16x256xf32> to vector<16x256xf32>
    %109 = vector.shape_cast %106 : vector<16x256xf32> to vector<1x16x256xf32>
    tpu.vector_store %arg10[%c0_68, %c0_69, %c0_70], %109 {strides = array<i32>} : memref<1x16x256xf32, #tpu.memory_space<vmem>>, vector<1x16x256xf32>,
    return
  }
  func.func @transform_0(%arg0: i32) -> (i32, i32, i32) {
    %c0_i32 = arith.constant 0 : i32
    %c0_i32_0 = arith.constant 0 : i32
    %c0_i32_1 = arith.constant 0 : i32
    return %arg0, %c0_i32, %c0_i32_0 : i32, i32, i32
  }
  func.func @transform_1(%arg0: i32) -> (i32, i32, i32) {
    %c0_i32 = arith.constant 0 : i32
    %c0_i32_0 = arith.constant 0 : i32
    %c0_i32_1 = arith.constant 0 : i32
    return %arg0, %c0_i32, %c0_i32_0 : i32, i32, i32
  }
  func.func @transform_2(%arg0: i32) -> (i32, i32, i32) {
    %c0_i32 = arith.constant 0 : i32
    %c0_i32_0 = arith.constant 0 : i32
    %c0_i32_1 = arith.constant 0 : i32
    %c0_i32_2 = arith.constant 0 : i32
    return %c0_i32, %c0_i32_0, %c0_i32_1 : i32, i32, i32
  }
  func.func @transform_3(%arg0: i32) -> (i32, i32) {
    %c0_i32 = arith.constant 0 : i32
    %c0_i32_0 = arith.constant 0 : i32
    %c0_i32_1 = arith.constant 0 : i32
    return %c0_i32, %c0_i32_0 : i32, i32
  }
  func.func @transform_4(%arg0: i32) -> (i32, i32) {
    %c0_i32 = arith.constant 0 : i32
    %c0_i32_0 = arith.constant 0 : i32
    %c0_i32_1 = arith.constant 0 : i32
    return %c0_i32, %c0_i32_0 : i32, i32
  }
  func.func @transform_5(%arg0: i32) -> (i32, i32, i32) {
    %c0_i32 = arith.constant 0 : i32
    %c0_i32_0 = arith.constant 0 : i32
    %c0_i32_1 = arith.constant 0 : i32
    %c0_i32_2 = arith.constant 0 : i32
    return %c0_i32, %c0_i32_0, %c0_i32_1 : i32, i32, i32
  }
  func.func @transform_6(%arg0: i32) -> (i32, i32) {
    %c0_i32 = arith.constant 0 : i32
    %c0_i32_0 = arith.constant 0 : i32
    %c0_i32_1 = arith.constant 0 : i32
    return %c0_i32, %c0_i32_0 : i32, i32
  }
  func.func @transform_7(%arg0: i32) -> (i32, i32) {
    %c0_i32 = arith.constant 0 : i32
    %c0_i32_0 = arith.constant 0 : i32
    %c0_i32_1 = arith.constant 0 : i32
    return %c0_i32, %c0_i32_0 : i32, i32
  }
  func.func @transform_8(%arg0: i32) -> (i32, i32) {
    %c0_i32 = arith.constant 0 : i32
    %c0_i32_0 = arith.constant 0 : i32
    %c0_i32_1 = arith.constant 0 : i32
    return %c0_i32, %c0_i32_0 : i32, i32
  }
  func.func @transform_9(%arg0: i32) -> (i32, i32, i32) {
    %c0_i32 = arith.constant 0 : i32
    %c0_i32_0 = arith.constant 0 : i32
    %c0_i32_1 = arith.constant 0 : i32
    return %arg0, %c0_i32, %c0_i32_0 : i32, i32, i32
  }
}

</mosaic_0001>

<llo_original>
// kernel: gen_block_forward.3
$region0: #{gen_block_forward.3}
  #allocation0 [shape = 'u32[]', space=smem, size = 0x4, offset = 0x4, fixed_abs, tag = 'smem constant byte address 0x4 - core index']
  #allocation1 [shape = 'u32[144,128]{1,0:T(1,128)}', space=vmem, size = 0x12000, scoped, tag = 'internal scratch']
  %s0 = inlined_call_operand.vmem [shape: f32[2,16,256], index: 0, kind: input, shape index: {}]
  %s1 = inlined_call_operand.vmem [shape: f32[2,16,2], index: 1, kind: output, shape index: {}]
  %s2 = sld [smem:[#allocation0]]
  $region37: #{gen_block_forward.3} parent=0
    _
  %s4 = ssub.s32 1, %s2
  %s5 = scalar_select 0, %s4, %s2
  loop: start=0, step=1, limit=4
  $region2: #{gen_block_forward.3} parent=0 // loop_pre_header
    _
  $region3: #{gen_block_forward.3} parent=0 // loop_header
    %s7 = sphi 0, %s11
    %p8 = scmp.ge.s32.totalorder %s7, 4
    %s17 = sphi 0, %s19
    %s20 = sphi 0, %s17
    %s21 = sphi 0, %s20
    %s37 = sphi 0, %s21
    %s43 = sphi 0, %s45
    %s46 = sphi 0, %s43
    %s47 = sphi 0, %s46
    %s63 = sphi 0, %s47
  $region4: #{gen_block_forward.3} parent=0 // loop_header_branch
    %10 = sbr.rel (%p8) target = $region8
  $region5: #{gen_block_forward.3} parent=0 // loop_body
    %s12 = ssub.s32 %s7, 1
    %s13 = ssub.s32 %s7, 2
    %s14 = sadd.s32 %s7, 1
    %s15 = ssub.s32 %s7, %s14
    %p16 = scmp.eq.s32.totalorder %s15, 0
    %s18 = sadd.s32 %s17, 1
    %s19 = scalar_select %p16, %s17, %s18
    %p22 = pneg %p16
    %p23 = scmp.eq.s32.totalorder %s7, 1
    %p24 = por %p22, %p23
    %p25 = scmp.ne.s32.totalorder %s17, %s20
    %p26 = scmp.eq.s32.totalorder %s7, 0
    %p27 = por %p25, %p26
    %p28 = scmp.ne.s32.totalorder %s17, %s20
    %p29 = scmp.eq.s32.totalorder %s12, 1
    %p30 = por %p28, %p29
    %p31 = scmp.ne.s32.totalorder %s20, %s21
    %p32 = scmp.eq.s32.totalorder %s12, 0
    %p33 = por %p31, %p32
    %p34 = scmp.ne.s32.totalorder %s20, %s21
    %p35 = scmp.eq.s32.totalorder %s13, 1
    %p36 = por %p34, %p35
    %p38 = scmp.ne.s32.totalorder %s21, %s37
    %p39 = scmp.eq.s32.totalorder %s13, 0
    %p40 = por %p38, %p39
    %s41 = ssub.s32 %s7, %s14
    %p42 = scmp.eq.s32.totalorder %s41, 0
    %s44 = sadd.s32 %s43, 1
    %s45 = scalar_select %p42, %s43, %s44
    %p48 = pneg %p42
    %p49 = scmp.eq.s32.totalorder %s7, 1
    %p50 = por %p48, %p49
    %p51 = scmp.ne.s32.totalorder %s43, %s46
    %p52 = scmp.eq.s32.totalorder %s7, 0
    %p53 = por %p51, %p52
    %p54 = scmp.ne.s32.totalorder %s43, %s46
    %p55 = scmp.eq.s32.totalorder %s12, 1
    %p56 = por %p54, %p55
    %p57 = scmp.ne.s32.totalorder %s46, %s47
    %p58 = scmp.eq.s32.totalorder %s12, 0
    %p59 = por %p57, %p58
    %p60 = scmp.ne.s32.totalorder %s46, %s47
    %p61 = scmp.eq.s32.totalorder %s13, 1
    %p62 = por %p60, %p61
    %p64 = scmp.ne.s32.totalorder %s47, %s63
    %p65 = scmp.eq.s32.totalorder %s13, 0
    %p66 = por %p64, %p65
    %p67 = scmp.le.s32.totalorder 1, %s7
    %p68 = scmp.lt.s32.totalorder %s7, 3
    %p69 = pnand %p67, %p68
    %p70 = pneg %p69
    // Predicated region
    $region9: #{gen_block_forward.3} parent=5 // pred_check
      _
    $region10: #{gen_block_forward.3} parent=5 // pred_check_branch
      %72 = sbr.rel (%p69) target = $region12
    $region11: #{gen_block_forward.3} parent=5 // pred_region
      %s73 = ssub.s32 %s7, 1
    $region12: #{gen_block_forward.3} parent=5 // pred_fallthru
      _
    %p74 = scmp.lt.s32.totalorder %s7, 2
    // Predicated region
    $region13: #{gen_block_forward.3} parent=5 // pred_check
      %p75 = pneg %p74
    $region14: #{gen_block_forward.3} parent=5 // pred_check_branch
      %77 = sbr.rel (%p75) target = $region16
    $region15: #{gen_block_forward.3} parent=5 // pred_region
      // Predicated region
      $region17: #{gen_block_forward.3} parent=15 // pred_check
        %p78 = pneg %p27
      $region18: #{gen_block_forward.3} parent=15 // pred_check_branch
        %80 = sbr.rel (%p78) target = $region20
      $region19: #{gen_block_forward.3} parent=15 // pred_region
        %p81 = scmp.lt.s32.totalorder %s7, 1
        %s82 = scalar_select %p81, %s7, 1
        %s83 = smul.addr %s82, 4
        %s84 = smul.addr %s83, 8
        %s85 = scalar_lea.vmem %s0, %s84
      $region20: #{gen_block_forward.3} parent=15 // pred_fallthru
        _
    $region16: #{gen_block_forward.3} parent=5 // pred_fallthru
      _
    %p86 = scmp.le.s32.totalorder 1, %s7
    %p87 = scmp.lt.s32.totalorder %s7, 3
    %p88 = pnand %p86, %p87
    %p89 = pneg %p88
    // Predicated region
    $region21: #{gen_block_forward.3} parent=5 // pred_check
      _
    $region22: #{gen_block_forward.3} parent=5 // pred_check_branch
      %91 = sbr.rel (%p88) target = $region24
    $region23: #{gen_block_forward.3} parent=5 // pred_region
      %s92 = ssub.s32 %s7, 1
      %p93 = scmp.lt.s32.totalorder %s12, 1
      %s94 = scalar_select %p93, %s12, 1
      %s95 = smul.addr %s94, 4
      %s96 = smul.addr %s95, 8
      %s97 = scalar_lea.vmem %s0, %s96
      %p98 = pneg %p33
      %p99 = pneg %p30
      %p100 = pneg %p59
      %p101 = pneg %p56
      %p102 = scmp.lt.s32.totalorder %s12, 1
      %s103 = scalar_select %p102, %s12, 1
      %s104 = smul.addr %s103, 2
      %s105 = smul.addr %s104, 8
      %s106 = scalar_lea.vmem %s1, %s105
      %p107 = scmp.lt.s32.totalorder %s12, 1
      %s108 = scalar_select %p107, %s12, 1
      %s109 = smul.addr %s108, 4
      %s110 = smul.addr %s109, 8
      %s111 = scalar_lea.vmem %s0, %s110
      %p112 = scmp.lt.s32.totalorder %s12, 1
      %s113 = scalar_select %p112, %s12, 1
      %s114 = smul.addr %s113, 2
      %s115 = smul.addr %s114, 8
      %s116 = scalar_lea.vmem %s1, %s115
      %v117 = vld [vmem:[%s111] sm:$0xff]
      %v118 = vld [vmem:[%s111 + $0x8] sm:$0xff]
      %v119 = vld [vmem:[%s111 + $0x10] sm:$0xff]
      %v120 = vld [vmem:[%s111 + $0x18] sm:$0xff]
      %v121 = vadd.f32 %v117, %v118
      %122 = vadd.xlane.f32.xlu0 %v121
      %v123 = vpop.xlane.xlu0 %122
      %v124 = vadd.f32 %v119, %v120
      %125 = vadd.xlane.f32.xlu0 %v124
      %v126 = vpop.xlane.xlu0 %125
      %v127 = vmul.f32 %v117, %v117
      %v128 = vmul.f32 %v118, %v118
      %v129 = vmul.f32 %v119, %v119
      %v130 = vmul.f32 %v120, %v120
      %v131 = vadd.f32 %v127, %v128
      %132 = vadd.xlane.f32.xlu0 %v131
      %v133 = vpop.xlane.xlu0 %132
      %v134 = vadd.f32 %v129, %v130
      %135 = vadd.xlane.f32.xlu0 %v134
      %v136 = vpop.xlane.xlu0 %135
      %vm137 = vcmask 7168
      %v138 = vsel %vm137, %v123, %v133
      %v139 = vsel %vm137, %v126, %v136
      %vm140 = vcmask 15360
      %141 = vst.msk [vmem:[%s116] sm:$0xff] %vm140, %v138
      %142 = vst.msk [vmem:[%s116 + $0x8] sm:$0xff] %vm140, %v139
      %p143 = scmp.lt.s32.totalorder %s12, 1
      %s144 = scalar_select %p143, %s12, 1
      %s145 = smul.addr %s144, 2
      %s146 = smul.addr %s145, 8
      %s147 = scalar_lea.vmem %s1, %s146
      // Predicated region
      $region25: #{gen_block_forward.3} parent=23 // pred_check
        %p148 = pneg %p56
      $region26: #{gen_block_forward.3} parent=23 // pred_check_branch
        %150 = sbr.rel (%p148) target = $region28
      $region27: #{gen_block_forward.3} parent=23 // pred_region
        _
      $region28: #{gen_block_forward.3} parent=23 // pred_fallthru
        _
    $region24: #{gen_block_forward.3} parent=5 // pred_fallthru
      _
    %p151 = scmp.le.s32.totalorder 2, %s7
    // Predicated region
    $region29: #{gen_block_forward.3} parent=5 // pred_check
      %p152 = pneg %p151
    $region30: #{gen_block_forward.3} parent=5 // pred_check_branch
      %154 = sbr.rel (%p152) target = $region32
    $region31: #{gen_block_forward.3} parent=5 // pred_region
      %s155 = ssub.s32 %s7, 2
      // Predicated region
      $region33: #{gen_block_forward.3} parent=31 // pred_check
        %p156 = pneg %p62
      $region34: #{gen_block_forward.3} parent=31 // pred_check_branch
        %158 = sbr.rel (%p156) target = $region36
      $region35: #{gen_block_forward.3} parent=31 // pred_region
        %p159 = scmp.lt.s32.totalorder %s13, 1
        %s160 = scalar_select %p159, %s13, 1
        %s161 = smul.addr %s160, 2
        %s162 = smul.addr %s161, 8
        %s163 = scalar_lea.vmem %s1, %s162
      $region36: #{gen_block_forward.3} parent=31 // pred_fallthru
        _
    $region32: #{gen_block_forward.3} parent=5 // pred_fallthru
      _
  $region6: #{gen_block_forward.3} parent=0 // loop_footer
    %s11 = sadd.s32 1, %s7
  $region7: #{gen_block_forward.3} parent=0 // loop_footer_branch
    %6 = sbr.rel target = $region3
  $region8: #{gen_block_forward.3} parent=0 // loop_exit
    _

// kernel: gen_block_forward.4
$region0: #{gen_block_forward.4}
  #allocation0 [shape = 'u32[]', space=smem, size = 0x4, offset = 0x4, fixed_abs, tag = 'smem constant byte address 0x4 - core index']
  #allocation1 [shape = 'u32[144,128]{1,0:T(1,128)}', space=vmem, size = 0x12000, scoped, tag = 'internal scratch']
  %s0 = inlined_call_operand.vmem [shape: f32[2,16,256], index: 0, kind: input, shape index: {}]
  %s1 = inlined_call_operand.vmem [shape: f32[9,1,256], index: 1, kind: input, shape index: {}]
  %s2 = inlined_call_operand.vmem [shape: f32[16,1], index: 2, kind: input, shape index: {}]
  %s3 = inlined_call_operand.vmem [shape: f32[16,1], index: 3, kind: input, shape index: {}]
  %s4 = inlined_call_operand.vmem [shape: bf16[9,16,16], index: 4, kind: input, shape index: {}]
  %s5 = inlined_call_operand.vmem [shape: f32[16,1], index: 5, kind: input, shape index: {}]
  %s6 = inlined_call_operand.vmem [shape: bf16[2,16,256], index: 6, kind: output, shape index: {0}]
  %s7 = inlined_call_operand.vmem [shape: f32[2,16,2], index: 7, kind: output, shape index: {1}]
  %8 = xla_tuple %s6, %s7
  %s9 = sld [smem:[#allocation0]]
  $region65: #{gen_block_forward.4} parent=0
    _
  %s11 = ssub.s32 1, %s9
  %s12 = scalar_select 0, %s11, %s9
  loop: start=0, step=1, limit=4
  $region2: #{gen_block_forward.4} parent=0 // loop_pre_header
    _
  $region3: #{gen_block_forward.4} parent=0 // loop_header
    %s14 = sphi 0, %s18
    %p15 = scmp.ge.s32.totalorder %s14, 4
    %s24 = sphi 0, %s26
    %s27 = sphi 0, %s24
    %s28 = sphi 0, %s27
    %s44 = sphi 0, %s28
    %s48 = sphi 0, %s48
    %s50 = sphi 0, %s48
    %s51 = sphi 0, %s50
    %s65 = sphi 0, %s51
    %s69 = sphi 0, %s69
    %s71 = sphi 0, %s69
    %s72 = sphi 0, %s71
    %s86 = sphi 0, %s72
    %s90 = sphi 0, %s90
    %s92 = sphi 0, %s90
    %s93 = sphi 0, %s92
    %s107 = sphi 0, %s93
    %s111 = sphi 0, %s111
    %s113 = sphi 0, %s111
    %s114 = sphi 0, %s113
    %s128 = sphi 0, %s114
    %s132 = sphi 0, %s132
    %s134 = sphi 0, %s132
    %s135 = sphi 0, %s134
    %s149 = sphi 0, %s135
    %s155 = sphi 0, %s157
    %s158 = sphi 0, %s155
    %s159 = sphi 0, %s158
    %s175 = sphi 0, %s159
    %s181 = sphi 0, %s183
    %s184 = sphi 0, %s181
    %s185 = sphi 0, %s184
    %s201 = sphi 0, %s185
  $region4: #{gen_block_forward.4} parent=0 // loop_header_branch
    %17 = sbr.rel (%p15) target = $region8
  $region5: #{gen_block_forward.4} parent=0 // loop_body
    %s19 = ssub.s32 %s14, 1
    %s20 = ssub.s32 %s14, 2
    %s21 = sadd.s32 %s14, 1
    %s22 = ssub.s32 %s14, %s21
    %p23 = scmp.eq.s32.totalorder %s22, 0
    %s25 = sadd.s32 %s24, 1
    %s26 = scalar_select %p23, %s24, %s25
    %p29 = pneg %p23
    %p30 = scmp.eq.s32.totalorder %s14, 1
    %p31 = por %p29, %p30
    %p32 = scmp.ne.s32.totalorder %s24, %s27
    %p33 = scmp.eq.s32.totalorder %s14, 0
    %p34 = por %p32, %p33
    %p35 = scmp.ne.s32.totalorder %s24, %s27
    %p36 = scmp.eq.s32.totalorder %s19, 1
    %p37 = por %p35, %p36
    %p38 = scmp.ne.s32.totalorder %s27, %s28
    %p39 = scmp.eq.s32.totalorder %s19, 0
    %p40 = por %p38, %p39
    %p41 = scmp.ne.s32.totalorder %s27, %s28
    %p42 = scmp.eq.s32.totalorder %s20, 1
    %p43 = por %p41, %p42
    %p45 = scmp.ne.s32.totalorder %s28, %s44
    %p46 = scmp.eq.s32.totalorder %s20, 0
    %p47 = por %p45, %p46
    %s49 = sadd.s32 %s48, 1
    %p52 = scmp.eq.s32.totalorder %s14, 1
    %p53 = scmp.ne.s32.totalorder %s48, %s50
    %p54 = scmp.eq.s32.totalorder %s14, 0
    %p55 = por %p53, %p54
    %p56 = scmp.ne.s32.totalorder %s48, %s50
    %p57 = scmp.eq.s32.totalorder %s19, 1
    %p58 = por %p56, %p57
    %p59 = scmp.ne.s32.totalorder %s50, %s51
    %p60 = scmp.eq.s32.totalorder %s19, 0
    %p61 = por %p59, %p60
    %p62 = scmp.ne.s32.totalorder %s50, %s51
    %p63 = scmp.eq.s32.totalorder %s20, 1
    %p64 = por %p62, %p63
    %p66 = scmp.ne.s32.totalorder %s51, %s65
    %p67 = scmp.eq.s32.totalorder %s20, 0
    %p68 = por %p66, %p67
    %s70 = sadd.s32 %s69, 1
    %p73 = scmp.eq.s32.totalorder %s14, 1
    %p74 = scmp.ne.s32.totalorder %s69, %s71
    %p75 = scmp.eq.s32.totalorder %s14, 0
    %p76 = por %p74, %p75
    %p77 = scmp.ne.s32.totalorder %s69, %s71
    %p78 = scmp.eq.s32.totalorder %s19, 1
    %p79 = por %p77, %p78
    %p80 = scmp.ne.s32.totalorder %s71, %s72
    %p81 = scmp.eq.s32.totalorder %s19, 0
    %p82 = por %p80, %p81
    %p83 = scmp.ne.s32.totalorder %s71, %s72
    %p84 = scmp.eq.s32.totalorder %s20, 1
    %p85 = por %p83, %p84
    %p87 = scmp.ne.s32.totalorder %s72, %s86
    %p88 = scmp.eq.s32.totalorder %s20, 0
    %p89 = por %p87, %p88
    %s91 = sadd.s32 %s90, 1
    %p94 = scmp.eq.s32.totalorder %s14, 1
    %p95 = scmp.ne.s32.totalorder %s90, %s92
    %p96 = scmp.eq.s32.totalorder %s14, 0
    %p97 = por %p95, %p96
    %p98 = scmp.ne.s32.totalorder %s90, %s92
    %p99 = scmp.eq.s32.totalorder %s19, 1
    %p100 = por %p98, %p99
    %p101 = scmp.ne.s32.totalorder %s92, %s93
    %p102 = scmp.eq.s32.totalorder %s19, 0
    %p103 = por %p101, %p102
    %p104 = scmp.ne.s32.totalorder %s92, %s93
    %p105 = scmp.eq.s32.totalorder %s20, 1
    %p106 = por %p104, %p105
    %p108 = scmp.ne.s32.totalorder %s93, %s107
    %p109 = scmp.eq.s32.totalorder %s20, 0
    %p110 = por %p108, %p109
    %s112 = sadd.s32 %s111, 1
    %p115 = scmp.eq.s32.totalorder %s14, 1
    %p116 = scmp.ne.s32.totalorder %s111, %s113
    %p117 = scmp.eq.s32.totalorder %s14, 0
    %p118 = por %p116, %p117
    %p119 = scmp.ne.s32.totalorder %s111, %s113
    %p120 = scmp.eq.s32.totalorder %s19, 1
    %p121 = por %p119, %p120
    %p122 = scmp.ne.s32.totalorder %s113, %s114
    %p123 = scmp.eq.s32.totalorder %s19, 0
    %p124 = por %p122, %p123
    %p125 = scmp.ne.s32.totalorder %s113, %s114
    %p126 = scmp.eq.s32.totalorder %s20, 1
    %p127 = por %p125, %p126
    %p129 = scmp.ne.s32.totalorder %s114, %s128
    %p130 = scmp.eq.s32.totalorder %s20, 0
    %p131 = por %p129, %p130
    %s133 = sadd.s32 %s132, 1
    %p136 = scmp.eq.s32.totalorder %s14, 1
    %p137 = scmp.ne.s32.totalorder %s132, %s134
    %p138 = scmp.eq.s32.totalorder %s14, 0
    %p139 = por %p137, %p138
    %p140 = scmp.ne.s32.totalorder %s132, %s134
    %p141 = scmp.eq.s32.totalorder %s19, 1
    %p142 = por %p140, %p141
    %p143 = scmp.ne.s32.totalorder %s134, %s135
    %p144 = scmp.eq.s32.totalorder %s19, 0
    %p145 = por %p143, %p144
    %p146 = scmp.ne.s32.totalorder %s134, %s135
    %p147 = scmp.eq.s32.totalorder %s20, 1
    %p148 = por %p146, %p147
    %p150 = scmp.ne.s32.totalorder %s135, %s149
    %p151 = scmp.eq.s32.totalorder %s20, 0
    %p152 = por %p150, %p151
    %s153 = ssub.s32 %s14, %s21
    %p154 = scmp.eq.s32.totalorder %s153, 0
    %s156 = sadd.s32 %s155, 1
    %s157 = scalar_select %p154, %s155, %s156
    %p160 = pneg %p154
    %p161 = scmp.eq.s32.totalorder %s14, 1
    %p162 = por %p160, %p161
    %p163 = scmp.ne.s32.totalorder %s155, %s158
    %p164 = scmp.eq.s32.totalorder %s14, 0
    %p165 = por %p163, %p164
    %p166 = scmp.ne.s32.totalorder %s155, %s158
    %p167 = scmp.eq.s32.totalorder %s19, 1
    %p168 = por %p166, %p167
    %p169 = scmp.ne.s32.totalorder %s158, %s159
    %p170 = scmp.eq.s32.totalorder %s19, 0
    %p171 = por %p169, %p170
    %p172 = scmp.ne.s32.totalorder %s158, %s159
    %p173 = scmp.eq.s32.totalorder %s20, 1
    %p174 = por %p172, %p173
    %p176 = scmp.ne.s32.totalorder %s159, %s175
    %p177 = scmp.eq.s32.totalorder %s20, 0
    %p178 = por %p176, %p177
    %s179 = ssub.s32 %s14, %s21
    %p180 = scmp.eq.s32.totalorder %s179, 0
    %s182 = sadd.s32 %s181, 1
    %s183 = scalar_select %p180, %s181, %s182
    %p186 = pneg %p180
    %p187 = scmp.eq.s32.totalorder %s14, 1
    %p188 = por %p186, %p187
    %p189 = scmp.ne.s32.totalorder %s181, %s184
    %p190 = scmp.eq.s32.totalorder %s14, 0
    %p191 = por %p189, %p190
    %p192 = scmp.ne.s32.totalorder %s181, %s184
    %p193 = scmp.eq.s32.totalorder %s19, 1
    %p194 = por %p192, %p193
    %p195 = scmp.ne.s32.totalorder %s184, %s185
    %p196 = scmp.eq.s32.totalorder %s19, 0
    %p197 = por %p195, %p196
    %p198 = scmp.ne.s32.totalorder %s184, %s185
    %p199 = scmp.eq.s32.totalorder %s20, 1
    %p200 = por %p198, %p199
    %p202 = scmp.ne.s32.totalorder %s185, %s201
    %p203 = scmp.eq.s32.totalorder %s20, 0
    %p204 = por %p202, %p203
    %p205 = scmp.le.s32.totalorder 1, %s14
    %p206 = scmp.lt.s32.totalorder %s14, 3
    %p207 = pnand %p205, %p206
    %p208 = pneg %p207
    // Predicated region
    $region9: #{gen_block_forward.4} parent=5 // pred_check
      _
    $region10: #{gen_block_forward.4} parent=5 // pred_check_branch
      %210 = sbr.rel (%p207) target = $region12
    $region11: #{gen_block_forward.4} parent=5 // pred_region
      %s211 = ssub.s32 %s14, 1
      // Predicated region
      $region13: #{gen_block_forward.4} parent=11 // pred_check
        %p212 = pneg %p61
      $region14: #{gen_block_forward.4} parent=11 // pred_check_branch
        %214 = sbr.rel (%p212) target = $region16
      $region15: #{gen_block_forward.4} parent=11 // pred_region
        _
      $region16: #{gen_block_forward.4} parent=11 // pred_fallthru
        _
      // Predicated region
      $region17: #{gen_block_forward.4} parent=11 // pred_check
        %p215 = pneg %p82
      $region18: #{gen_block_forward.4} parent=11 // pred_check_branch
        %217 = sbr.rel (%p215) target = $region20
      $region19: #{gen_block_forward.4} parent=11 // pred_region
        _
      $region20: #{gen_block_forward.4} parent=11 // pred_fallthru
        _
      // Predicated region
      $region21: #{gen_block_forward.4} parent=11 // pred_check
        %p218 = pneg %p103
      $region22: #{gen_block_forward.4} parent=11 // pred_check_branch
        %220 = sbr.rel (%p218) target = $region24
      $region23: #{gen_block_forward.4} parent=11 // pred_region
        _
      $region24: #{gen_block_forward.4} parent=11 // pred_fallthru
        _
      // Predicated region
      $region25: #{gen_block_forward.4} parent=11 // pred_check
        %p221 = pneg %p124
      $region26: #{gen_block_forward.4} parent=11 // pred_check_branch
        %223 = sbr.rel (%p221) target = $region28
      $region27: #{gen_block_forward.4} parent=11 // pred_region
        _
      $region28: #{gen_block_forward.4} parent=11 // pred_fallthru
        _
      // Predicated region
      $region29: #{gen_block_forward.4} parent=11 // pred_check
        %p224 = pneg %p145
      $region30: #{gen_block_forward.4} parent=11 // pred_check_branch
        %226 = sbr.rel (%p224) target = $region32
      $region31: #{gen_block_forward.4} parent=11 // pred_region
        _
      $region32: #{gen_block_forward.4} parent=11 // pred_fallthru
        _
    $region12: #{gen_block_forward.4} parent=5 // pred_fallthru
      _
    %p227 = scmp.lt.s32.totalorder %s14, 2
    // Predicated region
    $region33: #{gen_block_forward.4} parent=5 // pred_check
      %p228 = pneg %p227
    $region34: #{gen_block_forward.4} parent=5 // pred_check_branch
      %230 = sbr.rel (%p228) target = $region36
    $region35: #{gen_block_forward.4} parent=5 // pred_region
      // Predicated region
      $region37: #{gen_block_forward.4} parent=35 // pred_check
        %p231 = pneg %p34
      $region38: #{gen_block_forward.4} parent=35 // pred_check_branch
        %233 = sbr.rel (%p231) target = $region40
      $region39: #{gen_block_forward.4} parent=35 // pred_region
        %p234 = scmp.lt.s32.totalorder %s14, 1
        %s235 = scalar_select %p234, %s14, 1
        %s236 = smul.addr %s235, 4
        %s237 = smul.addr %s236, 8
        %s238 = scalar_lea.vmem %s0, %s237
      $region40: #{gen_block_forward.4} parent=35 // pred_fallthru
        _
    $region36: #{gen_block_forward.4} parent=5 // pred_fallthru
      _
    %p239 = scmp.le.s32.totalorder 1, %s14
    %p240 = scmp.lt.s32.totalorder %s14, 3
    %p241 = pnand %p239, %p240
    %p242 = pneg %p241
    // Predicated region
    $region41: #{gen_block_forward.4} parent=5 // pred_check
      _
    $region42: #{gen_block_forward.4} parent=5 // pred_check_branch
      %244 = sbr.rel (%p241) target = $region44
    $region43: #{gen_block_forward.4} parent=5 // pred_region
      %s245 = ssub.s32 %s14, 1
      %p246 = scmp.lt.s32.totalorder %s19, 1
      %s247 = scalar_select %p246, %s19, 1
      %s248 = smul.addr %s247, 4
      %s249 = smul.addr %s248, 8
      %s250 = scalar_lea.vmem %s0, %s249
      %p251 = pneg %p40
      %p252 = pneg %p37
      %p253 = pneg %p61
      %p254 = pneg %p58
      %p255 = pneg %p82
      %p256 = pneg %p79
      %p257 = pneg %p103
      %p258 = pneg %p100
      %p259 = pneg %p124
      %p260 = pneg %p121
      %p261 = pneg %p145
      %p262 = pneg %p142
      %p263 = pneg %p171
      %p264 = pneg %p168
      %p265 = scmp.lt.s32.totalorder %s19, 1
      %s266 = scalar_select %p265, %s19, 1
      %s267 = smul.addr %s266, 4
      %s268 = smul.addr %s267, 4
      %s269 = scalar_lea.vmem %s6, %s268
      %p270 = pneg %p197
      %p271 = pneg %p194
      %p272 = scmp.lt.s32.totalorder %s19, 1
      %s273 = scalar_select %p272, %s19, 1
      %s274 = smul.addr %s273, 2
      %s275 = smul.addr %s274, 8
      %s276 = scalar_lea.vmem %s7, %s275
      %p277 = scmp.lt.s32.totalorder %s19, 1
      %s278 = scalar_select %p277, %s19, 1
      %s279 = smul.addr %s278, 4
      %s280 = smul.addr %s279, 8
      %s281 = scalar_lea.vmem %s0, %s280
      %p282 = scmp.lt.s32.totalorder %s19, 1
      %s283 = scalar_select %p282, %s19, 1
      %s284 = smul.addr %s283, 4
      %s285 = smul.addr %s284, 4
      %s286 = scalar_lea.vmem %s6, %s285
      %p287 = scmp.lt.s32.totalorder %s19, 1
      %s288 = scalar_select %p287, %s19, 1
      %s289 = smul.addr %s288, 2
      %s290 = smul.addr %s289, 8
      %s291 = scalar_lea.vmem %s7, %s290
      %v293 = vld [vmem:[%s281] sm:$0xff]
      %v294 = vld [vmem:[%s281 + $0x8] sm:$0xff]
      %v295 = vld [vmem:[%s281 + $0x10] sm:$0xff]
      %v296 = vld [vmem:[%s281 + $0x18] sm:$0xff]
      %v297 = vld [vmem:[%s2] sm:$0xff]
      %v298 = vld [vmem:[%s2 + $0x8] sm:$0xff]
      %300 = vset.pattern.permute.xlu0 0
      %301 = vperm.xlu0 %300, %v297
      %v302 = vpop.permute.xlu0 %301
      %305 = vset.pattern.permute.xlu0 0
      %306 = vperm.xlu0 %305, %v298
      %v307 = vpop.permute.xlu0 %306
      %v309 = vmul.f32 %v293, %v302
      %v310 = vmul.f32 %v294, %v302
      %v311 = vmul.f32 %v295, %v307
      %v312 = vmul.f32 %v296, %v307
      %v313 = vld [vmem:[%s3] sm:$0xff]
      %v314 = vld [vmem:[%s3 + $0x8] sm:$0xff]
      %316 = vset.pattern.permute.xlu0 0
      %317 = vperm.xlu0 %316, %v313
      %v318 = vpop.permute.xlu0 %317
      %321 = vset.pattern.permute.xlu0 0
      %322 = vperm.xlu0 %321, %v314
      %v323 = vpop.permute.xlu0 %322
      %v325 = vadd.f32 %v309, %v318
      %v326 = vadd.f32 %v310, %v318
      %v327 = vadd.f32 %v311, %v323
      %v328 = vadd.f32 %v312, %v323
      %v329 = vmax.f32 %v325, 0.0
      %v330 = vmax.f32 %v326, 0.0
      %v331 = vmax.f32 %v327, 0.0
      %v332 = vmax.f32 %v328, 0.0
      %333 = vrot.lane.b32.xlu0 %v329, 17
      %v334 = vpop.permute.xlu0 %333
      %335 = vrot.lane.b32.xlu0 %v331, 17
      %v336 = vpop.permute.xlu0 %335
      %337 = vrot.lane.b32.xlu0 %v330, 17
      %v338 = vpop.permute.xlu0 %337
      %339 = vrot.lane.b32.xlu0 %v332, 17
      %v340 = vpop.permute.xlu0 %339
      %v341 = vlaneseq
      %v342 = vand.u32 %v341, 127
      %vm343 = vcmp.lt.s32.totalorder %v342, 17
      %v344 = vsel %vm343, %v334, %v338
      %v345 = vsel %vm343, %v336, %v340
      %v346 = vsel %vm343, %v338, %v334
      %v347 = vsel %vm343, %v340, %v336
      %v348 = vld [vmem:[%s1] sm:$0x3]
      %v350 = vlaneseq
      %v351 = vshrl.u32 %v350, 7
      %v352 = vsub.s32 0, %v351
      %v353 = vrot.slane %v348, %v352
      %v354 = vlaneseq
      %v355 = vshrl.u32 %v354, 7
      %v356 = vsub.s32 1, %v355
      %v357 = vrot.slane %v348, %v356
      %v360 = vmul.f32 %v346, %v353
      %v361 = vmul.f32 %v344, %v357
      %v362 = vmul.f32 %v347, %v353
      %v363 = vmul.f32 %v345, %v357
      %v364 = vld [vmem:[%s4] sm:$0xf]
      %v365 = vld [vmem:[%s4 + $0x4] sm:$0xf]
      %v366 = vpack.c.bf16 %v362, %v360
      %v367 = vpack.c.bf16 %v363, %v361
      %368 = vrot.lane.b32.xlu0 %v329, 16
      %v369 = vpop.permute.xlu0 %368
      %370 = vrot.lane.b32.xlu0 %v331, 16
      %v371 = vpop.permute.xlu0 %370
      %372 = vrot.lane.b32.xlu0 %v330, 16
      %v373 = vpop.permute.xlu0 %372
      %374 = vrot.lane.b32.xlu0 %v332, 16
      %v375 = vpop.permute.xlu0 %374
      %vm376 = vcmp.lt.s32.totalorder %v342, 16
      %v377 = vsel %vm376, %v369, %v373
      %v378 = vsel %vm376, %v371, %v375
      %v379 = vsel %vm376, %v373, %v369
      %v380 = vsel %vm376, %v375, %v371
      %s381 = scalar_lea.vmem %s1, 2
      %v382 = vld [vmem:[%s381] sm:$0x3]
      %v384 = vlaneseq
      %v385 = vshrl.u32 %v384, 7
      %v386 = vsub.s32 0, %v385
      %v387 = vrot.slane %v382, %v386
      %v388 = vlaneseq
      %v389 = vshrl.u32 %v388, 7
      %v390 = vsub.s32 1, %v389
      %v391 = vrot.slane %v382, %v390
      %v394 = vmul.f32 %v379, %v387
      %v395 = vmul.f32 %v377, %v391
      %v396 = vmul.f32 %v380, %v387
      %v397 = vmul.f32 %v378, %v391
      %s398 = scalar_lea.vmem %s4, 8
      %v399 = vld [vmem:[%s398] sm:$0xf]
      %v400 = vld [vmem:[%s398 + $0x4] sm:$0xf]
      %v401 = vpack.c.bf16 %v396, %v394
      %v402 = vpack.c.bf16 %v397, %v395
      %v405 = vunpack.c.l.b16 %v399
      %v406 = vunpack.c.l.b16 %v400
      %v407 = vpack.c.b16 %v406, %v405
      %vm408 = vcmask 130048
      %v410 = vsel %vm408, %v407, 0
      %412 = vmatprep.subr.bf16.mxu0 %v402
      %413 = vmatpush1.bf16.msra.mxu0 %v401
      %414 = vmatprep.subr.bf16.mxu0 0
      %415 = vmatpush1.bf16.msra.mxu0 0
      %416 = vmatprep.subr.bf16.mxu0 0
      %417 = vmatpush1.bf16.msra.mxu0 0
      %418 = vmatprep.subr.bf16.mxu0 0
      %419 = vmatpush1.bf16.msra.mxu0 0
      %420 = vmatprep.subr.bf16.mxu0 0
      %421 = vmatpush1.bf16.msra.mxu0 0
      %422 = vmatprep.subr.bf16.mxu0 0
      %423 = vmatpush1.bf16.msra.mxu0 0
      %424 = vmatprep.subr.bf16.mxu0 0
      %425 = vmatpush1.bf16.msra.mxu0 0
      %426 = vmatprep.subr.bf16.mxu0 0
      %427 = vmatpush1.bf16.msra.mxu0 0
      %428 = vmatprep.subr.bf16.mxu0 0
      %429 = vmatpush1.bf16.msra.mxu0 0
      %430 = vmatprep.subr.bf16.mxu0 0
      %431 = vmatpush1.bf16.msra.mxu0 0
      %432 = vmatprep.subr.bf16.mxu0 0
      %433 = vmatpush1.bf16.msra.mxu0 0
      %434 = vmatprep.subr.bf16.mxu0 0
      %435 = vmatpush1.bf16.msra.mxu0 0
      %436 = vmatprep.subr.bf16.mxu0 0
      %437 = vmatpush1.bf16.msra.mxu0 0
      %438 = vmatprep.subr.bf16.mxu0 0
      %439 = vmatpush1.bf16.msra.mxu0 0
      %440 = vmatprep.subr.bf16.mxu0 0
      %441 = vmatpush1.bf16.msra.mxu0 0
      %442 = vmatprep.subr.bf16.mxu0 0
      %443 = vmatpush1.bf16.msra.mxu0 0
      %444 = vmatprep.mubr.bf16.mxu0 0
      %445 = vmatmul.mubr.bf16.gmra.mrb[0].mxu0 %v410
      %v446 = vpop.f32.mrb[0].mxu0
      %v447 = vadd.f32 0.0, %v446
      %v448 = vpop.f32.mrb[0].mxu0
      %v449 = vadd.f32 0.0, %v448
      %v450 = vpop.f32.mrb[0].mxu0
      %v451 = vadd.f32 0.0, %v450
      %v452 = vpop.f32.mrb[0].mxu0
      %v453 = vadd.f32 0.0, %v452
      %454 = vdwg.mxu0
      %v457 = vunpack.c.l.b16 %v364
      %v458 = vunpack.c.l.b16 %v365
      %v459 = vpack.c.b16 %v458, %v457
      %v461 = vsel %vm408, %v459, 0
      %463 = vmatprep.subr.bf16.mxu0 %v367
      %464 = vmatpush1.bf16.msra.mxu0 %v366
      %465 = vmatprep.subr.bf16.mxu0 0
      %466 = vmatpush1.bf16.msra.mxu0 0
      %467 = vmatprep.subr.bf16.mxu0 0
      %468 = vmatpush1.bf16.msra.mxu0 0
      %469 = vmatprep.subr.bf16.mxu0 0
      %470 = vmatpush1.bf16.msra.mxu0 0
      %471 = vmatprep.subr.bf16.mxu0 0
      %472 = vmatpush1.bf16.msra.mxu0 0
      %473 = vmatprep.subr.bf16.mxu0 0
      %474 = vmatpush1.bf16.msra.mxu0 0
      %475 = vmatprep.subr.bf16.mxu0 0
      %476 = vmatpush1.bf16.msra.mxu0 0
      %477 = vmatprep.subr.bf16.mxu0 0
      %478 = vmatpush1.bf16.msra.mxu0 0
      %479 = vmatprep.subr.bf16.mxu0 0
      %480 = vmatpush1.bf16.msra.mxu0 0
      %481 = vmatprep.subr.bf16.mxu0 0
      %482 = vmatpush1.bf16.msra.mxu0 0
      %483 = vmatprep.subr.bf16.mxu0 0
      %484 = vmatpush1.bf16.msra.mxu0 0
      %485 = vmatprep.subr.bf16.mxu0 0
      %486 = vmatpush1.bf16.msra.mxu0 0
      %487 = vmatprep.subr.bf16.mxu0 0
      %488 = vmatpush1.bf16.msra.mxu0 0
      %489 = vmatprep.subr.bf16.mxu0 0
      %490 = vmatpush1.bf16.msra.mxu0 0
      %491 = vmatprep.subr.bf16.mxu0 0
      %492 = vmatpush1.bf16.msra.mxu0 0
      %493 = vmatprep.subr.bf16.mxu0 0
      %494 = vmatpush1.bf16.msra.mxu0 0
      %495 = vmatprep.mubr.bf16.mxu0 0
      %496 = vmatmul.mubr.bf16.gmra.mrb[0].mxu0 %v461
      %v497 = vpop.f32.mrb[0].mxu0
      %v498 = vadd.f32 %v447, %v497
      %v499 = vpop.f32.mrb[0].mxu0
      %v500 = vadd.f32 %v449, %v499
      %v501 = vpop.f32.mrb[0].mxu0
      %v502 = vadd.f32 %v451, %v501
      %v503 = vpop.f32.mrb[0].mxu0
      %v504 = vadd.f32 %v453, %v503
      %505 = vdwg.mxu0
      %506 = vrot.lane.b32.xlu0 %v329, 15
      %v507 = vpop.permute.xlu0 %506
      %508 = vrot.lane.b32.xlu0 %v331, 15
      %v509 = vpop.permute.xlu0 %508
      %510 = vrot.lane.b32.xlu0 %v330, 15
      %v511 = vpop.permute.xlu0 %510
      %512 = vrot.lane.b32.xlu0 %v332, 15
      %v513 = vpop.permute.xlu0 %512
      %vm514 = vcmp.lt.s32.totalorder %v342, 15
      %v515 = vsel %vm514, %v507, %v511
      %v516 = vsel %vm514, %v509, %v513
      %v517 = vsel %vm514, %v511, %v507
      %v518 = vsel %vm514, %v513, %v509
      %s519 = scalar_lea.vmem %s1, 4
      %v520 = vld [vmem:[%s519] sm:$0x3]
      %v522 = vlaneseq
      %v523 = vshrl.u32 %v522, 7
      %v524 = vsub.s32 0, %v523
      %v525 = vrot.slane %v520, %v524
      %v526 = vlaneseq
      %v527 = vshrl.u32 %v526, 7
      %v528 = vsub.s32 1, %v527
      %v529 = vrot.slane %v520, %v528
      %v532 = vmul.f32 %v517, %v525
      %v533 = vmul.f32 %v515, %v529
      %v534 = vmul.f32 %v518, %v525
      %v535 = vmul.f32 %v516, %v529
      %s536 = scalar_lea.vmem %s4, 16
      %v537 = vld [vmem:[%s536] sm:$0xf]
      %v538 = vld [vmem:[%s536 + $0x4] sm:$0xf]
      %v539 = vpack.c.bf16 %v534, %v532
      %v540 = vpack.c.bf16 %v535, %v533
      %v543 = vunpack.c.l.b16 %v537
      %v544 = vunpack.c.l.b16 %v538
      %v545 = vpack.c.b16 %v544, %v543
      %v547 = vsel %vm408, %v545, 0
      %549 = vmatprep.subr.bf16.mxu0 %v540
      %550 = vmatpush1.bf16.msra.mxu0 %v539
      %551 = vmatprep.subr.bf16.mxu0 0
      %552 = vmatpush1.bf16.msra.mxu0 0
      %553 = vmatprep.subr.bf16.mxu0 0
      %554 = vmatpush1.bf16.msra.mxu0 0
      %555 = vmatprep.subr.bf16.mxu0 0
      %556 = vmatpush1.bf16.msra.mxu0 0
      %557 = vmatprep.subr.bf16.mxu0 0
      %558 = vmatpush1.bf16.msra.mxu0 0
      %559 = vmatprep.subr.bf16.mxu0 0
      %560 = vmatpush1.bf16.msra.mxu0 0
      %561 = vmatprep.subr.bf16.mxu0 0
      %562 = vmatpush1.bf16.msra.mxu0 0
      %563 = vmatprep.subr.bf16.mxu0 0
      %564 = vmatpush1.bf16.msra.mxu0 0
      %565 = vmatprep.subr.bf16.mxu0 0
      %566 = vmatpush1.bf16.msra.mxu0 0
      %567 = vmatprep.subr.bf16.mxu0 0
      %568 = vmatpush1.bf16.msra.mxu0 0
      %569 = vmatprep.subr.bf16.mxu0 0
      %570 = vmatpush1.bf16.msra.mxu0 0
      %571 = vmatprep.subr.bf16.mxu0 0
      %572 = vmatpush1.bf16.msra.mxu0 0
      %573 = vmatprep.subr.bf16.mxu0 0
      %574 = vmatpush1.bf16.msra.mxu0 0
      %575 = vmatprep.subr.bf16.mxu0 0
      %576 = vmatpush1.bf16.msra.mxu0 0
      %577 = vmatprep.subr.bf16.mxu0 0
      %578 = vmatpush1.bf16.msra.mxu0 0
      %579 = vmatprep.subr.bf16.mxu0 0
      %580 = vmatpush1.bf16.msra.mxu0 0
      %581 = vmatprep.mubr.bf16.mxu0 0
      %582 = vmatmul.mubr.bf16.gmra.mrb[0].mxu0 %v547
      %v583 = vpop.f32.mrb[0].mxu0
      %v584 = vadd.f32 0.0, %v583
      %v585 = vpop.f32.mrb[0].mxu0
      %v586 = vadd.f32 0.0, %v585
      %v587 = vpop.f32.mrb[0].mxu0
      %v588 = vadd.f32 0.0, %v587
      %v589 = vpop.f32.mrb[0].mxu0
      %v590 = vadd.f32 0.0, %v589
      %591 = vdwg.mxu0
      %v592 = vadd.f32 %v498, %v584
      %v593 = vadd.f32 %v500, %v586
      %v594 = vadd.f32 %v502, %v588
      %v595 = vadd.f32 %v504, %v590
      %596 = vrot.lane.b32.xlu0 %v329, 1
      %v597 = vpop.permute.xlu0 %596
      %598 = vrot.lane.b32.xlu0 %v331, 1
      %v599 = vpop.permute.xlu0 %598
      %600 = vrot.lane.b32.xlu0 %v330, 1
      %v601 = vpop.permute.xlu0 %600
      %602 = vrot.lane.b32.xlu0 %v332, 1
      %v603 = vpop.permute.xlu0 %602
      %vm604 = vcmp.lt.s32.totalorder %v342, 1
      %v605 = vsel %vm604, %v597, %v601
      %v606 = vsel %vm604, %v599, %v603
      %v607 = vsel %vm604, %v601, %v597
      %v608 = vsel %vm604, %v603, %v599
      %s609 = scalar_lea.vmem %s1, 6
      %v610 = vld [vmem:[%s609] sm:$0x3]
      %v612 = vlaneseq
      %v613 = vshrl.u32 %v612, 7
      %v614 = vsub.s32 0, %v613
      %v615 = vrot.slane %v610, %v614
      %v616 = vlaneseq
      %v617 = vshrl.u32 %v616, 7
      %v618 = vsub.s32 1, %v617
      %v619 = vrot.slane %v610, %v618
      %v622 = vmul.f32 %v607, %v615
      %v623 = vmul.f32 %v605, %v619
      %v624 = vmul.f32 %v608, %v615
      %v625 = vmul.f32 %v606, %v619
      %s626 = scalar_lea.vmem %s4, 24
      %v627 = vld [vmem:[%s626] sm:$0xf]
      %v628 = vld [vmem:[%s626 + $0x4] sm:$0xf]
      %v629 = vpack.c.bf16 %v624, %v622
      %v630 = vpack.c.bf16 %v625, %v623
      %v633 = vunpack.c.l.b16 %v627
      %v634 = vunpack.c.l.b16 %v628
      %v635 = vpack.c.b16 %v634, %v633
      %v637 = vsel %vm408, %v635, 0
      %639 = vmatprep.subr.bf16.mxu0 %v630
      %640 = vmatpush1.bf16.msra.mxu0 %v629
      %641 = vmatprep.subr.bf16.mxu0 0
      %642 = vmatpush1.bf16.msra.mxu0 0
      %643 = vmatprep.subr.bf16.mxu0 0
      %644 = vmatpush1.bf16.msra.mxu0 0
      %645 = vmatprep.subr.bf16.mxu0 0
      %646 = vmatpush1.bf16.msra.mxu0 0
      %647 = vmatprep.subr.bf16.mxu0 0
      %648 = vmatpush1.bf16.msra.mxu0 0
      %649 = vmatprep.subr.bf16.mxu0 0
      %650 = vmatpush1.bf16.msra.mxu0 0
      %651 = vmatprep.subr.bf16.mxu0 0
      %652 = vmatpush1.bf16.msra.mxu0 0
      %653 = vmatprep.subr.bf16.mxu0 0
      %654 = vmatpush1.bf16.msra.mxu0 0
      %655 = vmatprep.subr.bf16.mxu0 0
      %656 = vmatpush1.bf16.msra.mxu0 0
      %657 = vmatprep.subr.bf16.mxu0 0
      %658 = vmatpush1.bf16.msra.mxu0 0
      %659 = vmatprep.subr.bf16.mxu0 0
      %660 = vmatpush1.bf16.msra.mxu0 0
      %661 = vmatprep.subr.bf16.mxu0 0
      %662 = vmatpush1.bf16.msra.mxu0 0
      %663 = vmatprep.subr.bf16.mxu0 0
      %664 = vmatpush1.bf16.msra.mxu0 0
      %665 = vmatprep.subr.bf16.mxu0 0
      %666 = vmatpush1.bf16.msra.mxu0 0
      %667 = vmatprep.subr.bf16.mxu0 0
      %668 = vmatpush1.bf16.msra.mxu0 0
      %669 = vmatprep.subr.bf16.mxu0 0
      %670 = vmatpush1.bf16.msra.mxu0 0
      %671 = vmatprep.mubr.bf16.mxu0 0
      %672 = vmatmul.mubr.bf16.gmra.mrb[0].mxu0 %v637
      %v673 = vpop.f32.mrb[0].mxu0
      %v674 = vadd.f32 0.0, %v673
      %v675 = vpop.f32.mrb[0].mxu0
      %v676 = vadd.f32 0.0, %v675
      %v677 = vpop.f32.mrb[0].mxu0
      %v678 = vadd.f32 0.0, %v677
      %v679 = vpop.f32.mrb[0].mxu0
      %v680 = vadd.f32 0.0, %v679
      %681 = vdwg.mxu0
      %v682 = vadd.f32 %v592, %v674
      %v683 = vadd.f32 %v593, %v676
      %v684 = vadd.f32 %v594, %v678
      %v685 = vadd.f32 %v595, %v680
      %s686 = scalar_lea.vmem %s4, 32
      %v687 = vld [vmem:[%s686] sm:$0xf]
      %v688 = vld [vmem:[%s686 + $0x4] sm:$0xf]
      %v689 = vpack.c.bf16 %v331, %v329
      %v690 = vpack.c.bf16 %v332, %v330
      %v693 = vunpack.c.l.b16 %v687
      %v694 = vunpack.c.l.b16 %v688
      %v695 = vpack.c.b16 %v694, %v693
      %v697 = vsel %vm408, %v695, 0
      %699 = vmatprep.subr.bf16.mxu0 %v690
      %700 = vmatpush1.bf16.msra.mxu0 %v689
      %701 = vmatprep.subr.bf16.mxu0 0
      %702 = vmatpush1.bf16.msra.mxu0 0
      %703 = vmatprep.subr.bf16.mxu0 0
      %704 = vmatpush1.bf16.msra.mxu0 0
      %705 = vmatprep.subr.bf16.mxu0 0
      %706 = vmatpush1.bf16.msra.mxu0 0
      %707 = vmatprep.subr.bf16.mxu0 0
      %708 = vmatpush1.bf16.msra.mxu0 0
      %709 = vmatprep.subr.bf16.mxu0 0
      %710 = vmatpush1.bf16.msra.mxu0 0
      %711 = vmatprep.subr.bf16.mxu0 0
      %712 = vmatpush1.bf16.msra.mxu0 0
      %713 = vmatprep.subr.bf16.mxu0 0
      %714 = vmatpush1.bf16.msra.mxu0 0
      %715 = vmatprep.subr.bf16.mxu0 0
      %716 = vmatpush1.bf16.msra.mxu0 0
      %717 = vmatprep.subr.bf16.mxu0 0
      %718 = vmatpush1.bf16.msra.mxu0 0
      %719 = vmatprep.subr.bf16.mxu0 0
      %720 = vmatpush1.bf16.msra.mxu0 0
      %721 = vmatprep.subr.bf16.mxu0 0
      %722 = vmatpush1.bf16.msra.mxu0 0
      %723 = vmatprep.subr.bf16.mxu0 0
      %724 = vmatpush1.bf16.msra.mxu0 0
      %725 = vmatprep.subr.bf16.mxu0 0
      %726 = vmatpush1.bf16.msra.mxu0 0
      %727 = vmatprep.subr.bf16.mxu0 0
      %728 = vmatpush1.bf16.msra.mxu0 0
      %729 = vmatprep.subr.bf16.mxu0 0
      %730 = vmatpush1.bf16.msra.mxu0 0
      %731 = vmatprep.mubr.bf16.mxu0 0
      %732 = vmatmul.mubr.bf16.gmra.mrb[0].mxu0 %v697
      %v733 = vpop.f32.mrb[0].mxu0
      %v734 = vadd.f32 0.0, %v733
      %v735 = vpop.f32.mrb[0].mxu0
      %v736 = vadd.f32 0.0, %v735
      %v737 = vpop.f32.mrb[0].mxu0
      %v738 = vadd.f32 0.0, %v737
      %v739 = vpop.f32.mrb[0].mxu0
      %v740 = vadd.f32 0.0, %v739
      %741 = vdwg.mxu0
      %v742 = vadd.f32 %v682, %v734
      %v743 = vadd.f32 %v683, %v736
      %v744 = vadd.f32 %v684, %v738
      %v745 = vadd.f32 %v685, %v740
      %746 = vrot.lane.b32.xlu0 %v329, 127
      %v747 = vpop.permute.xlu0 %746
      %748 = vrot.lane.b32.xlu0 %v331, 127
      %v749 = vpop.permute.xlu0 %748
      %750 = vrot.lane.b32.xlu0 %v330, 127
      %v751 = vpop.permute.xlu0 %750
      %752 = vrot.lane.b32.xlu0 %v332, 127
      %v753 = vpop.permute.xlu0 %752
      %vm754 = vcmp.lt.s32.totalorder %v342, 127
      %v755 = vsel %vm754, %v747, %v751
      %v756 = vsel %vm754, %v749, %v753
      %v757 = vsel %vm754, %v751, %v747
      %v758 = vsel %vm754, %v753, %v749
      %s759 = scalar_lea.vmem %s1, 10
      %v760 = vld [vmem:[%s759] sm:$0x3]
      %v762 = vlaneseq
      %v763 = vshrl.u32 %v762, 7
      %v764 = vsub.s32 0, %v763
      %v765 = vrot.slane %v760, %v764
      %v766 = vlaneseq
      %v767 = vshrl.u32 %v766, 7
      %v768 = vsub.s32 1, %v767
      %v769 = vrot.slane %v760, %v768
      %v772 = vmul.f32 %v755, %v765
      %v773 = vmul.f32 %v757, %v769
      %v774 = vmul.f32 %v756, %v765
      %v775 = vmul.f32 %v758, %v769
      %s776 = scalar_lea.vmem %s4, 40
      %v777 = vld [vmem:[%s776] sm:$0xf]
      %v778 = vld [vmem:[%s776 + $0x4] sm:$0xf]
      %v779 = vpack.c.bf16 %v774, %v772
      %v780 = vpack.c.bf16 %v775, %v773
      %v783 = vunpack.c.l.b16 %v777
      %v784 = vunpack.c.l.b16 %v778
      %v785 = vpack.c.b16 %v784, %v783
      %v787 = vsel %vm408, %v785, 0
      %789 = vmatprep.subr.bf16.mxu0 %v780
      %790 = vmatpush1.bf16.msra.mxu0 %v779
      %791 = vmatprep.subr.bf16.mxu0 0
      %792 = vmatpush1.bf16.msra.mxu0 0
      %793 = vmatprep.subr.bf16.mxu0 0
      %794 = vmatpush1.bf16.msra.mxu0 0
      %795 = vmatprep.subr.bf16.mxu0 0
      %796 = vmatpush1.bf16.msra.mxu0 0
      %797 = vmatprep.subr.bf16.mxu0 0
      %798 = vmatpush1.bf16.msra.mxu0 0
      %799 = vmatprep.subr.bf16.mxu0 0
      %800 = vmatpush1.bf16.msra.mxu0 0
      %801 = vmatprep.subr.bf16.mxu0 0
      %802 = vmatpush1.bf16.msra.mxu0 0
      %803 = vmatprep.subr.bf16.mxu0 0
      %804 = vmatpush1.bf16.msra.mxu0 0
      %805 = vmatprep.subr.bf16.mxu0 0
      %806 = vmatpush1.bf16.msra.mxu0 0
      %807 = vmatprep.subr.bf16.mxu0 0
      %808 = vmatpush1.bf16.msra.mxu0 0
      %809 = vmatprep.subr.bf16.mxu0 0
      %810 = vmatpush1.bf16.msra.mxu0 0
      %811 = vmatprep.subr.bf16.mxu0 0
      %812 = vmatpush1.bf16.msra.mxu0 0
      %813 = vmatprep.subr.bf16.mxu0 0
      %814 = vmatpush1.bf16.msra.mxu0 0
      %815 = vmatprep.subr.bf16.mxu0 0
      %816 = vmatpush1.bf16.msra.mxu0 0
      %817 = vmatprep.subr.bf16.mxu0 0
      %818 = vmatpush1.bf16.msra.mxu0 0
      %819 = vmatprep.subr.bf16.mxu0 0
      %820 = vmatpush1.bf16.msra.mxu0 0
      %821 = vmatprep.mubr.bf16.mxu0 0
      %822 = vmatmul.mubr.bf16.gmra.mrb[0].mxu0 %v787
      %v823 = vpop.f32.mrb[0].mxu0
      %v824 = vadd.f32 0.0, %v823
      %v825 = vpop.f32.mrb[0].mxu0
      %v826 = vadd.f32 0.0, %v825
      %v827 = vpop.f32.mrb[0].mxu0
      %v828 = vadd.f32 0.0, %v827
      %v829 = vpop.f32.mrb[0].mxu0
      %v830 = vadd.f32 0.0, %v829
      %831 = vdwg.mxu0
      %v832 = vadd.f32 %v742, %v824
      %v833 = vadd.f32 %v743, %v826
      %v834 = vadd.f32 %v744, %v828
      %v835 = vadd.f32 %v745, %v830
      %836 = vrot.lane.b32.xlu0 %v329, 113
      %v837 = vpop.permute.xlu0 %836
      %838 = vrot.lane.b32.xlu0 %v331, 113
      %v839 = vpop.permute.xlu0 %838
      %840 = vrot.lane.b32.xlu0 %v330, 113
      %v841 = vpop.permute.xlu0 %840
      %842 = vrot.lane.b32.xlu0 %v332, 113
      %v843 = vpop.permute.xlu0 %842
      %vm844 = vcmp.lt.s32.totalorder %v342, 113
      %v845 = vsel %vm844, %v837, %v841
      %v846 = vsel %vm844, %v839, %v843
      %v847 = vsel %vm844, %v841, %v837
      %v848 = vsel %vm844, %v843, %v839
      %s849 = scalar_lea.vmem %s1, 12
      %v850 = vld [vmem:[%s849] sm:$0x3]
      %v852 = vlaneseq
      %v853 = vshrl.u32 %v852, 7
      %v854 = vsub.s32 0, %v853
      %v855 = vrot.slane %v850, %v854
      %v856 = vlaneseq
      %v857 = vshrl.u32 %v856, 7
      %v858 = vsub.s32 1, %v857
      %v859 = vrot.slane %v850, %v858
      %v862 = vmul.f32 %v845, %v855
      %v863 = vmul.f32 %v847, %v859
      %v864 = vmul.f32 %v846, %v855
      %v865 = vmul.f32 %v848, %v859
      %s866 = scalar_lea.vmem %s4, 48
      %v867 = vld [vmem:[%s866] sm:$0xf]
      %v868 = vld [vmem:[%s866 + $0x4] sm:$0xf]
      %v869 = vpack.c.bf16 %v864, %v862
      %v870 = vpack.c.bf16 %v865, %v863
      %v873 = vunpack.c.l.b16 %v867
      %v874 = vunpack.c.l.b16 %v868
      %v875 = vpack.c.b16 %v874, %v873
      %v877 = vsel %vm408, %v875, 0
      %879 = vmatprep.subr.bf16.mxu0 %v870
      %880 = vmatpush1.bf16.msra.mxu0 %v869
      %881 = vmatprep.subr.bf16.mxu0 0
      %882 = vmatpush1.bf16.msra.mxu0 0
      %883 = vmatprep.subr.bf16.mxu0 0
      %884 = vmatpush1.bf16.msra.mxu0 0
      %885 = vmatprep.subr.bf16.mxu0 0
      %886 = vmatpush1.bf16.msra.mxu0 0
      %887 = vmatprep.subr.bf16.mxu0 0
      %888 = vmatpush1.bf16.msra.mxu0 0
      %889 = vmatprep.subr.bf16.mxu0 0
      %890 = vmatpush1.bf16.msra.mxu0 0
      %891 = vmatprep.subr.bf16.mxu0 0
      %892 = vmatpush1.bf16.msra.mxu0 0
      %893 = vmatprep.subr.bf16.mxu0 0
      %894 = vmatpush1.bf16.msra.mxu0 0
      %895 = vmatprep.subr.bf16.mxu0 0
      %896 = vmatpush1.bf16.msra.mxu0 0
      %897 = vmatprep.subr.bf16.mxu0 0
      %898 = vmatpush1.bf16.msra.mxu0 0
      %899 = vmatprep.subr.bf16.mxu0 0
      %900 = vmatpush1.bf16.msra.mxu0 0
      %901 = vmatprep.subr.bf16.mxu0 0
      %902 = vmatpush1.bf16.msra.mxu0 0
      %903 = vmatprep.subr.bf16.mxu0 0
      %904 = vmatpush1.bf16.msra.mxu0 0
      %905 = vmatprep.subr.bf16.mxu0 0
      %906 = vmatpush1.bf16.msra.mxu0 0
      %907 = vmatprep.subr.bf16.mxu0 0
      %908 = vmatpush1.bf16.msra.mxu0 0
      %909 = vmatprep.subr.bf16.mxu0 0
      %910 = vmatpush1.bf16.msra.mxu0 0
      %911 = vmatprep.mubr.bf16.mxu0 0
      %912 = vmatmul.mubr.bf16.gmra.mrb[0].mxu0 %v877
      %v913 = vpop.f32.mrb[0].mxu0
      %v914 = vadd.f32 0.0, %v913
      %v915 = vpop.f32.mrb[0].mxu0
      %v916 = vadd.f32 0.0, %v915
      %v917 = vpop.f32.mrb[0].mxu0
      %v918 = vadd.f32 0.0, %v917
      %v919 = vpop.f32.mrb[0].mxu0
      %v920 = vadd.f32 0.0, %v919
      %921 = vdwg.mxu0
      %v922 = vadd.f32 %v832, %v914
      %v923 = vadd.f32 %v833, %v916
      %v924 = vadd.f32 %v834, %v918
      %v925 = vadd.f32 %v835, %v920
      %926 = vrot.lane.b32.xlu0 %v329, 112
      %v927 = vpop.permute.xlu0 %926
      %928 = vrot.lane.b32.xlu0 %v331, 112
      %v929 = vpop.permute.xlu0 %928
      %930 = vrot.lane.b32.xlu0 %v330, 112
      %v931 = vpop.permute.xlu0 %930
      %932 = vrot.lane.b32.xlu0 %v332, 112
      %v933 = vpop.permute.xlu0 %932
      %vm934 = vcmp.lt.s32.totalorder %v342, 112
      %v935 = vsel %vm934, %v927, %v931
      %v936 = vsel %vm934, %v929, %v933
      %v937 = vsel %vm934, %v931, %v927
      %v938 = vsel %vm934, %v933, %v929
      %s939 = scalar_lea.vmem %s1, 14
      %v940 = vld [vmem:[%s939] sm:$0x3]
      %v942 = vlaneseq
      %v943 = vshrl.u32 %v942, 7
      %v944 = vsub.s32 0, %v943
      %v945 = vrot.slane %v940, %v944
      %v946 = vlaneseq
      %v947 = vshrl.u32 %v946, 7
      %v948 = vsub.s32 1, %v947
      %v949 = vrot.slane %v940, %v948
      %v952 = vmul.f32 %v935, %v945
      %v953 = vmul.f32 %v937, %v949
      %v954 = vmul.f32 %v936, %v945
      %v955 = vmul.f32 %v938, %v949
      %s956 = scalar_lea.vmem %s4, 56
      %v957 = vld [vmem:[%s956] sm:$0xf]
      %v958 = vld [vmem:[%s956 + $0x4] sm:$0xf]
      %v959 = vpack.c.bf16 %v954, %v952
      %v960 = vpack.c.bf16 %v955, %v953
      %v963 = vunpack.c.l.b16 %v957
      %v964 = vunpack.c.l.b16 %v958
      %v965 = vpack.c.b16 %v964, %v963
      %v967 = vsel %vm408, %v965, 0
      %969 = vmatprep.subr.bf16.mxu0 %v960
      %970 = vmatpush1.bf16.msra.mxu0 %v959
      %971 = vmatprep.subr.bf16.mxu0 0
      %972 = vmatpush1.bf16.msra.mxu0 0
      %973 = vmatprep.subr.bf16.mxu0 0
      %974 = vmatpush1.bf16.msra.mxu0 0
      %975 = vmatprep.subr.bf16.mxu0 0
      %976 = vmatpush1.bf16.msra.mxu0 0
      %977 = vmatprep.subr.bf16.mxu0 0
      %978 = vmatpush1.bf16.msra.mxu0 0
      %979 = vmatprep.subr.bf16.mxu0 0
      %980 = vmatpush1.bf16.msra.mxu0 0
      %981 = vmatprep.subr.bf16.mxu0 0
      %982 = vmatpush1.bf16.msra.mxu0 0
      %983 = vmatprep.subr.bf16.mxu0 0
      %984 = vmatpush1.bf16.msra.mxu0 0
      %985 = vmatprep.subr.bf16.mxu0 0
      %986 = vmatpush1.bf16.msra.mxu0 0
      %987 = vmatprep.subr.bf16.mxu0 0
      %988 = vmatpush1.bf16.msra.mxu0 0
      %989 = vmatprep.subr.bf16.mxu0 0
      %990 = vmatpush1.bf16.msra.mxu0 0
      %991 = vmatprep.subr.bf16.mxu0 0
      %992 = vmatpush1.bf16.msra.mxu0 0
      %993 = vmatprep.subr.bf16.mxu0 0
      %994 = vmatpush1.bf16.msra.mxu0 0
      %995 = vmatprep.subr.bf16.mxu0 0
      %996 = vmatpush1.bf16.msra.mxu0 0
      %997 = vmatprep.subr.bf16.mxu0 0
      %998 = vmatpush1.bf16.msra.mxu0 0
      %999 = vmatprep.subr.bf16.mxu0 0
      %1000 = vmatpush1.bf16.msra.mxu0 0
      %1001 = vmatprep.mubr.bf16.mxu0 0
      %1002 = vmatmul.mubr.bf16.gmra.mrb[0].mxu0 %v967
      %v1003 = vpop.f32.mrb[0].mxu0
      %v1004 = vadd.f32 0.0, %v1003
      %v1005 = vpop.f32.mrb[0].mxu0
      %v1006 = vadd.f32 0.0, %v1005
      %v1007 = vpop.f32.mrb[0].mxu0
      %v1008 = vadd.f32 0.0, %v1007
      %v1009 = vpop.f32.mrb[0].mxu0
      %v1010 = vadd.f32 0.0, %v1009
      %1011 = vdwg.mxu0
      %v1012 = vadd.f32 %v922, %v1004
      %v1013 = vadd.f32 %v923, %v1006
      %v1014 = vadd.f32 %v924, %v1008
      %v1015 = vadd.f32 %v925, %v1010
      %1016 = vrot.lane.b32.xlu0 %v329, 111
      %v1017 = vpop.permute.xlu0 %1016
      %1018 = vrot.lane.b32.xlu0 %v331, 111
      %v1019 = vpop.permute.xlu0 %1018
      %1020 = vrot.lane.b32.xlu0 %v330, 111
      %v1021 = vpop.permute.xlu0 %1020
      %1022 = vrot.lane.b32.xlu0 %v332, 111
      %v1023 = vpop.permute.xlu0 %1022
      %vm1024 = vcmp.lt.s32.totalorder %v342, 111
      %v1025 = vsel %vm1024, %v1017, %v1021
      %v1026 = vsel %vm1024, %v1019, %v1023
      %v1027 = vsel %vm1024, %v1021, %v1017
      %v1028 = vsel %vm1024, %v1023, %v1019
      %s1029 = scalar_lea.vmem %s1, 16
      %v1030 = vld [vmem:[%s1029] sm:$0x3]
      %v1032 = vlaneseq
      %v1033 = vshrl.u32 %v1032, 7
      %v1034 = vsub.s32 0, %v1033
      %v1035 = vrot.slane %v1030, %v1034
      %v1036 = vlaneseq
      %v1037 = vshrl.u32 %v1036, 7
      %v1038 = vsub.s32 1, %v1037
      %v1039 = vrot.slane %v1030, %v1038
      %v1042 = vmul.f32 %v1025, %v1035
      %v1043 = vmul.f32 %v1027, %v1039
      %v1044 = vmul.f32 %v1026, %v1035
      %v1045 = vmul.f32 %v1028, %v1039
      %s1046 = scalar_lea.vmem %s4, 64
      %v1047 = vld [vmem:[%s1046] sm:$0xf]
      %v1048 = vld [vmem:[%s1046 + $0x4] sm:$0xf]
      %v1049 = vpack.c.bf16 %v1044, %v1042
      %v1050 = vpack.c.bf16 %v1045, %v1043
      %v1053 = vunpack.c.l.b16 %v1047
      %v1054 = vunpack.c.l.b16 %v1048
      %v1055 = vpack.c.b16 %v1054, %v1053
      %v1057 = vsel %vm408, %v1055, 0
      %1059 = vmatprep.subr.bf16.mxu0 %v1050
      %1060 = vmatpush1.bf16.msra.mxu0 %v1049
      %1061 = vmatprep.subr.bf16.mxu0 0
      %1062 = vmatpush1.bf16.msra.mxu0 0
      %1063 = vmatprep.subr.bf16.mxu0 0
      %1064 = vmatpush1.bf16.msra.mxu0 0
      %1065 = vmatprep.subr.bf16.mxu0 0
      %1066 = vmatpush1.bf16.msra.mxu0 0
      %1067 = vmatprep.subr.bf16.mxu0 0
      %1068 = vmatpush1.bf16.msra.mxu0 0
      %1069 = vmatprep.subr.bf16.mxu0 0
      %1070 = vmatpush1.bf16.msra.mxu0 0
      %1071 = vmatprep.subr.bf16.mxu0 0
      %1072 = vmatpush1.bf16.msra.mxu0 0
      %1073 = vmatprep.subr.bf16.mxu0 0
      %1074 = vmatpush1.bf16.msra.mxu0 0
      %1075 = vmatprep.subr.bf16.mxu0 0
      %1076 = vmatpush1.bf16.msra.mxu0 0
      %1077 = vmatprep.subr.bf16.mxu0 0
      %1078 = vmatpush1.bf16.msra.mxu0 0
      %1079 = vmatprep.subr.bf16.mxu0 0
      %1080 = vmatpush1.bf16.msra.mxu0 0
      %1081 = vmatprep.subr.bf16.mxu0 0
      %1082 = vmatpush1.bf16.msra.mxu0 0
      %1083 = vmatprep.subr.bf16.mxu0 0
      %1084 = vmatpush1.bf16.msra.mxu0 0
      %1085 = vmatprep.subr.bf16.mxu0 0
      %1086 = vmatpush1.bf16.msra.mxu0 0
      %1087 = vmatprep.subr.bf16.mxu0 0
      %1088 = vmatpush1.bf16.msra.mxu0 0
      %1089 = vmatprep.subr.bf16.mxu0 0
      %1090 = vmatpush1.bf16.msra.mxu0 0
      %1091 = vmatprep.mubr.bf16.mxu0 0
      %1092 = vmatmul.mubr.bf16.gmra.mrb[0].mxu0 %v1057
      %v1093 = vpop.f32.mrb[0].mxu0
      %v1094 = vadd.f32 0.0, %v1093
      %v1095 = vpop.f32.mrb[0].mxu0
      %v1096 = vadd.f32 0.0, %v1095
      %v1097 = vpop.f32.mrb[0].mxu0
      %v1098 = vadd.f32 0.0, %v1097
      %v1099 = vpop.f32.mrb[0].mxu0
      %v1100 = vadd.f32 0.0, %v1099
      %1101 = vdwg.mxu0
      %v1102 = vadd.f32 %v1012, %v1094
      %v1103 = vadd.f32 %v1013, %v1096
      %v1104 = vadd.f32 %v1014, %v1098
      %v1105 = vadd.f32 %v1015, %v1100
      %v1106 = vld [vmem:[%s5] sm:$0xff]
      %v1107 = vld [vmem:[%s5 + $0x8] sm:$0xff]
      %1109 = vset.pattern.permute.xlu0 0
      %1110 = vperm.xlu0 %1109, %v1106
      %v1111 = vpop.permute.xlu0 %1110
      %1114 = vset.pattern.permute.xlu0 0
      %1115 = vperm.xlu0 %1114, %v1107
      %v1116 = vpop.permute.xlu0 %1115
      %v1118 = vadd.f32 %v1102, %v1111
      %v1119 = vadd.f32 %v1103, %v1111
      %v1120 = vadd.f32 %v1104, %v1116
      %v1121 = vadd.f32 %v1105, %v1116
      %v1122 = vpack.c.bf16 %v1120, %v1118
      %v1123 = vpack.c.bf16 %v1121, %v1119
      %v1126 = vunpack.c.l.b16 %v1122
      %v1127 = vunpack.c.l.b16 %v1123
      %v1128 = vunpack.c.h.b16 %v1122
      %v1129 = vunpack.c.h.b16 %v1123
      %v1130 = vpack.c.b16 %v1127, %v1126
      %v1131 = vpack.c.b16 %v1129, %v1128
      %1134 = vst [vmem:[%s286] sm:$0xff] %v1130
      %1135 = vst [vmem:[%s286 + $0x8] sm:$0xff] %v1131
      %v1136 = vadd.f32 %v1118, %v1119
      %1137 = vadd.xlane.f32.xlu0 %v1136
      %v1138 = vpop.xlane.xlu0 %1137
      %v1139 = vadd.f32 %v1120, %v1121
      %1140 = vadd.xlane.f32.xlu0 %v1139
      %v1141 = vpop.xlane.xlu0 %1140
      %v1142 = vmul.f32 %v1118, %v1118
      %v1143 = vmul.f32 %v1119, %v1119
      %v1144 = vmul.f32 %v1120, %v1120
      %v1145 = vmul.f32 %v1121, %v1121
      %v1146 = vadd.f32 %v1142, %v1143
      %1147 = vadd.xlane.f32.xlu0 %v1146
      %v1148 = vpop.xlane.xlu0 %1147
      %v1149 = vadd.f32 %v1144, %v1145
      %1150 = vadd.xlane.f32.xlu0 %v1149
      %v1151 = vpop.xlane.xlu0 %1150
      %vm1152 = vcmask 7168
      %v1153 = vsel %vm1152, %v1138, %v1148
      %v1154 = vsel %vm1152, %v1141, %v1151
      %vm1155 = vcmask 15360
      %1156 = vst.msk [vmem:[%s291] sm:$0xff] %vm1155, %v1153
      %1157 = vst.msk [vmem:[%s291 + $0x8] sm:$0xff] %vm1155, %v1154
      %p1158 = scmp.lt.s32.totalorder %s19, 1
      %s1159 = scalar_select %p1158, %s19, 1
      %s1160 = smul.addr %s1159, 4
      %s1161 = smul.addr %s1160, 4
      %s1162 = scalar_lea.vmem %s6, %s1161
      %p1163 = scmp.lt.s32.totalorder %s19, 1
      %s1164 = scalar_select %p1163, %s19, 1
      %s1165 = smul.addr %s1164, 2
      %s1166 = smul.addr %s1165, 8
      %s1167 = scalar_lea.vmem %s7, %s1166
      // Predicated region
      $region45: #{gen_block_forward.4} parent=43 // pred_check
        %p1168 = pneg %p168
      $region46: #{gen_block_forward.4} parent=43 // pred_check_branch
        %1170 = sbr.rel (%p1168) target = $region48
      $region47: #{gen_block_forward.4} parent=43 // pred_region
        _
      $region48: #{gen_block_forward.4} parent=43 // pred_fallthru
        _
      // Predicated region
      $region49: #{gen_block_forward.4} parent=43 // pred_check
        %p1171 = pneg %p194
      $region50: #{gen_block_forward.4} parent=43 // pred_check_branch
        %1173 = sbr.rel (%p1171) target = $region52
      $region51: #{gen_block_forward.4} parent=43 // pred_region
        _
      $region52: #{gen_block_forward.4} parent=43 // pred_fallthru
        _
    $region44: #{gen_block_forward.4} parent=5 // pred_fallthru
      _
    %p1174 = scmp.le.s32.totalorder 2, %s14
    // Predicated region
    $region53: #{gen_block_forward.4} parent=5 // pred_check
      %p1175 = pneg %p1174
    $region54: #{gen_block_forward.4} parent=5 // pred_check_branch
      %1177 = sbr.rel (%p1175) target = $region56
    $region55: #{gen_block_forward.4} parent=5 // pred_region
      %s1178 = ssub.s32 %s14, 2
      // Predicated region
      $region57: #{gen_block_forward.4} parent=55 // pred_check
        %p1179 = pneg %p174
      $region58: #{gen_block_forward.4} parent=55 // pred_check_branch
        %1181 = sbr.rel (%p1179) target = $region60
      $region59: #{gen_block_forward.4} parent=55 // pred_region
        %p1182 = scmp.lt.s32.totalorder %s20, 1
        %s1183 = scalar_select %p1182, %s20, 1
        %s1184 = smul.addr %s1183, 4
        %s1185 = smul.addr %s1184, 4
        %s1186 = scalar_lea.vmem %s6, %s1185
      $region60: #{gen_block_forward.4} parent=55 // pred_fallthru
        _
      // Predicated region
      $region61: #{gen_block_forward.4} parent=55 // pred_check
        %p1187 = pneg %p200
      $region62: #{gen_block_forward.4} parent=55 // pred_check_branch
        %1189 = sbr.rel (%p1187) target = $region64
      $region63: #{gen_block_forward.4} parent=55 // pred_region
        %p1190 = scmp.lt.s32.totalorder %s20, 1
        %s1191 = scalar_select %p1190, %s20, 1
        %s1192 = smul.addr %s1191, 2
        %s1193 = smul.addr %s1192, 8
        %s1194 = scalar_lea.vmem %s7, %s1193
      $region64: #{gen_block_forward.4} parent=55 // pred_fallthru
        _
    $region56: #{gen_block_forward.4} parent=5 // pred_fallthru
      _
  $region6: #{gen_block_forward.4} parent=0 // loop_footer
    %s18 = sadd.s32 1, %s14
  $region7: #{gen_block_forward.4} parent=0 // loop_footer_branch
    %13 = sbr.rel target = $region3
  $region8: #{gen_block_forward.4} parent=0 // loop_exit
    _

// kernel: gen_block_forward.5
$region0: #{gen_block_forward.5}
  #allocation0 [shape = 'u32[]', space=smem, size = 0x4, offset = 0x4, fixed_abs, tag = 'smem constant byte address 0x4 - core index']
  #allocation1 [shape = 'u32[144,128]{1,0:T(1,128)}', space=vmem, size = 0x12000, scoped, tag = 'internal scratch']
  %s0 = inlined_call_operand.vmem [shape: bf16[2,16,256], index: 0, kind: input, shape index: {}]
  %s1 = inlined_call_operand.vmem [shape: f32[2,16,256], index: 1, kind: input, shape index: {}]
  %s2 = inlined_call_operand.vmem [shape: f32[9,1,256], index: 2, kind: input, shape index: {}]
  %s3 = inlined_call_operand.vmem [shape: f32[16,1], index: 3, kind: input, shape index: {}]
  %s4 = inlined_call_operand.vmem [shape: f32[16,1], index: 4, kind: input, shape index: {}]
  %s5 = inlined_call_operand.vmem [shape: bf16[9,16,16], index: 5, kind: input, shape index: {}]
  %s6 = inlined_call_operand.vmem [shape: f32[16,1], index: 6, kind: input, shape index: {}]
  %s7 = inlined_call_operand.vmem [shape: bf16[16,16], index: 7, kind: input, shape index: {}]
  %s8 = inlined_call_operand.vmem [shape: f32[16,1], index: 8, kind: input, shape index: {}]
  %s9 = inlined_call_operand.vmem [shape: f32[2,16,256], index: 9, kind: output, shape index: {}]
  %s10 = sld [smem:[#allocation0]]
  $region69: #{gen_block_forward.5} parent=0
    _
  %s12 = ssub.s32 1, %s10
  %s13 = scalar_select 0, %s12, %s10
  loop: start=0, step=1, limit=4
  $region2: #{gen_block_forward.5} parent=0 // loop_pre_header
    _
  $region3: #{gen_block_forward.5} parent=0 // loop_header
    %s15 = sphi 0, %s19
    %p16 = scmp.ge.s32.totalorder %s15, 4
    %s25 = sphi 0, %s27
    %s28 = sphi 0, %s25
    %s29 = sphi 0, %s28
    %s45 = sphi 0, %s29
    %s51 = sphi 0, %s53
    %s54 = sphi 0, %s51
    %s55 = sphi 0, %s54
    %s71 = sphi 0, %s55
    %s75 = sphi 0, %s75
    %s77 = sphi 0, %s75
    %s78 = sphi 0, %s77
    %s92 = sphi 0, %s78
    %s96 = sphi 0, %s96
    %s98 = sphi 0, %s96
    %s99 = sphi 0, %s98
    %s113 = sphi 0, %s99
    %s117 = sphi 0, %s117
    %s119 = sphi 0, %s117
    %s120 = sphi 0, %s119
    %s134 = sphi 0, %s120
    %s138 = sphi 0, %s138
    %s140 = sphi 0, %s138
    %s141 = sphi 0, %s140
    %s155 = sphi 0, %s141
    %s159 = sphi 0, %s159
    %s161 = sphi 0, %s159
    %s162 = sphi 0, %s161
    %s176 = sphi 0, %s162
    %s180 = sphi 0, %s180
    %s182 = sphi 0, %s180
    %s183 = sphi 0, %s182
    %s197 = sphi 0, %s183
    %s201 = sphi 0, %s201
    %s203 = sphi 0, %s201
    %s204 = sphi 0, %s203
    %s218 = sphi 0, %s204
    %s224 = sphi 0, %s226
    %s227 = sphi 0, %s224
    %s228 = sphi 0, %s227
    %s244 = sphi 0, %s228
  $region4: #{gen_block_forward.5} parent=0 // loop_header_branch
    %18 = sbr.rel (%p16) target = $region8
  $region5: #{gen_block_forward.5} parent=0 // loop_body
    %s20 = ssub.s32 %s15, 1
    %s21 = ssub.s32 %s15, 2
    %s22 = sadd.s32 %s15, 1
    %s23 = ssub.s32 %s15, %s22
    %p24 = scmp.eq.s32.totalorder %s23, 0
    %s26 = sadd.s32 %s25, 1
    %s27 = scalar_select %p24, %s25, %s26
    %p30 = pneg %p24
    %p31 = scmp.eq.s32.totalorder %s15, 1
    %p32 = por %p30, %p31
    %p33 = scmp.ne.s32.totalorder %s25, %s28
    %p34 = scmp.eq.s32.totalorder %s15, 0
    %p35 = por %p33, %p34
    %p36 = scmp.ne.s32.totalorder %s25, %s28
    %p37 = scmp.eq.s32.totalorder %s20, 1
    %p38 = por %p36, %p37
    %p39 = scmp.ne.s32.totalorder %s28, %s29
    %p40 = scmp.eq.s32.totalorder %s20, 0
    %p41 = por %p39, %p40
    %p42 = scmp.ne.s32.totalorder %s28, %s29
    %p43 = scmp.eq.s32.totalorder %s21, 1
    %p44 = por %p42, %p43
    %p46 = scmp.ne.s32.totalorder %s29, %s45
    %p47 = scmp.eq.s32.totalorder %s21, 0
    %p48 = por %p46, %p47
    %s49 = ssub.s32 %s15, %s22
    %p50 = scmp.eq.s32.totalorder %s49, 0
    %s52 = sadd.s32 %s51, 1
    %s53 = scalar_select %p50, %s51, %s52
    %p56 = pneg %p50
    %p57 = scmp.eq.s32.totalorder %s15, 1
    %p58 = por %p56, %p57
    %p59 = scmp.ne.s32.totalorder %s51, %s54
    %p60 = scmp.eq.s32.totalorder %s15, 0
    %p61 = por %p59, %p60
    %p62 = scmp.ne.s32.totalorder %s51, %s54
    %p63 = scmp.eq.s32.totalorder %s20, 1
    %p64 = por %p62, %p63
    %p65 = scmp.ne.s32.totalorder %s54, %s55
    %p66 = scmp.eq.s32.totalorder %s20, 0
    %p67 = por %p65, %p66
    %p68 = scmp.ne.s32.totalorder %s54, %s55
    %p69 = scmp.eq.s32.totalorder %s21, 1
    %p70 = por %p68, %p69
    %p72 = scmp.ne.s32.totalorder %s55, %s71
    %p73 = scmp.eq.s32.totalorder %s21, 0
    %p74 = por %p72, %p73
    %s76 = sadd.s32 %s75, 1
    %p79 = scmp.eq.s32.totalorder %s15, 1
    %p80 = scmp.ne.s32.totalorder %s75, %s77
    %p81 = scmp.eq.s32.totalorder %s15, 0
    %p82 = por %p80, %p81
    %p83 = scmp.ne.s32.totalorder %s75, %s77
    %p84 = scmp.eq.s32.totalorder %s20, 1
    %p85 = por %p83, %p84
    %p86 = scmp.ne.s32.totalorder %s77, %s78
    %p87 = scmp.eq.s32.totalorder %s20, 0
    %p88 = por %p86, %p87
    %p89 = scmp.ne.s32.totalorder %s77, %s78
    %p90 = scmp.eq.s32.totalorder %s21, 1
    %p91 = por %p89, %p90
    %p93 = scmp.ne.s32.totalorder %s78, %s92
    %p94 = scmp.eq.s32.totalorder %s21, 0
    %p95 = por %p93, %p94
    %s97 = sadd.s32 %s96, 1
    %p100 = scmp.eq.s32.totalorder %s15, 1
    %p101 = scmp.ne.s32.totalorder %s96, %s98
    %p102 = scmp.eq.s32.totalorder %s15, 0
    %p103 = por %p101, %p102
    %p104 = scmp.ne.s32.totalorder %s96, %s98
    %p105 = scmp.eq.s32.totalorder %s20, 1
    %p106 = por %p104, %p105
    %p107 = scmp.ne.s32.totalorder %s98, %s99
    %p108 = scmp.eq.s32.totalorder %s20, 0
    %p109 = por %p107, %p108
    %p110 = scmp.ne.s32.totalorder %s98, %s99
    %p111 = scmp.eq.s32.totalorder %s21, 1
    %p112 = por %p110, %p111
    %p114 = scmp.ne.s32.totalorder %s99, %s113
    %p115 = scmp.eq.s32.totalorder %s21, 0
    %p116 = por %p114, %p115
    %s118 = sadd.s32 %s117, 1
    %p121 = scmp.eq.s32.totalorder %s15, 1
    %p122 = scmp.ne.s32.totalorder %s117, %s119
    %p123 = scmp.eq.s32.totalorder %s15, 0
    %p124 = por %p122, %p123
    %p125 = scmp.ne.s32.totalorder %s117, %s119
    %p126 = scmp.eq.s32.totalorder %s20, 1
    %p127 = por %p125, %p126
    %p128 = scmp.ne.s32.totalorder %s119, %s120
    %p129 = scmp.eq.s32.totalorder %s20, 0
    %p130 = por %p128, %p129
    %p131 = scmp.ne.s32.totalorder %s119, %s120
    %p132 = scmp.eq.s32.totalorder %s21, 1
    %p133 = por %p131, %p132
    %p135 = scmp.ne.s32.totalorder %s120, %s134
    %p136 = scmp.eq.s32.totalorder %s21, 0
    %p137 = por %p135, %p136
    %s139 = sadd.s32 %s138, 1
    %p142 = scmp.eq.s32.totalorder %s15, 1
    %p143 = scmp.ne.s32.totalorder %s138, %s140
    %p144 = scmp.eq.s32.totalorder %s15, 0
    %p145 = por %p143, %p144
    %p146 = scmp.ne.s32.totalorder %s138, %s140
    %p147 = scmp.eq.s32.totalorder %s20, 1
    %p148 = por %p146, %p147
    %p149 = scmp.ne.s32.totalorder %s140, %s141
    %p150 = scmp.eq.s32.totalorder %s20, 0
    %p151 = por %p149, %p150
    %p152 = scmp.ne.s32.totalorder %s140, %s141
    %p153 = scmp.eq.s32.totalorder %s21, 1
    %p154 = por %p152, %p153
    %p156 = scmp.ne.s32.totalorder %s141, %s155
    %p157 = scmp.eq.s32.totalorder %s21, 0
    %p158 = por %p156, %p157
    %s160 = sadd.s32 %s159, 1
    %p163 = scmp.eq.s32.totalorder %s15, 1
    %p164 = scmp.ne.s32.totalorder %s159, %s161
    %p165 = scmp.eq.s32.totalorder %s15, 0
    %p166 = por %p164, %p165
    %p167 = scmp.ne.s32.totalorder %s159, %s161
    %p168 = scmp.eq.s32.totalorder %s20, 1
    %p169 = por %p167, %p168
    %p170 = scmp.ne.s32.totalorder %s161, %s162
    %p171 = scmp.eq.s32.totalorder %s20, 0
    %p172 = por %p170, %p171
    %p173 = scmp.ne.s32.totalorder %s161, %s162
    %p174 = scmp.eq.s32.totalorder %s21, 1
    %p175 = por %p173, %p174
    %p177 = scmp.ne.s32.totalorder %s162, %s176
    %p178 = scmp.eq.s32.totalorder %s21, 0
    %p179 = por %p177, %p178
    %s181 = sadd.s32 %s180, 1
    %p184 = scmp.eq.s32.totalorder %s15, 1
    %p185 = scmp.ne.s32.totalorder %s180, %s182
    %p186 = scmp.eq.s32.totalorder %s15, 0
    %p187 = por %p185, %p186
    %p188 = scmp.ne.s32.totalorder %s180, %s182
    %p189 = scmp.eq.s32.totalorder %s20, 1
    %p190 = por %p188, %p189
    %p191 = scmp.ne.s32.totalorder %s182, %s183
    %p192 = scmp.eq.s32.totalorder %s20, 0
    %p193 = por %p191, %p192
    %p194 = scmp.ne.s32.totalorder %s182, %s183
    %p195 = scmp.eq.s32.totalorder %s21, 1
    %p196 = por %p194, %p195
    %p198 = scmp.ne.s32.totalorder %s183, %s197
    %p199 = scmp.eq.s32.totalorder %s21, 0
    %p200 = por %p198, %p199
    %s202 = sadd.s32 %s201, 1
    %p205 = scmp.eq.s32.totalorder %s15, 1
    %p206 = scmp.ne.s32.totalorder %s201, %s203
    %p207 = scmp.eq.s32.totalorder %s15, 0
    %p208 = por %p206, %p207
    %p209 = scmp.ne.s32.totalorder %s201, %s203
    %p210 = scmp.eq.s32.totalorder %s20, 1
    %p211 = por %p209, %p210
    %p212 = scmp.ne.s32.totalorder %s203, %s204
    %p213 = scmp.eq.s32.totalorder %s20, 0
    %p214 = por %p212, %p213
    %p215 = scmp.ne.s32.totalorder %s203, %s204
    %p216 = scmp.eq.s32.totalorder %s21, 1
    %p217 = por %p215, %p216
    %p219 = scmp.ne.s32.totalorder %s204, %s218
    %p220 = scmp.eq.s32.totalorder %s21, 0
    %p221 = por %p219, %p220
    %s222 = ssub.s32 %s15, %s22
    %p223 = scmp.eq.s32.totalorder %s222, 0
    %s225 = sadd.s32 %s224, 1
    %s226 = scalar_select %p223, %s224, %s225
    %p229 = pneg %p223
    %p230 = scmp.eq.s32.totalorder %s15, 1
    %p231 = por %p229, %p230
    %p232 = scmp.ne.s32.totalorder %s224, %s227
    %p233 = scmp.eq.s32.totalorder %s15, 0
    %p234 = por %p232, %p233
    %p235 = scmp.ne.s32.totalorder %s224, %s227
    %p236 = scmp.eq.s32.totalorder %s20, 1
    %p237 = por %p235, %p236
    %p238 = scmp.ne.s32.totalorder %s227, %s228
    %p239 = scmp.eq.s32.totalorder %s20, 0
    %p240 = por %p238, %p239
    %p241 = scmp.ne.s32.totalorder %s227, %s228
    %p242 = scmp.eq.s32.totalorder %s21, 1
    %p243 = por %p241, %p242
    %p245 = scmp.ne.s32.totalorder %s228, %s244
    %p246 = scmp.eq.s32.totalorder %s21, 0
    %p247 = por %p245, %p246
    %p248 = scmp.le.s32.totalorder 1, %s15
    %p249 = scmp.lt.s32.totalorder %s15, 3
    %p250 = pnand %p248, %p249
    %p251 = pneg %p250
    // Predicated region
    $region9: #{gen_block_forward.5} parent=5 // pred_check
      _
    $region10: #{gen_block_forward.5} parent=5 // pred_check_branch
      %253 = sbr.rel (%p250) target = $region12
    $region11: #{gen_block_forward.5} parent=5 // pred_region
      %s254 = ssub.s32 %s15, 1
      // Predicated region
      $region13: #{gen_block_forward.5} parent=11 // pred_check
        %p255 = pneg %p88
      $region14: #{gen_block_forward.5} parent=11 // pred_check_branch
        %257 = sbr.rel (%p255) target = $region16
      $region15: #{gen_block_forward.5} parent=11 // pred_region
        _
      $region16: #{gen_block_forward.5} parent=11 // pred_fallthru
        _
      // Predicated region
      $region17: #{gen_block_forward.5} parent=11 // pred_check
        %p258 = pneg %p109
      $region18: #{gen_block_forward.5} parent=11 // pred_check_branch
        %260 = sbr.rel (%p258) target = $region20
      $region19: #{gen_block_forward.5} parent=11 // pred_region
        _
      $region20: #{gen_block_forward.5} parent=11 // pred_fallthru
        _
      // Predicated region
      $region21: #{gen_block_forward.5} parent=11 // pred_check
        %p261 = pneg %p130
      $region22: #{gen_block_forward.5} parent=11 // pred_check_branch
        %263 = sbr.rel (%p261) target = $region24
      $region23: #{gen_block_forward.5} parent=11 // pred_region
        _
      $region24: #{gen_block_forward.5} parent=11 // pred_fallthru
        _
      // Predicated region
      $region25: #{gen_block_forward.5} parent=11 // pred_check
        %p264 = pneg %p151
      $region26: #{gen_block_forward.5} parent=11 // pred_check_branch
        %266 = sbr.rel (%p264) target = $region28
      $region27: #{gen_block_forward.5} parent=11 // pred_region
        _
      $region28: #{gen_block_forward.5} parent=11 // pred_fallthru
        _
      // Predicated region
      $region29: #{gen_block_forward.5} parent=11 // pred_check
        %p267 = pneg %p172
      $region30: #{gen_block_forward.5} parent=11 // pred_check_branch
        %269 = sbr.rel (%p267) target = $region32
      $region31: #{gen_block_forward.5} parent=11 // pred_region
        _
      $region32: #{gen_block_forward.5} parent=11 // pred_fallthru
        _
      // Predicated region
      $region33: #{gen_block_forward.5} parent=11 // pred_check
        %p270 = pneg %p193
      $region34: #{gen_block_forward.5} parent=11 // pred_check_branch
        %272 = sbr.rel (%p270) target = $region36
      $region35: #{gen_block_forward.5} parent=11 // pred_region
        _
      $region36: #{gen_block_forward.5} parent=11 // pred_fallthru
        _
      // Predicated region
      $region37: #{gen_block_forward.5} parent=11 // pred_check
        %p273 = pneg %p214
      $region38: #{gen_block_forward.5} parent=11 // pred_check_branch
        %275 = sbr.rel (%p273) target = $region40
      $region39: #{gen_block_forward.5} parent=11 // pred_region
        _
      $region40: #{gen_block_forward.5} parent=11 // pred_fallthru
        _
    $region12: #{gen_block_forward.5} parent=5 // pred_fallthru
      _
    %p276 = scmp.lt.s32.totalorder %s15, 2
    // Predicated region
    $region41: #{gen_block_forward.5} parent=5 // pred_check
      %p277 = pneg %p276
    $region42: #{gen_block_forward.5} parent=5 // pred_check_branch
      %279 = sbr.rel (%p277) target = $region44
    $region43: #{gen_block_forward.5} parent=5 // pred_region
      // Predicated region
      $region45: #{gen_block_forward.5} parent=43 // pred_check
        %p280 = pneg %p35
      $region46: #{gen_block_forward.5} parent=43 // pred_check_branch
        %282 = sbr.rel (%p280) target = $region48
      $region47: #{gen_block_forward.5} parent=43 // pred_region
        %p283 = scmp.lt.s32.totalorder %s15, 1
        %s284 = scalar_select %p283, %s15, 1
        %s285 = smul.addr %s284, 4
        %s286 = smul.addr %s285, 4
        %s287 = scalar_lea.vmem %s0, %s286
      $region48: #{gen_block_forward.5} parent=43 // pred_fallthru
        _
      // Predicated region
      $region49: #{gen_block_forward.5} parent=43 // pred_check
        %p288 = pneg %p61
      $region50: #{gen_block_forward.5} parent=43 // pred_check_branch
        %290 = sbr.rel (%p288) target = $region52
      $region51: #{gen_block_forward.5} parent=43 // pred_region
        %p291 = scmp.lt.s32.totalorder %s15, 1
        %s292 = scalar_select %p291, %s15, 1
        %s293 = smul.addr %s292, 4
        %s294 = smul.addr %s293, 8
        %s295 = scalar_lea.vmem %s1, %s294
      $region52: #{gen_block_forward.5} parent=43 // pred_fallthru
        _
    $region44: #{gen_block_forward.5} parent=5 // pred_fallthru
      _
    %p296 = scmp.le.s32.totalorder 1, %s15
    %p297 = scmp.lt.s32.totalorder %s15, 3
    %p298 = pnand %p296, %p297
    %p299 = pneg %p298
    // Predicated region
    $region53: #{gen_block_forward.5} parent=5 // pred_check
      _
    $region54: #{gen_block_forward.5} parent=5 // pred_check_branch
      %301 = sbr.rel (%p298) target = $region56
    $region55: #{gen_block_forward.5} parent=5 // pred_region
      %s302 = ssub.s32 %s15, 1
      %p303 = scmp.lt.s32.totalorder %s20, 1
      %s304 = scalar_select %p303, %s20, 1
      %s305 = smul.addr %s304, 4
      %s306 = smul.addr %s305, 4
      %s307 = scalar_lea.vmem %s0, %s306
      %p308 = pneg %p41
      %p309 = pneg %p38
      %p310 = scmp.lt.s32.totalorder %s20, 1
      %s311 = scalar_select %p310, %s20, 1
      %s312 = smul.addr %s311, 4
      %s313 = smul.addr %s312, 8
      %s314 = scalar_lea.vmem %s1, %s313
      %p315 = pneg %p67
      %p316 = pneg %p64
      %p317 = pneg %p88
      %p318 = pneg %p85
      %p319 = pneg %p109
      %p320 = pneg %p106
      %p321 = pneg %p130
      %p322 = pneg %p127
      %p323 = pneg %p151
      %p324 = pneg %p148
      %p325 = pneg %p172
      %p326 = pneg %p169
      %p327 = pneg %p193
      %p328 = pneg %p190
      %p329 = pneg %p214
      %p330 = pneg %p211
      %p331 = pneg %p240
      %p332 = pneg %p237
      %p333 = scmp.lt.s32.totalorder %s20, 1
      %s334 = scalar_select %p333, %s20, 1
      %s335 = smul.addr %s334, 4
      %s336 = smul.addr %s335, 8
      %s337 = scalar_lea.vmem %s9, %s336
      %p338 = scmp.lt.s32.totalorder %s20, 1
      %s339 = scalar_select %p338, %s20, 1
      %s340 = smul.addr %s339, 4
      %s341 = smul.addr %s340, 4
      %s342 = scalar_lea.vmem %s0, %s341
      %p343 = scmp.lt.s32.totalorder %s20, 1
      %s344 = scalar_select %p343, %s20, 1
      %s345 = smul.addr %s344, 4
      %s346 = smul.addr %s345, 8
      %s347 = scalar_lea.vmem %s1, %s346
      %p348 = scmp.lt.s32.totalorder %s20, 1
      %s349 = scalar_select %p348, %s20, 1
      %s350 = smul.addr %s349, 4
      %s351 = smul.addr %s350, 8
      %s352 = scalar_lea.vmem %s9, %s351
      %v354 = vld [vmem:[%s342] sm:$0xff]
      %v355 = vld [vmem:[%s342 + $0x8] sm:$0xff]
      %v356 = vunpack.c.l.bf16 %v354
      %v357 = vunpack.c.h.bf16 %v354
      %v358 = vunpack.c.l.bf16 %v355
      %v359 = vunpack.c.h.bf16 %v355
      %v360 = vld [vmem:[%s3] sm:$0xff]
      %v361 = vld [vmem:[%s3 + $0x8] sm:$0xff]
      %363 = vset.pattern.permute.xlu0 0
      %364 = vperm.xlu0 %363, %v360
      %v365 = vpop.permute.xlu0 %364
      %368 = vset.pattern.permute.xlu0 0
      %369 = vperm.xlu0 %368, %v361
      %v370 = vpop.permute.xlu0 %369
      %v372 = vmul.f32 %v356, %v365
      %v373 = vmul.f32 %v357, %v365
      %v374 = vmul.f32 %v358, %v370
      %v375 = vmul.f32 %v359, %v370
      %v376 = vld [vmem:[%s4] sm:$0xff]
      %v377 = vld [vmem:[%s4 + $0x8] sm:$0xff]
      %379 = vset.pattern.permute.xlu0 0
      %380 = vperm.xlu0 %379, %v376
      %v381 = vpop.permute.xlu0 %380
      %384 = vset.pattern.permute.xlu0 0
      %385 = vperm.xlu0 %384, %v377
      %v386 = vpop.permute.xlu0 %385
      %v388 = vadd.f32 %v372, %v381
      %v389 = vadd.f32 %v373, %v381
      %v390 = vadd.f32 %v374, %v386
      %v391 = vadd.f32 %v375, %v386
      %v392 = vmax.f32 %v388, 0.0
      %v393 = vmax.f32 %v389, 0.0
      %v394 = vmax.f32 %v390, 0.0
      %v395 = vmax.f32 %v391, 0.0
      %v396 = vld [vmem:[%s7] sm:$0xf]
      %v397 = vld [vmem:[%s7 + $0x4] sm:$0xf]
      %v398 = vld [vmem:[%s347] sm:$0xff]
      %v399 = vld [vmem:[%s347 + $0x8] sm:$0xff]
      %v400 = vld [vmem:[%s347 + $0x10] sm:$0xff]
      %v401 = vld [vmem:[%s347 + $0x18] sm:$0xff]
      %v402 = vpack.c.bf16 %v400, %v398
      %v403 = vpack.c.bf16 %v401, %v399
      %v404 = vld [vmem:[%s8] sm:$0xff]
      %v405 = vld [vmem:[%s8 + $0x8] sm:$0xff]
      %407 = vset.pattern.permute.xlu0 0
      %408 = vperm.xlu0 %407, %v404
      %v409 = vpop.permute.xlu0 %408
      %412 = vset.pattern.permute.xlu0 0
      %413 = vperm.xlu0 %412, %v405
      %v414 = vpop.permute.xlu0 %413
      %v418 = vunpack.c.l.b16 %v396
      %v419 = vunpack.c.l.b16 %v397
      %v420 = vpack.c.b16 %v419, %v418
      %vm421 = vcmask 130048
      %v423 = vsel %vm421, %v420, 0
      %425 = vmatprep.subr.bf16.mxu0 %v403
      %426 = vmatpush1.bf16.msra.mxu0 %v402
      %427 = vmatprep.subr.bf16.mxu0 0
      %428 = vmatpush1.bf16.msra.mxu0 0
      %429 = vmatprep.subr.bf16.mxu0 0
      %430 = vmatpush1.bf16.msra.mxu0 0
      %431 = vmatprep.subr.bf16.mxu0 0
      %432 = vmatpush1.bf16.msra.mxu0 0
      %433 = vmatprep.subr.bf16.mxu0 0
      %434 = vmatpush1.bf16.msra.mxu0 0
      %435 = vmatprep.subr.bf16.mxu0 0
      %436 = vmatpush1.bf16.msra.mxu0 0
      %437 = vmatprep.subr.bf16.mxu0 0
      %438 = vmatpush1.bf16.msra.mxu0 0
      %439 = vmatprep.subr.bf16.mxu0 0
      %440 = vmatpush1.bf16.msra.mxu0 0
      %441 = vmatprep.subr.bf16.mxu0 0
      %442 = vmatpush1.bf16.msra.mxu0 0
      %443 = vmatprep.subr.bf16.mxu0 0
      %444 = vmatpush1.bf16.msra.mxu0 0
      %445 = vmatprep.subr.bf16.mxu0 0
      %446 = vmatpush1.bf16.msra.mxu0 0
      %447 = vmatprep.subr.bf16.mxu0 0
      %448 = vmatpush1.bf16.msra.mxu0 0
      %449 = vmatprep.subr.bf16.mxu0 0
      %450 = vmatpush1.bf16.msra.mxu0 0
      %451 = vmatprep.subr.bf16.mxu0 0
      %452 = vmatpush1.bf16.msra.mxu0 0
      %453 = vmatprep.subr.bf16.mxu0 0
      %454 = vmatpush1.bf16.msra.mxu0 0
      %455 = vmatprep.subr.bf16.mxu0 0
      %456 = vmatpush1.bf16.msra.mxu0 0
      %457 = vmatprep.mubr.bf16.mxu0 0
      %458 = vmatmul.mubr.bf16.gmra.mrb[0].mxu0 %v423
      %v459 = vpop.f32.mrb[0].mxu0
      %v460 = vadd.f32 %v409, %v459
      %v461 = vpop.f32.mrb[0].mxu0
      %v462 = vadd.f32 %v409, %v461
      %v463 = vpop.f32.mrb[0].mxu0
      %v464 = vadd.f32 %v414, %v463
      %v465 = vpop.f32.mrb[0].mxu0
      %v466 = vadd.f32 %v414, %v465
      %467 = vdwg.mxu0
      %468 = vrot.lane.b32.xlu0 %v392, 17
      %v469 = vpop.permute.xlu0 %468
      %470 = vrot.lane.b32.xlu0 %v394, 17
      %v471 = vpop.permute.xlu0 %470
      %472 = vrot.lane.b32.xlu0 %v393, 17
      %v473 = vpop.permute.xlu0 %472
      %474 = vrot.lane.b32.xlu0 %v395, 17
      %v475 = vpop.permute.xlu0 %474
      %v476 = vlaneseq
      %v477 = vand.u32 %v476, 127
      %vm478 = vcmp.lt.s32.totalorder %v477, 17
      %v479 = vsel %vm478, %v469, %v473
      %v480 = vsel %vm478, %v471, %v475
      %v481 = vsel %vm478, %v473, %v469
      %v482 = vsel %vm478, %v475, %v471
      %v483 = vld [vmem:[%s2] sm:$0x3]
      %v485 = vlaneseq
      %v486 = vshrl.u32 %v485, 7
      %v487 = vsub.s32 0, %v486
      %v488 = vrot.slane %v483, %v487
      %v489 = vlaneseq
      %v490 = vshrl.u32 %v489, 7
      %v491 = vsub.s32 1, %v490
      %v492 = vrot.slane %v483, %v491
      %v495 = vmul.f32 %v481, %v488
      %v496 = vmul.f32 %v479, %v492
      %v497 = vmul.f32 %v482, %v488
      %v498 = vmul.f32 %v480, %v492
      %v499 = vld [vmem:[%s5] sm:$0xf]
      %v500 = vld [vmem:[%s5 + $0x4] sm:$0xf]
      %v501 = vpack.c.bf16 %v497, %v495
      %v502 = vpack.c.bf16 %v498, %v496
      %503 = vrot.lane.b32.xlu0 %v392, 16
      %v504 = vpop.permute.xlu0 %503
      %505 = vrot.lane.b32.xlu0 %v394, 16
      %v506 = vpop.permute.xlu0 %505
      %507 = vrot.lane.b32.xlu0 %v393, 16
      %v508 = vpop.permute.xlu0 %507
      %509 = vrot.lane.b32.xlu0 %v395, 16
      %v510 = vpop.permute.xlu0 %509
      %vm511 = vcmp.lt.s32.totalorder %v477, 16
      %v512 = vsel %vm511, %v504, %v508
      %v513 = vsel %vm511, %v506, %v510
      %v514 = vsel %vm511, %v508, %v504
      %v515 = vsel %vm511, %v510, %v506
      %s516 = scalar_lea.vmem %s2, 2
      %v517 = vld [vmem:[%s516] sm:$0x3]
      %v519 = vlaneseq
      %v520 = vshrl.u32 %v519, 7
      %v521 = vsub.s32 0, %v520
      %v522 = vrot.slane %v517, %v521
      %v523 = vlaneseq
      %v524 = vshrl.u32 %v523, 7
      %v525 = vsub.s32 1, %v524
      %v526 = vrot.slane %v517, %v525
      %v529 = vmul.f32 %v514, %v522
      %v530 = vmul.f32 %v512, %v526
      %v531 = vmul.f32 %v515, %v522
      %v532 = vmul.f32 %v513, %v526
      %s533 = scalar_lea.vmem %s5, 8
      %v534 = vld [vmem:[%s533] sm:$0xf]
      %v535 = vld [vmem:[%s533 + $0x4] sm:$0xf]
      %v536 = vpack.c.bf16 %v531, %v529
      %v537 = vpack.c.bf16 %v532, %v530
      %v540 = vunpack.c.l.b16 %v534
      %v541 = vunpack.c.l.b16 %v535
      %v542 = vpack.c.b16 %v541, %v540
      %v544 = vsel %vm421, %v542, 0
      %546 = vmatprep.subr.bf16.mxu0 %v537
      %547 = vmatpush1.bf16.msra.mxu0 %v536
      %548 = vmatprep.subr.bf16.mxu0 0
      %549 = vmatpush1.bf16.msra.mxu0 0
      %550 = vmatprep.subr.bf16.mxu0 0
      %551 = vmatpush1.bf16.msra.mxu0 0
      %552 = vmatprep.subr.bf16.mxu0 0
      %553 = vmatpush1.bf16.msra.mxu0 0
      %554 = vmatprep.subr.bf16.mxu0 0
      %555 = vmatpush1.bf16.msra.mxu0 0
      %556 = vmatprep.subr.bf16.mxu0 0
      %557 = vmatpush1.bf16.msra.mxu0 0
      %558 = vmatprep.subr.bf16.mxu0 0
      %559 = vmatpush1.bf16.msra.mxu0 0
      %560 = vmatprep.subr.bf16.mxu0 0
      %561 = vmatpush1.bf16.msra.mxu0 0
      %562 = vmatprep.subr.bf16.mxu0 0
      %563 = vmatpush1.bf16.msra.mxu0 0
      %564 = vmatprep.subr.bf16.mxu0 0
      %565 = vmatpush1.bf16.msra.mxu0 0
      %566 = vmatprep.subr.bf16.mxu0 0
      %567 = vmatpush1.bf16.msra.mxu0 0
      %568 = vmatprep.subr.bf16.mxu0 0
      %569 = vmatpush1.bf16.msra.mxu0 0
      %570 = vmatprep.subr.bf16.mxu0 0
      %571 = vmatpush1.bf16.msra.mxu0 0
      %572 = vmatprep.subr.bf16.mxu0 0
      %573 = vmatpush1.bf16.msra.mxu0 0
      %574 = vmatprep.subr.bf16.mxu0 0
      %575 = vmatpush1.bf16.msra.mxu0 0
      %576 = vmatprep.subr.bf16.mxu0 0
      %577 = vmatpush1.bf16.msra.mxu0 0
      %578 = vmatprep.mubr.bf16.mxu0 0
      %579 = vmatmul.mubr.bf16.gmra.mrb[0].mxu0 %v544
      %v580 = vpop.f32.mrb[0].mxu0
      %v581 = vadd.f32 0.0, %v580
      %v582 = vpop.f32.mrb[0].mxu0
      %v583 = vadd.f32 0.0, %v582
      %v584 = vpop.f32.mrb[0].mxu0
      %v585 = vadd.f32 0.0, %v584
      %v586 = vpop.f32.mrb[0].mxu0
      %v587 = vadd.f32 0.0, %v586
      %588 = vdwg.mxu0
      %v591 = vunpack.c.l.b16 %v499
      %v592 = vunpack.c.l.b16 %v500
      %v593 = vpack.c.b16 %v592, %v591
      %v595 = vsel %vm421, %v593, 0
      %597 = vmatprep.subr.bf16.mxu0 %v502
      %598 = vmatpush1.bf16.msra.mxu0 %v501
      %599 = vmatprep.subr.bf16.mxu0 0
      %600 = vmatpush1.bf16.msra.mxu0 0
      %601 = vmatprep.subr.bf16.mxu0 0
      %602 = vmatpush1.bf16.msra.mxu0 0
      %603 = vmatprep.subr.bf16.mxu0 0
      %604 = vmatpush1.bf16.msra.mxu0 0
      %605 = vmatprep.subr.bf16.mxu0 0
      %606 = vmatpush1.bf16.msra.mxu0 0
      %607 = vmatprep.subr.bf16.mxu0 0
      %608 = vmatpush1.bf16.msra.mxu0 0
      %609 = vmatprep.subr.bf16.mxu0 0
      %610 = vmatpush1.bf16.msra.mxu0 0
      %611 = vmatprep.subr.bf16.mxu0 0
      %612 = vmatpush1.bf16.msra.mxu0 0
      %613 = vmatprep.subr.bf16.mxu0 0
      %614 = vmatpush1.bf16.msra.mxu0 0
      %615 = vmatprep.subr.bf16.mxu0 0
      %616 = vmatpush1.bf16.msra.mxu0 0
      %617 = vmatprep.subr.bf16.mxu0 0
      %618 = vmatpush1.bf16.msra.mxu0 0
      %619 = vmatprep.subr.bf16.mxu0 0
      %620 = vmatpush1.bf16.msra.mxu0 0
      %621 = vmatprep.subr.bf16.mxu0 0
      %622 = vmatpush1.bf16.msra.mxu0 0
      %623 = vmatprep.subr.bf16.mxu0 0
      %624 = vmatpush1.bf16.msra.mxu0 0
      %625 = vmatprep.subr.bf16.mxu0 0
      %626 = vmatpush1.bf16.msra.mxu0 0
      %627 = vmatprep.subr.bf16.mxu0 0
      %628 = vmatpush1.bf16.msra.mxu0 0
      %629 = vmatprep.mubr.bf16.mxu0 0
      %630 = vmatmul.mubr.bf16.gmra.mrb[0].mxu0 %v595
      %v631 = vpop.f32.mrb[0].mxu0
      %v632 = vadd.f32 %v581, %v631
      %v633 = vpop.f32.mrb[0].mxu0
      %v634 = vadd.f32 %v583, %v633
      %v635 = vpop.f32.mrb[0].mxu0
      %v636 = vadd.f32 %v585, %v635
      %v637 = vpop.f32.mrb[0].mxu0
      %v638 = vadd.f32 %v587, %v637
      %639 = vdwg.mxu0
      %640 = vrot.lane.b32.xlu0 %v392, 15
      %v641 = vpop.permute.xlu0 %640
      %642 = vrot.lane.b32.xlu0 %v394, 15
      %v643 = vpop.permute.xlu0 %642
      %644 = vrot.lane.b32.xlu0 %v393, 15
      %v645 = vpop.permute.xlu0 %644
      %646 = vrot.lane.b32.xlu0 %v395, 15
      %v647 = vpop.permute.xlu0 %646
      %vm648 = vcmp.lt.s32.totalorder %v477, 15
      %v649 = vsel %vm648, %v641, %v645
      %v650 = vsel %vm648, %v643, %v647
      %v651 = vsel %vm648, %v645, %v641
      %v652 = vsel %vm648, %v647, %v643
      %s653 = scalar_lea.vmem %s2, 4
      %v654 = vld [vmem:[%s653] sm:$0x3]
      %v656 = vlaneseq
      %v657 = vshrl.u32 %v656, 7
      %v658 = vsub.s32 0, %v657
      %v659 = vrot.slane %v654, %v658
      %v660 = vlaneseq
      %v661 = vshrl.u32 %v660, 7
      %v662 = vsub.s32 1, %v661
      %v663 = vrot.slane %v654, %v662
      %v666 = vmul.f32 %v651, %v659
      %v667 = vmul.f32 %v649, %v663
      %v668 = vmul.f32 %v652, %v659
      %v669 = vmul.f32 %v650, %v663
      %s670 = scalar_lea.vmem %s5, 16
      %v671 = vld [vmem:[%s670] sm:$0xf]
      %v672 = vld [vmem:[%s670 + $0x4] sm:$0xf]
      %v673 = vpack.c.bf16 %v668, %v666
      %v674 = vpack.c.bf16 %v669, %v667
      %v677 = vunpack.c.l.b16 %v671
      %v678 = vunpack.c.l.b16 %v672
      %v679 = vpack.c.b16 %v678, %v677
      %v681 = vsel %vm421, %v679, 0
      %683 = vmatprep.subr.bf16.mxu0 %v674
      %684 = vmatpush1.bf16.msra.mxu0 %v673
      %685 = vmatprep.subr.bf16.mxu0 0
      %686 = vmatpush1.bf16.msra.mxu0 0
      %687 = vmatprep.subr.bf16.mxu0 0
      %688 = vmatpush1.bf16.msra.mxu0 0
      %689 = vmatprep.subr.bf16.mxu0 0
      %690 = vmatpush1.bf16.msra.mxu0 0
      %691 = vmatprep.subr.bf16.mxu0 0
      %692 = vmatpush1.bf16.msra.mxu0 0
      %693 = vmatprep.subr.bf16.mxu0 0
      %694 = vmatpush1.bf16.msra.mxu0 0
      %695 = vmatprep.subr.bf16.mxu0 0
      %696 = vmatpush1.bf16.msra.mxu0 0
      %697 = vmatprep.subr.bf16.mxu0 0
      %698 = vmatpush1.bf16.msra.mxu0 0
      %699 = vmatprep.subr.bf16.mxu0 0
      %700 = vmatpush1.bf16.msra.mxu0 0
      %701 = vmatprep.subr.bf16.mxu0 0
      %702 = vmatpush1.bf16.msra.mxu0 0
      %703 = vmatprep.subr.bf16.mxu0 0
      %704 = vmatpush1.bf16.msra.mxu0 0
      %705 = vmatprep.subr.bf16.mxu0 0
      %706 = vmatpush1.bf16.msra.mxu0 0
      %707 = vmatprep.subr.bf16.mxu0 0
      %708 = vmatpush1.bf16.msra.mxu0 0
      %709 = vmatprep.subr.bf16.mxu0 0
      %710 = vmatpush1.bf16.msra.mxu0 0
      %711 = vmatprep.subr.bf16.mxu0 0
      %712 = vmatpush1.bf16.msra.mxu0 0
      %713 = vmatprep.subr.bf16.mxu0 0
      %714 = vmatpush1.bf16.msra.mxu0 0
      %715 = vmatprep.mubr.bf16.mxu0 0
      %716 = vmatmul.mubr.bf16.gmra.mrb[0].mxu0 %v681
      %v717 = vpop.f32.mrb[0].mxu0
      %v718 = vadd.f32 0.0, %v717
      %v719 = vpop.f32.mrb[0].mxu0
      %v720 = vadd.f32 0.0, %v719
      %v721 = vpop.f32.mrb[0].mxu0
      %v722 = vadd.f32 0.0, %v721
      %v723 = vpop.f32.mrb[0].mxu0
      %v724 = vadd.f32 0.0, %v723
      %725 = vdwg.mxu0
      %v726 = vadd.f32 %v632, %v718
      %v727 = vadd.f32 %v634, %v720
      %v728 = vadd.f32 %v636, %v722
      %v729 = vadd.f32 %v638, %v724
      %730 = vrot.lane.b32.xlu0 %v392, 1
      %v731 = vpop.permute.xlu0 %730
      %732 = vrot.lane.b32.xlu0 %v394, 1
      %v733 = vpop.permute.xlu0 %732
      %734 = vrot.lane.b32.xlu0 %v393, 1
      %v735 = vpop.permute.xlu0 %734
      %736 = vrot.lane.b32.xlu0 %v395, 1
      %v737 = vpop.permute.xlu0 %736
      %vm738 = vcmp.lt.s32.totalorder %v477, 1
      %v739 = vsel %vm738, %v731, %v735
      %v740 = vsel %vm738, %v733, %v737
      %v741 = vsel %vm738, %v735, %v731
      %v742 = vsel %vm738, %v737, %v733
      %s743 = scalar_lea.vmem %s2, 6
      %v744 = vld [vmem:[%s743] sm:$0x3]
      %v746 = vlaneseq
      %v747 = vshrl.u32 %v746, 7
      %v748 = vsub.s32 0, %v747
      %v749 = vrot.slane %v744, %v748
      %v750 = vlaneseq
      %v751 = vshrl.u32 %v750, 7
      %v752 = vsub.s32 1, %v751
      %v753 = vrot.slane %v744, %v752
      %v756 = vmul.f32 %v741, %v749
      %v757 = vmul.f32 %v739, %v753
      %v758 = vmul.f32 %v742, %v749
      %v759 = vmul.f32 %v740, %v753
      %s760 = scalar_lea.vmem %s5, 24
      %v761 = vld [vmem:[%s760] sm:$0xf]
      %v762 = vld [vmem:[%s760 + $0x4] sm:$0xf]
      %v763 = vpack.c.bf16 %v758, %v756
      %v764 = vpack.c.bf16 %v759, %v757
      %v767 = vunpack.c.l.b16 %v761
      %v768 = vunpack.c.l.b16 %v762
      %v769 = vpack.c.b16 %v768, %v767
      %v771 = vsel %vm421, %v769, 0
      %773 = vmatprep.subr.bf16.mxu0 %v764
      %774 = vmatpush1.bf16.msra.mxu0 %v763
      %775 = vmatprep.subr.bf16.mxu0 0
      %776 = vmatpush1.bf16.msra.mxu0 0
      %777 = vmatprep.subr.bf16.mxu0 0
      %778 = vmatpush1.bf16.msra.mxu0 0
      %779 = vmatprep.subr.bf16.mxu0 0
      %780 = vmatpush1.bf16.msra.mxu0 0
      %781 = vmatprep.subr.bf16.mxu0 0
      %782 = vmatpush1.bf16.msra.mxu0 0
      %783 = vmatprep.subr.bf16.mxu0 0
      %784 = vmatpush1.bf16.msra.mxu0 0
      %785 = vmatprep.subr.bf16.mxu0 0
      %786 = vmatpush1.bf16.msra.mxu0 0
      %787 = vmatprep.subr.bf16.mxu0 0
      %788 = vmatpush1.bf16.msra.mxu0 0
      %789 = vmatprep.subr.bf16.mxu0 0
      %790 = vmatpush1.bf16.msra.mxu0 0
      %791 = vmatprep.subr.bf16.mxu0 0
      %792 = vmatpush1.bf16.msra.mxu0 0
      %793 = vmatprep.subr.bf16.mxu0 0
      %794 = vmatpush1.bf16.msra.mxu0 0
      %795 = vmatprep.subr.bf16.mxu0 0
      %796 = vmatpush1.bf16.msra.mxu0 0
      %797 = vmatprep.subr.bf16.mxu0 0
      %798 = vmatpush1.bf16.msra.mxu0 0
      %799 = vmatprep.subr.bf16.mxu0 0
      %800 = vmatpush1.bf16.msra.mxu0 0
      %801 = vmatprep.subr.bf16.mxu0 0
      %802 = vmatpush1.bf16.msra.mxu0 0
      %803 = vmatprep.subr.bf16.mxu0 0
      %804 = vmatpush1.bf16.msra.mxu0 0
      %805 = vmatprep.mubr.bf16.mxu0 0
      %806 = vmatmul.mubr.bf16.gmra.mrb[0].mxu0 %v771
      %v807 = vpop.f32.mrb[0].mxu0
      %v808 = vadd.f32 0.0, %v807
      %v809 = vpop.f32.mrb[0].mxu0
      %v810 = vadd.f32 0.0, %v809
      %v811 = vpop.f32.mrb[0].mxu0
      %v812 = vadd.f32 0.0, %v811
      %v813 = vpop.f32.mrb[0].mxu0
      %v814 = vadd.f32 0.0, %v813
      %815 = vdwg.mxu0
      %v816 = vadd.f32 %v726, %v808
      %v817 = vadd.f32 %v727, %v810
      %v818 = vadd.f32 %v728, %v812
      %v819 = vadd.f32 %v729, %v814
      %s820 = scalar_lea.vmem %s5, 32
      %v821 = vld [vmem:[%s820] sm:$0xf]
      %v822 = vld [vmem:[%s820 + $0x4] sm:$0xf]
      %v823 = vpack.c.bf16 %v394, %v392
      %v824 = vpack.c.bf16 %v395, %v393
      %v827 = vunpack.c.l.b16 %v821
      %v828 = vunpack.c.l.b16 %v822
      %v829 = vpack.c.b16 %v828, %v827
      %v831 = vsel %vm421, %v829, 0
      %833 = vmatprep.subr.bf16.mxu0 %v824
      %834 = vmatpush1.bf16.msra.mxu0 %v823
      %835 = vmatprep.subr.bf16.mxu0 0
      %836 = vmatpush1.bf16.msra.mxu0 0
      %837 = vmatprep.subr.bf16.mxu0 0
      %838 = vmatpush1.bf16.msra.mxu0 0
      %839 = vmatprep.subr.bf16.mxu0 0
      %840 = vmatpush1.bf16.msra.mxu0 0
      %841 = vmatprep.subr.bf16.mxu0 0
      %842 = vmatpush1.bf16.msra.mxu0 0
      %843 = vmatprep.subr.bf16.mxu0 0
      %844 = vmatpush1.bf16.msra.mxu0 0
      %845 = vmatprep.subr.bf16.mxu0 0
      %846 = vmatpush1.bf16.msra.mxu0 0
      %847 = vmatprep.subr.bf16.mxu0 0
      %848 = vmatpush1.bf16.msra.mxu0 0
      %849 = vmatprep.subr.bf16.mxu0 0
      %850 = vmatpush1.bf16.msra.mxu0 0
      %851 = vmatprep.subr.bf16.mxu0 0
      %852 = vmatpush1.bf16.msra.mxu0 0
      %853 = vmatprep.subr.bf16.mxu0 0
      %854 = vmatpush1.bf16.msra.mxu0 0
      %855 = vmatprep.subr.bf16.mxu0 0
      %856 = vmatpush1.bf16.msra.mxu0 0
      %857 = vmatprep.subr.bf16.mxu0 0
      %858 = vmatpush1.bf16.msra.mxu0 0
      %859 = vmatprep.subr.bf16.mxu0 0
      %860 = vmatpush1.bf16.msra.mxu0 0
      %861 = vmatprep.subr.bf16.mxu0 0
      %862 = vmatpush1.bf16.msra.mxu0 0
      %863 = vmatprep.subr.bf16.mxu0 0
      %864 = vmatpush1.bf16.msra.mxu0 0
      %865 = vmatprep.mubr.bf16.mxu0 0
      %866 = vmatmul.mubr.bf16.gmra.mrb[0].mxu0 %v831
      %v867 = vpop.f32.mrb[0].mxu0
      %v868 = vadd.f32 0.0, %v867
      %v869 = vpop.f32.mrb[0].mxu0
      %v870 = vadd.f32 0.0, %v869
      %v871 = vpop.f32.mrb[0].mxu0
      %v872 = vadd.f32 0.0, %v871
      %v873 = vpop.f32.mrb[0].mxu0
      %v874 = vadd.f32 0.0, %v873
      %875 = vdwg.mxu0
      %v876 = vadd.f32 %v816, %v868
      %v877 = vadd.f32 %v817, %v870
      %v878 = vadd.f32 %v818, %v872
      %v879 = vadd.f32 %v819, %v874
      %880 = vrot.lane.b32.xlu0 %v392, 127
      %v881 = vpop.permute.xlu0 %880
      %882 = vrot.lane.b32.xlu0 %v394, 127
      %v883 = vpop.permute.xlu0 %882
      %884 = vrot.lane.b32.xlu0 %v393, 127
      %v885 = vpop.permute.xlu0 %884
      %886 = vrot.lane.b32.xlu0 %v395, 127
      %v887 = vpop.permute.xlu0 %886
      %vm888 = vcmp.lt.s32.totalorder %v477, 127
      %v889 = vsel %vm888, %v881, %v885
      %v890 = vsel %vm888, %v883, %v887
      %v891 = vsel %vm888, %v885, %v881
      %v892 = vsel %vm888, %v887, %v883
      %s893 = scalar_lea.vmem %s2, 10
      %v894 = vld [vmem:[%s893] sm:$0x3]
      %v896 = vlaneseq
      %v897 = vshrl.u32 %v896, 7
      %v898 = vsub.s32 0, %v897
      %v899 = vrot.slane %v894, %v898
      %v900 = vlaneseq
      %v901 = vshrl.u32 %v900, 7
      %v902 = vsub.s32 1, %v901
      %v903 = vrot.slane %v894, %v902
      %v906 = vmul.f32 %v889, %v899
      %v907 = vmul.f32 %v891, %v903
      %v908 = vmul.f32 %v890, %v899
      %v909 = vmul.f32 %v892, %v903
      %s910 = scalar_lea.vmem %s5, 40
      %v911 = vld [vmem:[%s910] sm:$0xf]
      %v912 = vld [vmem:[%s910 + $0x4] sm:$0xf]
      %v913 = vpack.c.bf16 %v908, %v906
      %v914 = vpack.c.bf16 %v909, %v907
      %v917 = vunpack.c.l.b16 %v911
      %v918 = vunpack.c.l.b16 %v912
      %v919 = vpack.c.b16 %v918, %v917
      %v921 = vsel %vm421, %v919, 0
      %923 = vmatprep.subr.bf16.mxu0 %v914
      %924 = vmatpush1.bf16.msra.mxu0 %v913
      %925 = vmatprep.subr.bf16.mxu0 0
      %926 = vmatpush1.bf16.msra.mxu0 0
      %927 = vmatprep.subr.bf16.mxu0 0
      %928 = vmatpush1.bf16.msra.mxu0 0
      %929 = vmatprep.subr.bf16.mxu0 0
      %930 = vmatpush1.bf16.msra.mxu0 0
      %931 = vmatprep.subr.bf16.mxu0 0
      %932 = vmatpush1.bf16.msra.mxu0 0
      %933 = vmatprep.subr.bf16.mxu0 0
      %934 = vmatpush1.bf16.msra.mxu0 0
      %935 = vmatprep.subr.bf16.mxu0 0
      %936 = vmatpush1.bf16.msra.mxu0 0
      %937 = vmatprep.subr.bf16.mxu0 0
      %938 = vmatpush1.bf16.msra.mxu0 0
      %939 = vmatprep.subr.bf16.mxu0 0
      %940 = vmatpush1.bf16.msra.mxu0 0
      %941 = vmatprep.subr.bf16.mxu0 0
      %942 = vmatpush1.bf16.msra.mxu0 0
      %943 = vmatprep.subr.bf16.mxu0 0
      %944 = vmatpush1.bf16.msra.mxu0 0
      %945 = vmatprep.subr.bf16.mxu0 0
      %946 = vmatpush1.bf16.msra.mxu0 0
      %947 = vmatprep.subr.bf16.mxu0 0
      %948 = vmatpush1.bf16.msra.mxu0 0
      %949 = vmatprep.subr.bf16.mxu0 0
      %950 = vmatpush1.bf16.msra.mxu0 0
      %951 = vmatprep.subr.bf16.mxu0 0
      %952 = vmatpush1.bf16.msra.mxu0 0
      %953 = vmatprep.subr.bf16.mxu0 0
      %954 = vmatpush1.bf16.msra.mxu0 0
      %955 = vmatprep.mubr.bf16.mxu0 0
      %956 = vmatmul.mubr.bf16.gmra.mrb[0].mxu0 %v921
      %v957 = vpop.f32.mrb[0].mxu0
      %v958 = vadd.f32 0.0, %v957
      %v959 = vpop.f32.mrb[0].mxu0
      %v960 = vadd.f32 0.0, %v959
      %v961 = vpop.f32.mrb[0].mxu0
      %v962 = vadd.f32 0.0, %v961
      %v963 = vpop.f32.mrb[0].mxu0
      %v964 = vadd.f32 0.0, %v963
      %965 = vdwg.mxu0
      %v966 = vadd.f32 %v876, %v958
      %v967 = vadd.f32 %v877, %v960
      %v968 = vadd.f32 %v878, %v962
      %v969 = vadd.f32 %v879, %v964
      %970 = vrot.lane.b32.xlu0 %v392, 113
      %v971 = vpop.permute.xlu0 %970
      %972 = vrot.lane.b32.xlu0 %v394, 113
      %v973 = vpop.permute.xlu0 %972
      %974 = vrot.lane.b32.xlu0 %v393, 113
      %v975 = vpop.permute.xlu0 %974
      %976 = vrot.lane.b32.xlu0 %v395, 113
      %v977 = vpop.permute.xlu0 %976
      %vm978 = vcmp.lt.s32.totalorder %v477, 113
      %v979 = vsel %vm978, %v971, %v975
      %v980 = vsel %vm978, %v973, %v977
      %v981 = vsel %vm978, %v975, %v971
      %v982 = vsel %vm978, %v977, %v973
      %s983 = scalar_lea.vmem %s2, 12
      %v984 = vld [vmem:[%s983] sm:$0x3]
      %v986 = vlaneseq
      %v987 = vshrl.u32 %v986, 7
      %v988 = vsub.s32 0, %v987
      %v989 = vrot.slane %v984, %v988
      %v990 = vlaneseq
      %v991 = vshrl.u32 %v990, 7
      %v992 = vsub.s32 1, %v991
      %v993 = vrot.slane %v984, %v992
      %v996 = vmul.f32 %v979, %v989
      %v997 = vmul.f32 %v981, %v993
      %v998 = vmul.f32 %v980, %v989
      %v999 = vmul.f32 %v982, %v993
      %s1000 = scalar_lea.vmem %s5, 48
      %v1001 = vld [vmem:[%s1000] sm:$0xf]
      %v1002 = vld [vmem:[%s1000 + $0x4] sm:$0xf]
      %v1003 = vpack.c.bf16 %v998, %v996
      %v1004 = vpack.c.bf16 %v999, %v997
      %v1007 = vunpack.c.l.b16 %v1001
      %v1008 = vunpack.c.l.b16 %v1002
      %v1009 = vpack.c.b16 %v1008, %v1007
      %v1011 = vsel %vm421, %v1009, 0
      %1013 = vmatprep.subr.bf16.mxu0 %v1004
      %1014 = vmatpush1.bf16.msra.mxu0 %v1003
      %1015 = vmatprep.subr.bf16.mxu0 0
      %1016 = vmatpush1.bf16.msra.mxu0 0
      %1017 = vmatprep.subr.bf16.mxu0 0
      %1018 = vmatpush1.bf16.msra.mxu0 0
      %1019 = vmatprep.subr.bf16.mxu0 0
      %1020 = vmatpush1.bf16.msra.mxu0 0
      %1021 = vmatprep.subr.bf16.mxu0 0
      %1022 = vmatpush1.bf16.msra.mxu0 0
      %1023 = vmatprep.subr.bf16.mxu0 0
      %1024 = vmatpush1.bf16.msra.mxu0 0
      %1025 = vmatprep.subr.bf16.mxu0 0
      %1026 = vmatpush1.bf16.msra.mxu0 0
      %1027 = vmatprep.subr.bf16.mxu0 0
      %1028 = vmatpush1.bf16.msra.mxu0 0
      %1029 = vmatprep.subr.bf16.mxu0 0
      %1030 = vmatpush1.bf16.msra.mxu0 0
      %1031 = vmatprep.subr.bf16.mxu0 0
      %1032 = vmatpush1.bf16.msra.mxu0 0
      %1033 = vmatprep.subr.bf16.mxu0 0
      %1034 = vmatpush1.bf16.msra.mxu0 0
      %1035 = vmatprep.subr.bf16.mxu0 0
      %1036 = vmatpush1.bf16.msra.mxu0 0
      %1037 = vmatprep.subr.bf16.mxu0 0
      %1038 = vmatpush1.bf16.msra.mxu0 0
      %1039 = vmatprep.subr.bf16.mxu0 0
      %1040 = vmatpush1.bf16.msra.mxu0 0
      %1041 = vmatprep.subr.bf16.mxu0 0
      %1042 = vmatpush1.bf16.msra.mxu0 0
      %1043 = vmatprep.subr.bf16.mxu0 0
      %1044 = vmatpush1.bf16.msra.mxu0 0
      %1045 = vmatprep.mubr.bf16.mxu0 0
      %1046 = vmatmul.mubr.bf16.gmra.mrb[0].mxu0 %v1011
      %v1047 = vpop.f32.mrb[0].mxu0
      %v1048 = vadd.f32 0.0, %v1047
      %v1049 = vpop.f32.mrb[0].mxu0
      %v1050 = vadd.f32 0.0, %v1049
      %v1051 = vpop.f32.mrb[0].mxu0
      %v1052 = vadd.f32 0.0, %v1051
      %v1053 = vpop.f32.mrb[0].mxu0
      %v1054 = vadd.f32 0.0, %v1053
      %1055 = vdwg.mxu0
      %v1056 = vadd.f32 %v966, %v1048
      %v1057 = vadd.f32 %v967, %v1050
      %v1058 = vadd.f32 %v968, %v1052
      %v1059 = vadd.f32 %v969, %v1054
      %1060 = vrot.lane.b32.xlu0 %v392, 112
      %v1061 = vpop.permute.xlu0 %1060
      %1062 = vrot.lane.b32.xlu0 %v394, 112
      %v1063 = vpop.permute.xlu0 %1062
      %1064 = vrot.lane.b32.xlu0 %v393, 112
      %v1065 = vpop.permute.xlu0 %1064
      %1066 = vrot.lane.b32.xlu0 %v395, 112
      %v1067 = vpop.permute.xlu0 %1066
      %vm1068 = vcmp.lt.s32.totalorder %v477, 112
      %v1069 = vsel %vm1068, %v1061, %v1065
      %v1070 = vsel %vm1068, %v1063, %v1067
      %v1071 = vsel %vm1068, %v1065, %v1061
      %v1072 = vsel %vm1068, %v1067, %v1063
      %s1073 = scalar_lea.vmem %s2, 14
      %v1074 = vld [vmem:[%s1073] sm:$0x3]
      %v1076 = vlaneseq
      %v1077 = vshrl.u32 %v1076, 7
      %v1078 = vsub.s32 0, %v1077
      %v1079 = vrot.slane %v1074, %v1078
      %v1080 = vlaneseq
      %v1081 = vshrl.u32 %v1080, 7
      %v1082 = vsub.s32 1, %v1081
      %v1083 = vrot.slane %v1074, %v1082
      %v1086 = vmul.f32 %v1069, %v1079
      %v1087 = vmul.f32 %v1071, %v1083
      %v1088 = vmul.f32 %v1070, %v1079
      %v1089 = vmul.f32 %v1072, %v1083
      %s1090 = scalar_lea.vmem %s5, 56
      %v1091 = vld [vmem:[%s1090] sm:$0xf]
      %v1092 = vld [vmem:[%s1090 + $0x4] sm:$0xf]
      %v1093 = vpack.c.bf16 %v1088, %v1086
      %v1094 = vpack.c.bf16 %v1089, %v1087
      %v1097 = vunpack.c.l.b16 %v1091
      %v1098 = vunpack.c.l.b16 %v1092
      %v1099 = vpack.c.b16 %v1098, %v1097
      %v1101 = vsel %vm421, %v1099, 0
      %1103 = vmatprep.subr.bf16.mxu0 %v1094
      %1104 = vmatpush1.bf16.msra.mxu0 %v1093
      %1105 = vmatprep.subr.bf16.mxu0 0
      %1106 = vmatpush1.bf16.msra.mxu0 0
      %1107 = vmatprep.subr.bf16.mxu0 0
      %1108 = vmatpush1.bf16.msra.mxu0 0
      %1109 = vmatprep.subr.bf16.mxu0 0
      %1110 = vmatpush1.bf16.msra.mxu0 0
      %1111 = vmatprep.subr.bf16.mxu0 0
      %1112 = vmatpush1.bf16.msra.mxu0 0
      %1113 = vmatprep.subr.bf16.mxu0 0
      %1114 = vmatpush1.bf16.msra.mxu0 0
      %1115 = vmatprep.subr.bf16.mxu0 0
      %1116 = vmatpush1.bf16.msra.mxu0 0
      %1117 = vmatprep.subr.bf16.mxu0 0
      %1118 = vmatpush1.bf16.msra.mxu0 0
      %1119 = vmatprep.subr.bf16.mxu0 0
      %1120 = vmatpush1.bf16.msra.mxu0 0
      %1121 = vmatprep.subr.bf16.mxu0 0
      %1122 = vmatpush1.bf16.msra.mxu0 0
      %1123 = vmatprep.subr.bf16.mxu0 0
      %1124 = vmatpush1.bf16.msra.mxu0 0
      %1125 = vmatprep.subr.bf16.mxu0 0
      %1126 = vmatpush1.bf16.msra.mxu0 0
      %1127 = vmatprep.subr.bf16.mxu0 0
      %1128 = vmatpush1.bf16.msra.mxu0 0
      %1129 = vmatprep.subr.bf16.mxu0 0
      %1130 = vmatpush1.bf16.msra.mxu0 0
      %1131 = vmatprep.subr.bf16.mxu0 0
      %1132 = vmatpush1.bf16.msra.mxu0 0
      %1133 = vmatprep.subr.bf16.mxu0 0
      %1134 = vmatpush1.bf16.msra.mxu0 0
      %1135 = vmatprep.mubr.bf16.mxu0 0
      %1136 = vmatmul.mubr.bf16.gmra.mrb[0].mxu0 %v1101
      %v1137 = vpop.f32.mrb[0].mxu0
      %v1138 = vadd.f32 0.0, %v1137
      %v1139 = vpop.f32.mrb[0].mxu0
      %v1140 = vadd.f32 0.0, %v1139
      %v1141 = vpop.f32.mrb[0].mxu0
      %v1142 = vadd.f32 0.0, %v1141
      %v1143 = vpop.f32.mrb[0].mxu0
      %v1144 = vadd.f32 0.0, %v1143
      %1145 = vdwg.mxu0
      %v1146 = vadd.f32 %v1056, %v1138
      %v1147 = vadd.f32 %v1057, %v1140
      %v1148 = vadd.f32 %v1058, %v1142
      %v1149 = vadd.f32 %v1059, %v1144
      %1150 = vrot.lane.b32.xlu0 %v392, 111
      %v1151 = vpop.permute.xlu0 %1150
      %1152 = vrot.lane.b32.xlu0 %v394, 111
      %v1153 = vpop.permute.xlu0 %1152
      %1154 = vrot.lane.b32.xlu0 %v393, 111
      %v1155 = vpop.permute.xlu0 %1154
      %1156 = vrot.lane.b32.xlu0 %v395, 111
      %v1157 = vpop.permute.xlu0 %1156
      %vm1158 = vcmp.lt.s32.totalorder %v477, 111
      %v1159 = vsel %vm1158, %v1151, %v1155
      %v1160 = vsel %vm1158, %v1153, %v1157
      %v1161 = vsel %vm1158, %v1155, %v1151
      %v1162 = vsel %vm1158, %v1157, %v1153
      %s1163 = scalar_lea.vmem %s2, 16
      %v1164 = vld [vmem:[%s1163] sm:$0x3]
      %v1166 = vlaneseq
      %v1167 = vshrl.u32 %v1166, 7
      %v1168 = vsub.s32 0, %v1167
      %v1169 = vrot.slane %v1164, %v1168
      %v1170 = vlaneseq
      %v1171 = vshrl.u32 %v1170, 7
      %v1172 = vsub.s32 1, %v1171
      %v1173 = vrot.slane %v1164, %v1172
      %v1176 = vmul.f32 %v1159, %v1169
      %v1177 = vmul.f32 %v1161, %v1173
      %v1178 = vmul.f32 %v1160, %v1169
      %v1179 = vmul.f32 %v1162, %v1173
      %s1180 = scalar_lea.vmem %s5, 64
      %v1181 = vld [vmem:[%s1180] sm:$0xf]
      %v1182 = vld [vmem:[%s1180 + $0x4] sm:$0xf]
      %v1183 = vpack.c.bf16 %v1178, %v1176
      %v1184 = vpack.c.bf16 %v1179, %v1177
      %v1187 = vunpack.c.l.b16 %v1181
      %v1188 = vunpack.c.l.b16 %v1182
      %v1189 = vpack.c.b16 %v1188, %v1187
      %v1191 = vsel %vm421, %v1189, 0
      %1193 = vmatprep.subr.bf16.mxu0 %v1184
      %1194 = vmatpush1.bf16.msra.mxu0 %v1183
      %1195 = vmatprep.subr.bf16.mxu0 0
      %1196 = vmatpush1.bf16.msra.mxu0 0
      %1197 = vmatprep.subr.bf16.mxu0 0
      %1198 = vmatpush1.bf16.msra.mxu0 0
      %1199 = vmatprep.subr.bf16.mxu0 0
      %1200 = vmatpush1.bf16.msra.mxu0 0
      %1201 = vmatprep.subr.bf16.mxu0 0
      %1202 = vmatpush1.bf16.msra.mxu0 0
      %1203 = vmatprep.subr.bf16.mxu0 0
      %1204 = vmatpush1.bf16.msra.mxu0 0
      %1205 = vmatprep.subr.bf16.mxu0 0
      %1206 = vmatpush1.bf16.msra.mxu0 0
      %1207 = vmatprep.subr.bf16.mxu0 0
      %1208 = vmatpush1.bf16.msra.mxu0 0
      %1209 = vmatprep.subr.bf16.mxu0 0
      %1210 = vmatpush1.bf16.msra.mxu0 0
      %1211 = vmatprep.subr.bf16.mxu0 0
      %1212 = vmatpush1.bf16.msra.mxu0 0
      %1213 = vmatprep.subr.bf16.mxu0 0
      %1214 = vmatpush1.bf16.msra.mxu0 0
      %1215 = vmatprep.subr.bf16.mxu0 0
      %1216 = vmatpush1.bf16.msra.mxu0 0
      %1217 = vmatprep.subr.bf16.mxu0 0
      %1218 = vmatpush1.bf16.msra.mxu0 0
      %1219 = vmatprep.subr.bf16.mxu0 0
      %1220 = vmatpush1.bf16.msra.mxu0 0
      %1221 = vmatprep.subr.bf16.mxu0 0
      %1222 = vmatpush1.bf16.msra.mxu0 0
      %1223 = vmatprep.subr.bf16.mxu0 0
      %1224 = vmatpush1.bf16.msra.mxu0 0
      %1225 = vmatprep.mubr.bf16.mxu0 0
      %1226 = vmatmul.mubr.bf16.gmra.mrb[0].mxu0 %v1191
      %v1227 = vpop.f32.mrb[0].mxu0
      %v1228 = vadd.f32 0.0, %v1227
      %v1229 = vpop.f32.mrb[0].mxu0
      %v1230 = vadd.f32 0.0, %v1229
      %v1231 = vpop.f32.mrb[0].mxu0
      %v1232 = vadd.f32 0.0, %v1231
      %v1233 = vpop.f32.mrb[0].mxu0
      %v1234 = vadd.f32 0.0, %v1233
      %1235 = vdwg.mxu0
      %v1236 = vadd.f32 %v1146, %v1228
      %v1237 = vadd.f32 %v1147, %v1230
      %v1238 = vadd.f32 %v1148, %v1232
      %v1239 = vadd.f32 %v1149, %v1234
      %v1240 = vadd.f32 %v460, %v1236
      %v1241 = vadd.f32 %v462, %v1237
      %v1242 = vadd.f32 %v464, %v1238
      %v1243 = vadd.f32 %v466, %v1239
      %v1244 = vld [vmem:[%s6] sm:$0xff]
      %v1245 = vld [vmem:[%s6 + $0x8] sm:$0xff]
      %1247 = vset.pattern.permute.xlu0 0
      %1248 = vperm.xlu0 %1247, %v1244
      %v1249 = vpop.permute.xlu0 %1248
      %1252 = vset.pattern.permute.xlu0 0
      %1253 = vperm.xlu0 %1252, %v1245
      %v1254 = vpop.permute.xlu0 %1253
      %v1256 = vadd.f32 %v1240, %v1249
      %v1257 = vadd.f32 %v1241, %v1249
      %v1258 = vadd.f32 %v1242, %v1254
      %v1259 = vadd.f32 %v1243, %v1254
      %1260 = vst [vmem:[%s352] sm:$0xff] %v1256
      %1261 = vst [vmem:[%s352 + $0x8] sm:$0xff] %v1257
      %1262 = vst [vmem:[%s352 + $0x10] sm:$0xff] %v1258
      %1263 = vst [vmem:[%s352 + $0x18] sm:$0xff] %v1259
      %p1264 = scmp.lt.s32.totalorder %s20, 1
      %s1265 = scalar_select %p1264, %s20, 1
      %s1266 = smul.addr %s1265, 4
      %s1267 = smul.addr %s1266, 8
      %s1268 = scalar_lea.vmem %s9, %s1267
      // Predicated region
      $region57: #{gen_block_forward.5} parent=55 // pred_check
        %p1269 = pneg %p237
      $region58: #{gen_block_forward.5} parent=55 // pred_check_branch
        %1271 = sbr.rel (%p1269) target = $region60
      $region59: #{gen_block_forward.5} parent=55 // pred_region
        _
      $region60: #{gen_block_forward.5} parent=55 // pred_fallthru
        _
    $region56: #{gen_block_forward.5} parent=5 // pred_fallthru
      _
    %p1272 = scmp.le.s32.totalorder 2, %s15
    // Predicated region
    $region61: #{gen_block_forward.5} parent=5 // pred_check
      %p1273 = pneg %p1272
    $region62: #{gen_block_forward.5} parent=5 // pred_check_branch
      %1275 = sbr.rel (%p1273) target = $region64
    $region63: #{gen_block_forward.5} parent=5 // pred_region
      %s1276 = ssub.s32 %s15, 2
      // Predicated region
      $region65: #{gen_block_forward.5} parent=63 // pred_check
        %p1277 = pneg %p243
      $region66: #{gen_block_forward.5} parent=63 // pred_check_branch
        %1279 = sbr.rel (%p1277) target = $region68
      $region67: #{gen_block_forward.5} parent=63 // pred_region
        %p1280 = scmp.lt.s32.totalorder %s21, 1
        %s1281 = scalar_select %p1280, %s21, 1
        %s1282 = smul.addr %s1281, 4
        %s1283 = smul.addr %s1282, 8
        %s1284 = scalar_lea.vmem %s9, %s1283
      $region68: #{gen_block_forward.5} parent=63 // pred_fallthru
        _
    $region64: #{gen_block_forward.5} parent=5 // pred_fallthru
      _
  $region6: #{gen_block_forward.5} parent=0 // loop_footer
    %s19 = sadd.s32 1, %s15
  $region7: #{gen_block_forward.5} parent=0 // loop_footer_branch
    %14 = sbr.rel target = $region3
  $region8: #{gen_block_forward.5} parent=0 // loop_exit
    _

</llo_original>
